<compile_context>
chip_gen: v6e
topology: v6e:2x2x1
jax: 0.10.0
libtpu: 0.0.40
codegen_flags: <defaults>
</compile_context>

<pallas_src>
import functools
import math

import numpy as np
import jax
import jax.numpy as jnp
from jax.experimental import pallas as pl
from jax.experimental.pallas import tpu as pltpu


def _round_up(v, m):
    return ((v + m - 1) // m) * m


# --------------------------------- kernel --------------------------------------
def _unet_kernel(shifts1, shifts2,
                 x_ref, avg_ref, m1_ref, m2_ref, gp_ref, sd_ref,
                 w11_ref, b11_ref, w12_ref, b12_ref,
                 w21_ref, b21_ref, w22_ref, b22_ref,
                 wd_ref, bd_ref, wu1_ref, bu1_ref, wu2_ref, bu2_ref,
                 wf_ref, bf_ref, out_ref):
    cp = bd_ref.shape[0]                       # padded channel count (sublanes)

    def mm(a, b):
        return jnp.dot(a, b, preferred_element_type=jnp.float32)

    def relu(v):
        return jnp.maximum(v, 0.0)

    # load the per-tap boundary masks once (tiny (1, N) rows)
    msk1 = [m1_ref[t] for t in range(9)]
    msk2 = [m2_ref[t] for t in range(9)]

    def im2col(a, masks, shifts):
        """(C, N) -> (9*C, N): per-tap lane roll (XLU) + 0/1 boundary mask (VPU)."""
        cols = []
        for t in range(9):
            s = shifts[t]
            r = a if s == 0 else pltpu.roll(a, s, 1)
            cols.append(r * masks[t])
        return jnp.concatenate(cols, axis=0)

    def conv3x3(a, masks, shifts, w_ref, b_ref):
        # all 9 taps and all input channels fused into a single MXU matmul
        return mm(w_ref[...], im2col(a, masks, shifts)) + b_ref[...]

    # mean over the sequence dim == one tiny matmul against a constant matrix
    xm = mm(avg_ref[...], x_ref[...])                          # (cp, N1)

    # encoder level 1 (DoubleConv)
    x1 = relu(conv3x3(xm, msk1, shifts1, w11_ref, b11_ref))
    x1 = relu(conv3x3(x1, msk1, shifts1, w12_ref, b12_ref))

    # 2x2 / stride-2 max-pool with ceil_mode via 0/1 gather matmuls.  The
    # zero-filled out-of-range taps are equivalent to -inf padding ONLY because
    # x1 is post-ReLU (>= 0).
    pool = None
    for k in range(4):
        v = mm(x1, gp_ref[k].astype(jnp.float32))              # (cp, N2)
        pool = v if pool is None else jnp.maximum(pool, v)

    # encoder level 2 (DoubleConv)
    x2 = relu(conv3x3(pool, msk2, shifts2, w21_ref, b21_ref))
    x2 = relu(conv3x3(x2, msk2, shifts2, w22_ref, b22_ref))

    # ConvTranspose2d(k=2, s=2) + [:-1, :-1] crop: one fused channel-mix matmul,
    # then 4 scatter matmuls (disjoint supports -> plain adds, clean dot chain)
    ys = mm(wd_ref[...], x2)                                   # (4*cp, N2)
    dd = None
    for k in range(4):
        s = mm(ys[k * cp:(k + 1) * cp, :], sd_ref[k].astype(jnp.float32))
        dd = s if dd is None else dd + s
    dd = dd + bd_ref[...]                                      # (cp, N1)

    # decoder DoubleConv on concat([x1, dd], channels): the channel concat is
    # folded into the stacked im2col + one wide fused weight
    cat = jnp.concatenate([im2col(x1, msk1, shifts1),
                           im2col(dd, msk1, shifts1)], axis=0)  # (18*cp, N1)
    u = relu(mm(wu1_ref[...], cat) + bu1_ref[...])
    u = relu(conv3x3(u, msk1, shifts1, wu2_ref, bu2_ref))

    # final 1x1 conv -- the (cp, N1) store is lane-dense (full 128-lane vregs)
    out_ref[...] = mm(wf_ref[...], u) + bf_ref[...]


# --------------------- structural constants (wrapper side) ---------------------
def build_structure(batch, d, q, *, n1, n2, cp, cin_pad):
    """Precompute tap shifts, boundary masks, pool/deconv 0/1 matrices, seq-mean."""
    H = W = d
    Ho = Wo = -(-d // 2)
    P1, P2 = H * W, Ho * Wo
    R1, R2 = batch * P1, batch * P2
    assert R1 <= n1 and R2 <= n2 and 3 * q <= cin_pad and 3 <= cp

    def i1(b, i, j):
        return b * P1 + i * W + j

    def i2(b, i, j):
        return b * P2 + i * Wo + j

    taps3 = [(dh, dw) for dh in range(3) for dw in range(3)]
    taps2 = [(0, 0), (0, 1), (1, 0), (1, 1)]

    # out[p] reads in[p + off]  ->  circular roll shift = (-off) mod N
    shifts1 = tuple((-((dh - 1) * W + (dw - 1))) % n1 for dh, dw in taps3)
    shifts2 = tuple((-((dh - 1) * Wo + (dw - 1))) % n2 for dh, dw in taps3)

    m1 = np.zeros((9, 1, n1), np.float32)
    m2 = np.zeros((9, 1, n2), np.float32)
    for t, (dh, dw) in enumerate(taps3):
        for b in range(batch):
            for i in range(H):
                for j in range(W):
                    if 0 <= i + dh - 1 < H and 0 <= j + dw - 1 < W:
                        m1[t, 0, i1(b, i, j)] = 1.0
            for i in range(Ho):
                for j in range(Wo):
                    if 0 <= i + dh - 1 < Ho and 0 <= j + dw - 1 < Wo:
                        m2[t, 0, i2(b, i, j)] = 1.0

    gpT = np.zeros((4, n1, n2), np.float32)     # max-pool gathers (transposed)
    sdT = np.zeros((4, n2, n1), np.float32)     # deconv scatter + crop (transposed)
    for k, (dh, dw) in enumerate(taps2):
        for b in range(batch):
            for i in range(Ho):
                for j in range(Wo):
                    ii, jj = 2 * i + dh, 2 * j + dw
                    if ii < H and jj < W:
                        gpT[k, i1(b, ii, jj), i2(b, i, j)] = 1.0
                        sdT[k, i2(b, i, j), i1(b, ii, jj)] = 1.0

    avg = np.zeros((cp, cin_pad), np.float32)   # mean over the sequence dim
    for t in range(q):
        for c in range(3):
            avg[c, t * 3 + c] = 1.0 / q

    ops = dict(m1=jnp.asarray(m1), m2=jnp.asarray(m2),
               gpT=jnp.asarray(gpT, dtype=jnp.bfloat16),   # exact 0/1 in bf16
               sdT=jnp.asarray(sdT, dtype=jnp.bfloat16),
               avg=jnp.asarray(avg))
    return ops, shifts1, shifts2


def pack_params(params, *, n_channels, c1, c2, n_classes, cp):
    """Repack per-tap weights into the fused / padded (Cout_pad, 9*Cin_pad) form."""
    def pack9(w9, cin, cout):
        w9 = np.asarray(w9)                                   # (9, cin, cout)
        W = np.zeros((cp, 9 * cp), np.float32)
        for t in range(9):
            W[:cout, t * cp:t * cp + cin] = w9[t].T
        return W

    def packb(b, cout):
        out = np.zeros((cp, 1), np.float32)
        out[:cout, 0] = np.asarray(b).reshape(-1)[:cout]
        return jnp.asarray(out)

    p = {}
    p["W11"] = jnp.asarray(pack9(params["w11"], n_channels, c1))
    p["b11"] = packb(params["b11"], c1)
    p["W12"] = jnp.asarray(pack9(params["w12"], c1, c1))
    p["b12"] = packb(params["b12"], c1)
    p["W21"] = jnp.asarray(pack9(params["w21"], c1, c2))
    p["b21"] = packb(params["b21"], c2)
    p["W22"] = jnp.asarray(pack9(params["w22"], c2, c2))
    p["b22"] = packb(params["b22"], c2)

    wd = np.asarray(params["wd"])                             # (4, c2, c1)
    WD = np.zeros((4 * cp, cp), np.float32)
    for k in range(4):
        WD[k * cp:k * cp + c1, :c2] = wd[k].T
    p["WD"] = jnp.asarray(WD)
    p["bd"] = packb(params["bd"], c1)

    wu1 = np.asarray(params["wu1"])                           # (9, c2, c1)
    p["WU1"] = jnp.asarray(np.concatenate(
        [pack9(wu1[:, :c1, :], c1, c1), pack9(wu1[:, c1:, :], c1, c1)], axis=1))
    p["bu1"] = packb(params["bu1"], c1)
    p["WU2"] = jnp.asarray(pack9(params["wu2"], c1, c1))
    p["bu2"] = packb(params["bu2"], c1)

    wf = np.asarray(params["wf"])                             # (c1, n_classes)
    WF = np.zeros((cp, cp), np.float32)
    WF[:n_classes, :c1] = wf.T
    p["WF"] = jnp.asarray(WF)
    p["bf"] = packb(params["bf"], n_classes)
    return p


# --------------------------------- wrapper --------------------------------------
@functools.partial(jax.jit,
                   static_argnames=("d", "q", "n_classes", "cp", "cin_pad",
                                    "shifts1", "shifts2"))
def unet_forward(x, ops, *, d, q, n_classes, cp, cin_pad, shifts1, shifts2):
    assert d % 2 == 1, "only the odd-d path of the original forward() is defined"
    B = x.shape[0]
    P1 = d * d
    R1 = B * P1
    n1 = ops["m1"].shape[-1]

    # pre_process (pure layout plumbing): de-interleave RGB and lay the input
    # out as (seq*channel -> sublanes, B*H*W -> lanes), zero-padded.
    xr = x.reshape(B, q, P1, 3)
    X = jnp.transpose(xr, (1, 3, 0, 2)).reshape(q * 3, R1)
    Xp = jnp.zeros((cin_pad, n1), jnp.float32).at[:q * 3, :R1].set(X)

    args = (Xp, ops["avg"], ops["m1"], ops["m2"], ops["gpT"], ops["sdT"],
            ops["W11"], ops["b11"], ops["W12"], ops["b12"],
            ops["W21"], ops["b21"], ops["W22"], ops["b22"],
            ops["WD"], ops["bd"], ops["WU1"], ops["bu1"],
            ops["WU2"], ops["bu2"], ops["WF"], ops["bf"])

    kernel = functools.partial(_unet_kernel, shifts1, shifts2)
    out = pl.pallas_call(
        kernel,
        out_shape=jax.ShapeDtypeStruct((cp, n1), jnp.float32),
        in_specs=[pl.BlockSpec(memory_space=pltpu.MemorySpace.VMEM)] * len(args),
        out_specs=pl.BlockSpec(memory_space=pltpu.MemorySpace.VMEM),
        compiler_params=pltpu.CompilerParams(vmem_limit_bytes=32 * 1024 * 1024),
    )(*args)

    # rows are (class), lanes are (b, i, j); match torch's squeeze(1).view(B, -1)
    out = out[:n_classes, :R1].reshape(n_classes, B, d, d)
    return jnp.transpose(out, (1, 0, 2, 3)).reshape(B, -1)


# ----------------------------- parameter init -----------------------------------
def init_params(key, n_channels, c1, c2, n_classes):
    def conv(k, cin, cout, taps):
        bound = 1.0 / math.sqrt(cin * taps)
        kw, kb = jax.random.split(k)
        w = jax.random.uniform(kw, (taps, cin, cout), jnp.float32, -bound, bound)
        b = jax.random.uniform(kb, (1, cout), jnp.float32, -bound, bound)
        return w, b

    ks = jax.random.split(key, 8)
    p = {}
    p["w11"], p["b11"] = conv(ks[0], n_channels, c1, 9)      # down_conv_1
    p["w12"], p["b12"] = conv(ks[1], c1, c1, 9)
    p["w21"], p["b21"] = conv(ks[2], c1, c2, 9)              # down_conv_2
    p["w22"], p["b22"] = conv(ks[3], c2, c2, 9)
    p["wd"], p["bd"] = conv(ks[4], c2, c1, 4)                # ConvTranspose2d k=2 s=2
    p["wu1"], p["bu1"] = conv(ks[5], c2, c1, 9)              # up_conv_2 (on concat)
    p["wu2"], p["bu2"] = conv(ks[6], c1, c1, 9)
    wf, bf = conv(ks[7], c1, n_classes, 1)
    p["wf"], p["bf"] = wf[0], bf                             # conv_1x1
    return p


# ---------------------------- pure-JAX reference --------------------------------
def unet_reference(x, params, *, d, q, n_classes):
    B = x.shape[0]
    hi = jax.lax.Precision.HIGHEST

    xr = x.reshape(B, q, d * d, 3)
    xr = jnp.transpose(xr, (0, 1, 3, 2)).reshape(B, q, 3, d, d)   # pre_process
    a = jnp.mean(xr, axis=1)                                      # (B, 3, d, d)

    def conv3x3(a, w9, bias):
        cin, cout = w9.shape[1], w9.shape[2]
        w = jnp.transpose(w9.reshape(3, 3, cin, cout), (3, 2, 0, 1))   # OIHW
        y = jax.lax.conv_general_dilated(
            a, w, (1, 1), ((1, 1), (1, 1)),
            dimension_numbers=("NCHW", "OIHW", "NCHW"), precision=hi)
        return y + bias.reshape(1, cout, 1, 1)

    relu = jax.nn.relu
    x1 = relu(conv3x3(a, params["w11"], params["b11"]))
    x1 = relu(conv3x3(x1, params["w12"], params["b12"]))

    xp = jax.lax.reduce_window(                                   # ceil_mode pool
        x1, -jnp.inf, jax.lax.max, (1, 1, 2, 2), (1, 1, 2, 2),
        ((0, 0), (0, 0), (0, 1), (0, 1)))

    x2 = relu(conv3x3(xp, params["w21"], params["b21"]))
    x2 = relu(conv3x3(x2, params["w22"], params["b22"]))

    Ho, Wo = x2.shape[2], x2.shape[3]
    cout = params["wd"].shape[-1]
    up = jnp.zeros((B, cout, 2 * Ho, 2 * Wo), jnp.float32)
    for k, (dh, dw) in enumerate([(0, 0), (0, 1), (1, 0), (1, 1)]):
        y = jnp.einsum("bchw,cd->bdhw", x2, params["wd"][k], precision=hi)
        up = up.at[:, :, dh::2, dw::2].set(y)
    up = up + params["bd"].reshape(1, cout, 1, 1)
    dd = up[:, :, :-1, :-1]                                       # crop (odd d)

    d2 = jnp.concatenate([x1, dd], axis=1)
    u = relu(conv3x3(d2, params["wu1"], params["bu1"]))
    u = relu(conv3x3(u, params["wu2"], params["bu2"]))

    d1 = (jnp.einsum("bchw,cd->bdhw", u, params["wf"], precision=hi)
          + params["bf"].reshape(1, n_classes, 1, 1))
    return d1.reshape(B, -1)


# ------------------------------------ main ---------------------------------------
if __name__ == "__main__":
    # config analogue: {'input_size': 243, 'seq_len': 4, 'mapping_net': [4, 8]}
    # => d = sqrt(243/3) = 9 (odd -> ceil-mode pool + cropped-deconv path,
    #    the only path the original forward() supports).
    B, q, d = 2, 4, 9
    n_channels, n_classes = 3, 1
    c1, c2 = 4, 8
    assert d % 2 == 1 and c2 == 2 * c1
    input_size = 3 * d * d

    key = jax.random.PRNGKey(0)
    kx, kp = jax.random.split(key)
    x = jax.random.normal(kx, (B, q, input_size), jnp.float32)
    params = init_params(kp, n_channels, c1, c2, n_classes)

    cp = _round_up(max(n_channels, c1, c2, n_classes), 8)        # 8  sublanes
    cin_pad = _round_up(3 * q, 8)                                # 16 sublanes
    R1 = B * d * d                                               # 162
    R2 = B * (-(-d // 2)) ** 2                                   # 50
    n1 = _round_up(max(R1, 128), 128)                            # 256 lanes
    n2 = _round_up(max(R2, 128), 128)                            # 128 lanes

    ops, shifts1, shifts2 = build_structure(
        B, d, q, n1=n1, n2=n2, cp=cp, cin_pad=cin_pad)
    ops.update(pack_params(params, n_channels=n_channels, c1=c1, c2=c2,
                           n_classes=n_classes, cp=cp))

    out = unet_forward(x, ops, d=d, q=q, n_classes=n_classes, cp=cp,
                       cin_pad=cin_pad, shifts1=shifts1, shifts2=shifts2)
    out = jax.block_until_ready(out)

    ref = unet_reference(x, params, d=d, q=q, n_classes=n_classes)
    assert out.shape == (B, n_classes * d * d)
    max_err = float(jnp.max(jnp.abs(out - ref)))
    assert jnp.allclose(out, ref, atol=2e-3, rtol=2e-3), max_err

    print("KERNEL_OK")
</pallas_src>

<mosaic_0001>
module attributes {stable_mosaic.version = 11 : i64} {
  func.func @_unet_kernel(%arg0: memref<16x256xf32, #tpu.memory_space<vmem>>, %arg1: memref<8x16xf32, #tpu.memory_space<vmem>>, %arg2: memref<9x1x256xf32, #tpu.memory_space<vmem>>, %arg3: memref<9x1x128xf32, #tpu.memory_space<vmem>>, %arg4: memref<4x256x128xbf16, #tpu.memory_space<vmem>>, %arg5: memref<4x128x256xbf16, #tpu.memory_space<vmem>>, %arg6: memref<8x72xf32, #tpu.memory_space<vmem>>, %arg7: memref<8x1xf32, #tpu.memory_space<vmem>>, %arg8: memref<8x72xf32, #tpu.memory_space<vmem>>, %arg9: memref<8x1xf32, #tpu.memory_space<vmem>>, %arg10: memref<8x72xf32, #tpu.memory_space<vmem>>, %arg11: memref<8x1xf32, #tpu.memory_space<vmem>>, %arg12: memref<8x72xf32, #tpu.memory_space<vmem>>, %arg13: memref<8x1xf32, #tpu.memory_space<vmem>>, %arg14: memref<32x8xf32, #tpu.memory_space<vmem>>, %arg15: memref<8x1xf32, #tpu.memory_space<vmem>>, %arg16: memref<8x144xf32, #tpu.memory_space<vmem>>, %arg17: memref<8x1xf32, #tpu.memory_space<vmem>>, %arg18: memref<8x72xf32, #tpu.memory_space<vmem>>, %arg19: memref<8x1xf32, #tpu.memory_space<vmem>>, %arg20: memref<8x8xf32, #tpu.memory_space<vmem>>, %arg21: memref<8x1xf32, #tpu.memory_space<vmem>>, %arg22: memref<8x256xf32, #tpu.memory_space<vmem>>) attributes {dimension_semantics = [], scalar_prefetch = 0 : i64, scratch_operands = 0 : i64, tpu.core_type = #tpu.core_type<tc>} {
    %c0 = arith.constant 0 : index
    %c0_0 = arith.constant 0 : index
    %c0_1 = arith.constant 0 : index
    %0 = vector.load %arg2[%c0, %c0_0, %c0_1] : memref<9x1x256xf32, #tpu.memory_space<vmem>>, vector<1x1x256xf32>
    %1 = vector.shape_cast %0 : vector<1x1x256xf32> to vector<1x256xf32>
    %c1 = arith.constant 1 : index
    %c0_2 = arith.constant 0 : index
    %c0_3 = arith.constant 0 : index
    %2 = vector.load %arg2[%c1, %c0_2, %c0_3] : memref<9x1x256xf32, #tpu.memory_space<vmem>>, vector<1x1x256xf32>
    %3 = vector.shape_cast %2 : vector<1x1x256xf32> to vector<1x256xf32>
    %c2 = arith.constant 2 : index
    %c0_4 = arith.constant 0 : index
    %c0_5 = arith.constant 0 : index
    %4 = vector.load %arg2[%c2, %c0_4, %c0_5] : memref<9x1x256xf32, #tpu.memory_space<vmem>>, vector<1x1x256xf32>
    %5 = vector.shape_cast %4 : vector<1x1x256xf32> to vector<1x256xf32>
    %c3 = arith.constant 3 : index
    %c0_6 = arith.constant 0 : index
    %c0_7 = arith.constant 0 : index
    %6 = vector.load %arg2[%c3, %c0_6, %c0_7] : memref<9x1x256xf32, #tpu.memory_space<vmem>>, vector<1x1x256xf32>
    %7 = vector.shape_cast %6 : vector<1x1x256xf32> to vector<1x256xf32>
    %c4 = arith.constant 4 : index
    %c0_8 = arith.constant 0 : index
    %c0_9 = arith.constant 0 : index
    %8 = vector.load %arg2[%c4, %c0_8, %c0_9] : memref<9x1x256xf32, #tpu.memory_space<vmem>>, vector<1x1x256xf32>
    %9 = vector.shape_cast %8 : vector<1x1x256xf32> to vector<1x256xf32>
    %c5 = arith.constant 5 : index
    %c0_10 = arith.constant 0 : index
    %c0_11 = arith.constant 0 : index
    %10 = vector.load %arg2[%c5, %c0_10, %c0_11] : memref<9x1x256xf32, #tpu.memory_space<vmem>>, vector<1x1x256xf32>
    %11 = vector.shape_cast %10 : vector<1x1x256xf32> to vector<1x256xf32>
    %c6 = arith.constant 6 : index
    %c0_12 = arith.constant 0 : index
    %c0_13 = arith.constant 0 : index
    %12 = vector.load %arg2[%c6, %c0_12, %c0_13] : memref<9x1x256xf32, #tpu.memory_space<vmem>>, vector<1x1x256xf32>
    %13 = vector.shape_cast %12 : vector<1x1x256xf32> to vector<1x256xf32>
    %c7 = arith.constant 7 : index
    %c0_14 = arith.constant 0 : index
    %c0_15 = arith.constant 0 : index
    %14 = vector.load %arg2[%c7, %c0_14, %c0_15] : memref<9x1x256xf32, #tpu.memory_space<vmem>>, vector<1x1x256xf32>
    %15 = vector.shape_cast %14 : vector<1x1x256xf32> to vector<1x256xf32>
    %c8 = arith.constant 8 : index
    %c0_16 = arith.constant 0 : index
    %c0_17 = arith.constant 0 : index
    %16 = vector.load %arg2[%c8, %c0_16, %c0_17] : memref<9x1x256xf32, #tpu.memory_space<vmem>>, vector<1x1x256xf32>
    %17 = vector.shape_cast %16 : vector<1x1x256xf32> to vector<1x256xf32>
    %c0_18 = arith.constant 0 : index
    %c0_19 = arith.constant 0 : index
    %c0_20 = arith.constant 0 : index
    %18 = vector.load %arg3[%c0_18, %c0_19, %c0_20] : memref<9x1x128xf32, #tpu.memory_space<vmem>>, vector<1x1x128xf32>
    %19 = vector.shape_cast %18 : vector<1x1x128xf32> to vector<1x128xf32>
    %c1_21 = arith.constant 1 : index
    %c0_22 = arith.constant 0 : index
    %c0_23 = arith.constant 0 : index
    %20 = vector.load %arg3[%c1_21, %c0_22, %c0_23] : memref<9x1x128xf32, #tpu.memory_space<vmem>>, vector<1x1x128xf32>
    %21 = vector.shape_cast %20 : vector<1x1x128xf32> to vector<1x128xf32>
    %c2_24 = arith.constant 2 : index
    %c0_25 = arith.constant 0 : index
    %c0_26 = arith.constant 0 : index
    %22 = vector.load %arg3[%c2_24, %c0_25, %c0_26] : memref<9x1x128xf32, #tpu.memory_space<vmem>>, vector<1x1x128xf32>
    %23 = vector.shape_cast %22 : vector<1x1x128xf32> to vector<1x128xf32>
    %c3_27 = arith.constant 3 : index
    %c0_28 = arith.constant 0 : index
    %c0_29 = arith.constant 0 : index
    %24 = vector.load %arg3[%c3_27, %c0_28, %c0_29] : memref<9x1x128xf32, #tpu.memory_space<vmem>>, vector<1x1x128xf32>
    %25 = vector.shape_cast %24 : vector<1x1x128xf32> to vector<1x128xf32>
    %c4_30 = arith.constant 4 : index
    %c0_31 = arith.constant 0 : index
    %c0_32 = arith.constant 0 : index
    %26 = vector.load %arg3[%c4_30, %c0_31, %c0_32] : memref<9x1x128xf32, #tpu.memory_space<vmem>>, vector<1x1x128xf32>
    %27 = vector.shape_cast %26 : vector<1x1x128xf32> to vector<1x128xf32>
    %c5_33 = arith.constant 5 : index
    %c0_34 = arith.constant 0 : index
    %c0_35 = arith.constant 0 : index
    %28 = vector.load %arg3[%c5_33, %c0_34, %c0_35] : memref<9x1x128xf32, #tpu.memory_space<vmem>>, vector<1x1x128xf32>
    %29 = vector.shape_cast %28 : vector<1x1x128xf32> to vector<1x128xf32>
    %c6_36 = arith.constant 6 : index
    %c0_37 = arith.constant 0 : index
    %c0_38 = arith.constant 0 : index
    %30 = vector.load %arg3[%c6_36, %c0_37, %c0_38] : memref<9x1x128xf32, #tpu.memory_space<vmem>>, vector<1x1x128xf32>
    %31 = vector.shape_cast %30 : vector<1x1x128xf32> to vector<1x128xf32>
    %c7_39 = arith.constant 7 : index
    %c0_40 = arith.constant 0 : index
    %c0_41 = arith.constant 0 : index
    %32 = vector.load %arg3[%c7_39, %c0_40, %c0_41] : memref<9x1x128xf32, #tpu.memory_space<vmem>>, vector<1x1x128xf32>
    %33 = vector.shape_cast %32 : vector<1x1x128xf32> to vector<1x128xf32>
    %c8_42 = arith.constant 8 : index
    %c0_43 = arith.constant 0 : index
    %c0_44 = arith.constant 0 : index
    %34 = vector.load %arg3[%c8_42, %c0_43, %c0_44] : memref<9x1x128xf32, #tpu.memory_space<vmem>>, vector<1x1x128xf32>
    %35 = vector.shape_cast %34 : vector<1x1x128xf32> to vector<1x128xf32>
    %c0_45 = arith.constant 0 : index
    %c0_46 = arith.constant 0 : index
    %36 = vector.load %arg1[%c0_45, %c0_46] : memref<8x16xf32, #tpu.memory_space<vmem>>, vector<8x16xf32>
    %c0_47 = arith.constant 0 : index
    %c0_48 = arith.constant 0 : index
    %37 = vector.load %arg0[%c0_47, %c0_48] : memref<16x256xf32, #tpu.memory_space<vmem>>, vector<16x256xf32>
    %cst = arith.constant dense<0.000000e+00> : vector<8x256xf32>
    %38 = tpu.matmul %36, %37, %cst {dimension_numbers = #tpu.dot_dimension_numbers<[1], [0], [0], [1], [0, 0, 1, 1], [], []>} : vector<8x16xf32>, vector<16x256xf32>, vector<8x256xf32> -> vector<8x256xf32>
    %c0_49 = arith.constant 0 : index
    %c0_50 = arith.constant 0 : index
    %39 = vector.load %arg6[%c0_49, %c0_50] : memref<8x72xf32, #tpu.memory_space<vmem>>, vector<8x72xf32>
    %c10_i32 = arith.constant 10 : i32
    %40 = tpu.dynamic_rotate %38 by %c10_i32 dim 1 : vector<8x256xf32>, i32 -> vector<8x256xf32>
    %41 = vector.broadcast %1 : vector<1x256xf32> to vector<8x256xf32>
    %42 = arith.mulf %40, %41 : vector<8x256xf32>
    %c9_i32 = arith.constant 9 : i32
    %43 = tpu.dynamic_rotate %38 by %c9_i32 dim 1 : vector<8x256xf32>, i32 -> vector<8x256xf32>
    %44 = vector.broadcast %3 : vector<1x256xf32> to vector<8x256xf32>
    %45 = arith.mulf %43, %44 : vector<8x256xf32>
    %c8_i32 = arith.constant 8 : i32
    %46 = tpu.dynamic_rotate %38 by %c8_i32 dim 1 : vector<8x256xf32>, i32 -> vector<8x256xf32>
    %47 = vector.broadcast %5 : vector<1x256xf32> to vector<8x256xf32>
    %48 = arith.mulf %46, %47 : vector<8x256xf32>
    %c1_i32 = arith.constant 1 : i32
    %49 = tpu.dynamic_rotate %38 by %c1_i32 dim 1 : vector<8x256xf32>, i32 -> vector<8x256xf32>
    %50 = vector.broadcast %7 : vector<1x256xf32> to vector<8x256xf32>
    %51 = arith.mulf %49, %50 : vector<8x256xf32>
    %52 = vector.broadcast %9 : vector<1x256xf32> to vector<8x256xf32>
    %53 = arith.mulf %38, %52 : vector<8x256xf32>
    %c255_i32 = arith.constant 255 : i32
    %54 = tpu.dynamic_rotate %38 by %c255_i32 dim 1 : vector<8x256xf32>, i32 -> vector<8x256xf32>
    %55 = vector.broadcast %11 : vector<1x256xf32> to vector<8x256xf32>
    %56 = arith.mulf %54, %55 : vector<8x256xf32>
    %c248_i32 = arith.constant 248 : i32
    %57 = tpu.dynamic_rotate %38 by %c248_i32 dim 1 : vector<8x256xf32>, i32 -> vector<8x256xf32>
    %58 = vector.broadcast %13 : vector<1x256xf32> to vector<8x256xf32>
    %59 = arith.mulf %57, %58 : vector<8x256xf32>
    %c247_i32 = arith.constant 247 : i32
    %60 = tpu.dynamic_rotate %38 by %c247_i32 dim 1 : vector<8x256xf32>, i32 -> vector<8x256xf32>
    %61 = vector.broadcast %15 : vector<1x256xf32> to vector<8x256xf32>
    %62 = arith.mulf %60, %61 : vector<8x256xf32>
    %c246_i32 = arith.constant 246 : i32
    %63 = tpu.dynamic_rotate %38 by %c246_i32 dim 1 : vector<8x256xf32>, i32 -> vector<8x256xf32>
    %64 = vector.broadcast %17 : vector<1x256xf32> to vector<8x256xf32>
    %65 = arith.mulf %63, %64 : vector<8x256xf32>
    %66 = tpu.concatenate %42, %45, %48, %51, %53, %56, %59, %62, %65 in 0 : vector<8x256xf32>, vector<8x256xf32>, vector<8x256xf32>, vector<8x256xf32>, vector<8x256xf32>, vector<8x256xf32>, vector<8x256xf32>, vector<8x256xf32>, vector<8x256xf32> -> vector<72x256xf32>
    %cst_51 = arith.constant dense<0.000000e+00> : vector<8x256xf32>
    %67 = tpu.matmul %39, %66, %cst_51 {dimension_numbers = #tpu.dot_dimension_numbers<[1], [0], [0], [1], [0, 0, 1, 1], [], []>} : vector<8x72xf32>, vector<72x256xf32>, vector<8x256xf32> -> vector<8x256xf32>
    %c0_52 = arith.constant 0 : index
    %c0_53 = arith.constant 0 : index
    %68 = vector.load %arg7[%c0_52, %c0_53] : memref<8x1xf32, #tpu.memory_space<vmem>>, vector<8x1xf32>
    %69 = vector.broadcast %68 : vector<8x1xf32> to vector<8x256xf32>
    %70 = arith.addf %67, %69 : vector<8x256xf32>
    %cst_54 = arith.constant 0.000000e+00 : f32
    %71 = vector.broadcast %cst_54 : f32 to vector<8x256xf32>
    %72 = arith.maximumf %70, %71 : vector<8x256xf32>
    %c0_55 = arith.constant 0 : index
    %c0_56 = arith.constant 0 : index
    %73 = vector.load %arg8[%c0_55, %c0_56] : memref<8x72xf32, #tpu.memory_space<vmem>>, vector<8x72xf32>
    %c10_i32_57 = arith.constant 10 : i32
    %74 = tpu.dynamic_rotate %72 by %c10_i32_57 dim 1 : vector<8x256xf32>, i32 -> vector<8x256xf32>
    %75 = vector.broadcast %1 : vector<1x256xf32> to vector<8x256xf32>
    %76 = arith.mulf %74, %75 : vector<8x256xf32>
    %c9_i32_58 = arith.constant 9 : i32
    %77 = tpu.dynamic_rotate %72 by %c9_i32_58 dim 1 : vector<8x256xf32>, i32 -> vector<8x256xf32>
    %78 = vector.broadcast %3 : vector<1x256xf32> to vector<8x256xf32>
    %79 = arith.mulf %77, %78 : vector<8x256xf32>
    %c8_i32_59 = arith.constant 8 : i32
    %80 = tpu.dynamic_rotate %72 by %c8_i32_59 dim 1 : vector<8x256xf32>, i32 -> vector<8x256xf32>
    %81 = vector.broadcast %5 : vector<1x256xf32> to vector<8x256xf32>
    %82 = arith.mulf %80, %81 : vector<8x256xf32>
    %c1_i32_60 = arith.constant 1 : i32
    %83 = tpu.dynamic_rotate %72 by %c1_i32_60 dim 1 : vector<8x256xf32>, i32 -> vector<8x256xf32>
    %84 = vector.broadcast %7 : vector<1x256xf32> to vector<8x256xf32>
    %85 = arith.mulf %83, %84 : vector<8x256xf32>
    %86 = vector.broadcast %9 : vector<1x256xf32> to vector<8x256xf32>
    %87 = arith.mulf %72, %86 : vector<8x256xf32>
    %c255_i32_61 = arith.constant 255 : i32
    %88 = tpu.dynamic_rotate %72 by %c255_i32_61 dim 1 : vector<8x256xf32>, i32 -> vector<8x256xf32>
    %89 = vector.broadcast %11 : vector<1x256xf32> to vector<8x256xf32>
    %90 = arith.mulf %88, %89 : vector<8x256xf32>
    %c248_i32_62 = arith.constant 248 : i32
    %91 = tpu.dynamic_rotate %72 by %c248_i32_62 dim 1 : vector<8x256xf32>, i32 -> vector<8x256xf32>
    %92 = vector.broadcast %13 : vector<1x256xf32> to vector<8x256xf32>
    %93 = arith.mulf %91, %92 : vector<8x256xf32>
    %c247_i32_63 = arith.constant 247 : i32
    %94 = tpu.dynamic_rotate %72 by %c247_i32_63 dim 1 : vector<8x256xf32>, i32 -> vector<8x256xf32>
    %95 = vector.broadcast %15 : vector<1x256xf32> to vector<8x256xf32>
    %96 = arith.mulf %94, %95 : vector<8x256xf32>
    %c246_i32_64 = arith.constant 246 : i32
    %97 = tpu.dynamic_rotate %72 by %c246_i32_64 dim 1 : vector<8x256xf32>, i32 -> vector<8x256xf32>
    %98 = vector.broadcast %17 : vector<1x256xf32> to vector<8x256xf32>
    %99 = arith.mulf %97, %98 : vector<8x256xf32>
    %100 = tpu.concatenate %76, %79, %82, %85, %87, %90, %93, %96, %99 in 0 : vector<8x256xf32>, vector<8x256xf32>, vector<8x256xf32>, vector<8x256xf32>, vector<8x256xf32>, vector<8x256xf32>, vector<8x256xf32>, vector<8x256xf32>, vector<8x256xf32> -> vector<72x256xf32>
    %cst_65 = arith.constant dense<0.000000e+00> : vector<8x256xf32>
    %101 = tpu.matmul %73, %100, %cst_65 {dimension_numbers = #tpu.dot_dimension_numbers<[1], [0], [0], [1], [0, 0, 1, 1], [], []>} : vector<8x72xf32>, vector<72x256xf32>, vector<8x256xf32> -> vector<8x256xf32>
    %c0_66 = arith.constant 0 : index
    %c0_67 = arith.constant 0 : index
    %102 = vector.load %arg9[%c0_66, %c0_67] : memref<8x1xf32, #tpu.memory_space<vmem>>, vector<8x1xf32>
    %103 = vector.broadcast %102 : vector<8x1xf32> to vector<8x256xf32>
    %104 = arith.addf %101, %103 : vector<8x256xf32>
    %cst_68 = arith.constant 0.000000e+00 : f32
    %105 = vector.broadcast %cst_68 : f32 to vector<8x256xf32>
    %106 = arith.maximumf %104, %105 : vector<8x256xf32>
    %c0_69 = arith.constant 0 : index
    %c0_70 = arith.constant 0 : index
    %c0_71 = arith.constant 0 : index
    %107 = vector.load %arg4[%c0_69, %c0_70, %c0_71] : memref<4x256x128xbf16, #tpu.memory_space<vmem>>, vector<1x256x128xbf16>
    %108 = vector.shape_cast %107 : vector<1x256x128xbf16> to vector<256x128xbf16>
    %109 = arith.extf %108 : vector<256x128xbf16> to vector<256x128xf32>
    %cst_72 = arith.constant dense<0.000000e+00> : vector<8x128xf32>
    %110 = tpu.matmul %106, %109, %cst_72 {dimension_numbers = #tpu.dot_dimension_numbers<[1], [0], [0], [1], [0, 0, 1, 1], [], []>} : vector<8x256xf32>, vector<256x128xf32>, vector<8x128xf32> -> vector<8x128xf32>
    %c1_73 = arith.constant 1 : index
    %c0_74 = arith.constant 0 : index
    %c0_75 = arith.constant 0 : index
    %111 = vector.load %arg4[%c1_73, %c0_74, %c0_75] : memref<4x256x128xbf16, #tpu.memory_space<vmem>>, vector<1x256x128xbf16>
    %112 = vector.shape_cast %111 : vector<1x256x128xbf16> to vector<256x128xbf16>
    %113 = arith.extf %112 : vector<256x128xbf16> to vector<256x128xf32>
    %cst_76 = arith.constant dense<0.000000e+00> : vector<8x128xf32>
    %114 = tpu.matmul %106, %113, %cst_76 {dimension_numbers = #tpu.dot_dimension_numbers<[1], [0], [0], [1], [0, 0, 1, 1], [], []>} : vector<8x256xf32>, vector<256x128xf32>, vector<8x128xf32> -> vector<8x128xf32>
    %115 = arith.maximumf %110, %114 : vector<8x128xf32>
    %c2_77 = arith.constant 2 : index
    %c0_78 = arith.constant 0 : index
    %c0_79 = arith.constant 0 : index
    %116 = vector.load %arg4[%c2_77, %c0_78, %c0_79] : memref<4x256x128xbf16, #tpu.memory_space<vmem>>, vector<1x256x128xbf16>
    %117 = vector.shape_cast %116 : vector<1x256x128xbf16> to vector<256x128xbf16>
    %118 = arith.extf %117 : vector<256x128xbf16> to vector<256x128xf32>
    %cst_80 = arith.constant dense<0.000000e+00> : vector<8x128xf32>
    %119 = tpu.matmul %106, %118, %cst_80 {dimension_numbers = #tpu.dot_dimension_numbers<[1], [0], [0], [1], [0, 0, 1, 1], [], []>} : vector<8x256xf32>, vector<256x128xf32>, vector<8x128xf32> -> vector<8x128xf32>
    %120 = arith.maximumf %115, %119 : vector<8x128xf32>
    %c3_81 = arith.constant 3 : index
    %c0_82 = arith.constant 0 : index
    %c0_83 = arith.constant 0 : index
    %121 = vector.load %arg4[%c3_81, %c0_82, %c0_83] : memref<4x256x128xbf16, #tpu.memory_space<vmem>>, vector<1x256x128xbf16>
    %122 = vector.shape_cast %121 : vector<1x256x128xbf16> to vector<256x128xbf16>
    %123 = arith.extf %122 : vector<256x128xbf16> to vector<256x128xf32>
    %cst_84 = arith.constant dense<0.000000e+00> : vector<8x128xf32>
    %124 = tpu.matmul %106, %123, %cst_84 {dimension_numbers = #tpu.dot_dimension_numbers<[1], [0], [0], [1], [0, 0, 1, 1], [], []>} : vector<8x256xf32>, vector<256x128xf32>, vector<8x128xf32> -> vector<8x128xf32>
    %125 = arith.maximumf %120, %124 : vector<8x128xf32>
    %c0_85 = arith.constant 0 : index
    %c0_86 = arith.constant 0 : index
    %126 = vector.load %arg10[%c0_85, %c0_86] : memref<8x72xf32, #tpu.memory_space<vmem>>, vector<8x72xf32>
    %c6_i32 = arith.constant 6 : i32
    %127 = tpu.dynamic_rotate %125 by %c6_i32 dim 1 : vector<8x128xf32>, i32 -> vector<8x128xf32>
    %128 = vector.broadcast %19 : vector<1x128xf32> to vector<8x128xf32>
    %129 = arith.mulf %127, %128 : vector<8x128xf32>
    %c5_i32 = arith.constant 5 : i32
    %130 = tpu.dynamic_rotate %125 by %c5_i32 dim 1 : vector<8x128xf32>, i32 -> vector<8x128xf32>
    %131 = vector.broadcast %21 : vector<1x128xf32> to vector<8x128xf32>
    %132 = arith.mulf %130, %131 : vector<8x128xf32>
    %c4_i32 = arith.constant 4 : i32
    %133 = tpu.dynamic_rotate %125 by %c4_i32 dim 1 : vector<8x128xf32>, i32 -> vector<8x128xf32>
    %134 = vector.broadcast %23 : vector<1x128xf32> to vector<8x128xf32>
    %135 = arith.mulf %133, %134 : vector<8x128xf32>
    %c1_i32_87 = arith.constant 1 : i32
    %136 = tpu.dynamic_rotate %125 by %c1_i32_87 dim 1 : vector<8x128xf32>, i32 -> vector<8x128xf32>
    %137 = vector.broadcast %25 : vector<1x128xf32> to vector<8x128xf32>
    %138 = arith.mulf %136, %137 : vector<8x128xf32>
    %139 = vector.broadcast %27 : vector<1x128xf32> to vector<8x128xf32>
    %140 = arith.mulf %125, %139 : vector<8x128xf32>
    %c127_i32 = arith.constant 127 : i32
    %141 = tpu.dynamic_rotate %125 by %c127_i32 dim 1 : vector<8x128xf32>, i32 -> vector<8x128xf32>
    %142 = vector.broadcast %29 : vector<1x128xf32> to vector<8x128xf32>
    %143 = arith.mulf %141, %142 : vector<8x128xf32>
    %c124_i32 = arith.constant 124 : i32
    %144 = tpu.dynamic_rotate %125 by %c124_i32 dim 1 : vector<8x128xf32>, i32 -> vector<8x128xf32>
    %145 = vector.broadcast %31 : vector<1x128xf32> to vector<8x128xf32>
    %146 = arith.mulf %144, %145 : vector<8x128xf32>
    %c123_i32 = arith.constant 123 : i32
    %147 = tpu.dynamic_rotate %125 by %c123_i32 dim 1 : vector<8x128xf32>, i32 -> vector<8x128xf32>
    %148 = vector.broadcast %33 : vector<1x128xf32> to vector<8x128xf32>
    %149 = arith.mulf %147, %148 : vector<8x128xf32>
    %c122_i32 = arith.constant 122 : i32
    %150 = tpu.dynamic_rotate %125 by %c122_i32 dim 1 : vector<8x128xf32>, i32 -> vector<8x128xf32>
    %151 = vector.broadcast %35 : vector<1x128xf32> to vector<8x128xf32>
    %152 = arith.mulf %150, %151 : vector<8x128xf32>
    %153 = tpu.concatenate %129, %132, %135, %138, %140, %143, %146, %149, %152 in 0 : vector<8x128xf32>, vector<8x128xf32>, vector<8x128xf32>, vector<8x128xf32>, vector<8x128xf32>, vector<8x128xf32>, vector<8x128xf32>, vector<8x128xf32>, vector<8x128xf32> -> vector<72x128xf32>
    %cst_88 = arith.constant dense<0.000000e+00> : vector<8x128xf32>
    %154 = tpu.matmul %126, %153, %cst_88 {dimension_numbers = #tpu.dot_dimension_numbers<[1], [0], [0], [1], [0, 0, 1, 1], [], []>} : vector<8x72xf32>, vector<72x128xf32>, vector<8x128xf32> -> vector<8x128xf32>
    %c0_89 = arith.constant 0 : index
    %c0_90 = arith.constant 0 : index
    %155 = vector.load %arg11[%c0_89, %c0_90] : memref<8x1xf32, #tpu.memory_space<vmem>>, vector<8x1xf32>
    %156 = vector.broadcast %155 : vector<8x1xf32> to vector<8x128xf32>
    %157 = arith.addf %154, %156 : vector<8x128xf32>
    %cst_91 = arith.constant 0.000000e+00 : f32
    %158 = vector.broadcast %cst_91 : f32 to vector<8x128xf32>
    %159 = arith.maximumf %157, %158 : vector<8x128xf32>
    %c0_92 = arith.constant 0 : index
    %c0_93 = arith.constant 0 : index
    %160 = vector.load %arg12[%c0_92, %c0_93] : memref<8x72xf32, #tpu.memory_space<vmem>>, vector<8x72xf32>
    %c6_i32_94 = arith.constant 6 : i32
    %161 = tpu.dynamic_rotate %159 by %c6_i32_94 dim 1 : vector<8x128xf32>, i32 -> vector<8x128xf32>
    %162 = vector.broadcast %19 : vector<1x128xf32> to vector<8x128xf32>
    %163 = arith.mulf %161, %162 : vector<8x128xf32>
    %c5_i32_95 = arith.constant 5 : i32
    %164 = tpu.dynamic_rotate %159 by %c5_i32_95 dim 1 : vector<8x128xf32>, i32 -> vector<8x128xf32>
    %165 = vector.broadcast %21 : vector<1x128xf32> to vector<8x128xf32>
    %166 = arith.mulf %164, %165 : vector<8x128xf32>
    %c4_i32_96 = arith.constant 4 : i32
    %167 = tpu.dynamic_rotate %159 by %c4_i32_96 dim 1 : vector<8x128xf32>, i32 -> vector<8x128xf32>
    %168 = vector.broadcast %23 : vector<1x128xf32> to vector<8x128xf32>
    %169 = arith.mulf %167, %168 : vector<8x128xf32>
    %c1_i32_97 = arith.constant 1 : i32
    %170 = tpu.dynamic_rotate %159 by %c1_i32_97 dim 1 : vector<8x128xf32>, i32 -> vector<8x128xf32>
    %171 = vector.broadcast %25 : vector<1x128xf32> to vector<8x128xf32>
    %172 = arith.mulf %170, %171 : vector<8x128xf32>
    %173 = vector.broadcast %27 : vector<1x128xf32> to vector<8x128xf32>
    %174 = arith.mulf %159, %173 : vector<8x128xf32>
    %c127_i32_98 = arith.constant 127 : i32
    %175 = tpu.dynamic_rotate %159 by %c127_i32_98 dim 1 : vector<8x128xf32>, i32 -> vector<8x128xf32>
    %176 = vector.broadcast %29 : vector<1x128xf32> to vector<8x128xf32>
    %177 = arith.mulf %175, %176 : vector<8x128xf32>
    %c124_i32_99 = arith.constant 124 : i32
    %178 = tpu.dynamic_rotate %159 by %c124_i32_99 dim 1 : vector<8x128xf32>, i32 -> vector<8x128xf32>
    %179 = vector.broadcast %31 : vector<1x128xf32> to vector<8x128xf32>
    %180 = arith.mulf %178, %179 : vector<8x128xf32>
    %c123_i32_100 = arith.constant 123 : i32
    %181 = tpu.dynamic_rotate %159 by %c123_i32_100 dim 1 : vector<8x128xf32>, i32 -> vector<8x128xf32>
    %182 = vector.broadcast %33 : vector<1x128xf32> to vector<8x128xf32>
    %183 = arith.mulf %181, %182 : vector<8x128xf32>
    %c122_i32_101 = arith.constant 122 : i32
    %184 = tpu.dynamic_rotate %159 by %c122_i32_101 dim 1 : vector<8x128xf32>, i32 -> vector<8x128xf32>
    %185 = vector.broadcast %35 : vector<1x128xf32> to vector<8x128xf32>
    %186 = arith.mulf %184, %185 : vector<8x128xf32>
    %187 = tpu.concatenate %163, %166, %169, %172, %174, %177, %180, %183, %186 in 0 : vector<8x128xf32>, vector<8x128xf32>, vector<8x128xf32>, vector<8x128xf32>, vector<8x128xf32>, vector<8x128xf32>, vector<8x128xf32>, vector<8x128xf32>, vector<8x128xf32> -> vector<72x128xf32>
    %cst_102 = arith.constant dense<0.000000e+00> : vector<8x128xf32>
    %188 = tpu.matmul %160, %187, %cst_102 {dimension_numbers = #tpu.dot_dimension_numbers<[1], [0], [0], [1], [0, 0, 1, 1], [], []>} : vector<8x72xf32>, vector<72x128xf32>, vector<8x128xf32> -> vector<8x128xf32>
    %c0_103 = arith.constant 0 : index
    %c0_104 = arith.constant 0 : index
    %189 = vector.load %arg13[%c0_103, %c0_104] : memref<8x1xf32, #tpu.memory_space<vmem>>, vector<8x1xf32>
    %190 = vector.broadcast %189 : vector<8x1xf32> to vector<8x128xf32>
    %191 = arith.addf %188, %190 : vector<8x128xf32>
    %cst_105 = arith.constant 0.000000e+00 : f32
    %192 = vector.broadcast %cst_105 : f32 to vector<8x128xf32>
    %193 = arith.maximumf %191, %192 : vector<8x128xf32>
    %c0_106 = arith.constant 0 : index
    %c0_107 = arith.constant 0 : index
    %194 = vector.load %arg14[%c0_106, %c0_107] : memref<32x8xf32, #tpu.memory_space<vmem>>, vector<32x8xf32>
    %cst_108 = arith.constant dense<0.000000e+00> : vector<32x128xf32>
    %195 = tpu.matmul %194, %193, %cst_108 {dimension_numbers = #tpu.dot_dimension_numbers<[1], [0], [0], [1], [0, 0, 1, 1], [], []>} : vector<32x8xf32>, vector<8x128xf32>, vector<32x128xf32> -> vector<32x128xf32>
    %196 = vector.extract_strided_slice %195 {offsets = [0, 0], sizes = [8, 128], strides = [1, 1]} : vector<32x128xf32> to vector<8x128xf32>
    %c0_109 = arith.constant 0 : index
    %c0_110 = arith.constant 0 : index
    %c0_111 = arith.constant 0 : index
    %197 = vector.load %arg5[%c0_109, %c0_110, %c0_111] : memref<4x128x256xbf16, #tpu.memory_space<vmem>>, vector<1x128x256xbf16>
    %198 = vector.shape_cast %197 : vector<1x128x256xbf16> to vector<128x256xbf16>
    %199 = arith.extf %198 : vector<128x256xbf16> to vector<128x256xf32>
    %cst_112 = arith.constant dense<0.000000e+00> : vector<8x256xf32>
    %200 = tpu.matmul %196, %199, %cst_112 {dimension_numbers = #tpu.dot_dimension_numbers<[1], [0], [0], [1], [0, 0, 1, 1], [], []>} : vector<8x128xf32>, vector<128x256xf32>, vector<8x256xf32> -> vector<8x256xf32>
    %201 = vector.extract_strided_slice %195 {offsets = [8, 0], sizes = [8, 128], strides = [1, 1]} : vector<32x128xf32> to vector<8x128xf32>
    %c1_113 = arith.constant 1 : index
    %c0_114 = arith.constant 0 : index
    %c0_115 = arith.constant 0 : index
    %202 = vector.load %arg5[%c1_113, %c0_114, %c0_115] : memref<4x128x256xbf16, #tpu.memory_space<vmem>>, vector<1x128x256xbf16>
    %203 = vector.shape_cast %202 : vector<1x128x256xbf16> to vector<128x256xbf16>
    %204 = arith.extf %203 : vector<128x256xbf16> to vector<128x256xf32>
    %cst_116 = arith.constant dense<0.000000e+00> : vector<8x256xf32>
    %205 = tpu.matmul %201, %204, %cst_116 {dimension_numbers = #tpu.dot_dimension_numbers<[1], [0], [0], [1], [0, 0, 1, 1], [], []>} : vector<8x128xf32>, vector<128x256xf32>, vector<8x256xf32> -> vector<8x256xf32>
    %206 = arith.addf %200, %205 : vector<8x256xf32>
    %207 = vector.extract_strided_slice %195 {offsets = [16, 0], sizes = [8, 128], strides = [1, 1]} : vector<32x128xf32> to vector<8x128xf32>
    %c2_117 = arith.constant 2 : index
    %c0_118 = arith.constant 0 : index
    %c0_119 = arith.constant 0 : index
    %208 = vector.load %arg5[%c2_117, %c0_118, %c0_119] : memref<4x128x256xbf16, #tpu.memory_space<vmem>>, vector<1x128x256xbf16>
    %209 = vector.shape_cast %208 : vector<1x128x256xbf16> to vector<128x256xbf16>
    %210 = arith.extf %209 : vector<128x256xbf16> to vector<128x256xf32>
    %cst_120 = arith.constant dense<0.000000e+00> : vector<8x256xf32>
    %211 = tpu.matmul %207, %210, %cst_120 {dimension_numbers = #tpu.dot_dimension_numbers<[1], [0], [0], [1], [0, 0, 1, 1], [], []>} : vector<8x128xf32>, vector<128x256xf32>, vector<8x256xf32> -> vector<8x256xf32>
    %212 = arith.addf %206, %211 : vector<8x256xf32>
    %213 = vector.extract_strided_slice %195 {offsets = [24, 0], sizes = [8, 128], strides = [1, 1]} : vector<32x128xf32> to vector<8x128xf32>
    %c3_121 = arith.constant 3 : index
    %c0_122 = arith.constant 0 : index
    %c0_123 = arith.constant 0 : index
    %214 = vector.load %arg5[%c3_121, %c0_122, %c0_123] : memref<4x128x256xbf16, #tpu.memory_space<vmem>>, vector<1x128x256xbf16>
    %215 = vector.shape_cast %214 : vector<1x128x256xbf16> to vector<128x256xbf16>
    %216 = arith.extf %215 : vector<128x256xbf16> to vector<128x256xf32>
    %cst_124 = arith.constant dense<0.000000e+00> : vector<8x256xf32>
    %217 = tpu.matmul %213, %216, %cst_124 {dimension_numbers = #tpu.dot_dimension_numbers<[1], [0], [0], [1], [0, 0, 1, 1], [], []>} : vector<8x128xf32>, vector<128x256xf32>, vector<8x256xf32> -> vector<8x256xf32>
    %218 = arith.addf %212, %217 : vector<8x256xf32>
    %c0_125 = arith.constant 0 : index
    %c0_126 = arith.constant 0 : index
    %219 = vector.load %arg15[%c0_125, %c0_126] : memref<8x1xf32, #tpu.memory_space<vmem>>, vector<8x1xf32>
    %220 = vector.broadcast %219 : vector<8x1xf32> to vector<8x256xf32>
    %221 = arith.addf %218, %220 : vector<8x256xf32>
    %c10_i32_127 = arith.constant 10 : i32
    %222 = tpu.dynamic_rotate %106 by %c10_i32_127 dim 1 : vector<8x256xf32>, i32 -> vector<8x256xf32>
    %223 = vector.broadcast %1 : vector<1x256xf32> to vector<8x256xf32>
    %224 = arith.mulf %222, %223 : vector<8x256xf32>
    %c9_i32_128 = arith.constant 9 : i32
    %225 = tpu.dynamic_rotate %106 by %c9_i32_128 dim 1 : vector<8x256xf32>, i32 -> vector<8x256xf32>
    %226 = vector.broadcast %3 : vector<1x256xf32> to vector<8x256xf32>
    %227 = arith.mulf %225, %226 : vector<8x256xf32>
    %c8_i32_129 = arith.constant 8 : i32
    %228 = tpu.dynamic_rotate %106 by %c8_i32_129 dim 1 : vector<8x256xf32>, i32 -> vector<8x256xf32>
    %229 = vector.broadcast %5 : vector<1x256xf32> to vector<8x256xf32>
    %230 = arith.mulf %228, %229 : vector<8x256xf32>
    %c1_i32_130 = arith.constant 1 : i32
    %231 = tpu.dynamic_rotate %106 by %c1_i32_130 dim 1 : vector<8x256xf32>, i32 -> vector<8x256xf32>
    %232 = vector.broadcast %7 : vector<1x256xf32> to vector<8x256xf32>
    %233 = arith.mulf %231, %232 : vector<8x256xf32>
    %234 = vector.broadcast %9 : vector<1x256xf32> to vector<8x256xf32>
    %235 = arith.mulf %106, %234 : vector<8x256xf32>
    %c255_i32_131 = arith.constant 255 : i32
    %236 = tpu.dynamic_rotate %106 by %c255_i32_131 dim 1 : vector<8x256xf32>, i32 -> vector<8x256xf32>
    %237 = vector.broadcast %11 : vector<1x256xf32> to vector<8x256xf32>
    %238 = arith.mulf %236, %237 : vector<8x256xf32>
    %c248_i32_132 = arith.constant 248 : i32
    %239 = tpu.dynamic_rotate %106 by %c248_i32_132 dim 1 : vector<8x256xf32>, i32 -> vector<8x256xf32>
    %240 = vector.broadcast %13 : vector<1x256xf32> to vector<8x256xf32>
    %241 = arith.mulf %239, %240 : vector<8x256xf32>
    %c247_i32_133 = arith.constant 247 : i32
    %242 = tpu.dynamic_rotate %106 by %c247_i32_133 dim 1 : vector<8x256xf32>, i32 -> vector<8x256xf32>
    %243 = vector.broadcast %15 : vector<1x256xf32> to vector<8x256xf32>
    %244 = arith.mulf %242, %243 : vector<8x256xf32>
    %c246_i32_134 = arith.constant 246 : i32
    %245 = tpu.dynamic_rotate %106 by %c246_i32_134 dim 1 : vector<8x256xf32>, i32 -> vector<8x256xf32>
    %246 = vector.broadcast %17 : vector<1x256xf32> to vector<8x256xf32>
    %247 = arith.mulf %245, %246 : vector<8x256xf32>
    %248 = tpu.concatenate %224, %227, %230, %233, %235, %238, %241, %244, %247 in 0 : vector<8x256xf32>, vector<8x256xf32>, vector<8x256xf32>, vector<8x256xf32>, vector<8x256xf32>, vector<8x256xf32>, vector<8x256xf32>, vector<8x256xf32>, vector<8x256xf32> -> vector<72x256xf32>
    %c10_i32_135 = arith.constant 10 : i32
    %249 = tpu.dynamic_rotate %221 by %c10_i32_135 dim 1 : vector<8x256xf32>, i32 -> vector<8x256xf32>
    %250 = vector.broadcast %1 : vector<1x256xf32> to vector<8x256xf32>
    %251 = arith.mulf %249, %250 : vector<8x256xf32>
    %c9_i32_136 = arith.constant 9 : i32
    %252 = tpu.dynamic_rotate %221 by %c9_i32_136 dim 1 : vector<8x256xf32>, i32 -> vector<8x256xf32>
    %253 = vector.broadcast %3 : vector<1x256xf32> to vector<8x256xf32>
    %254 = arith.mulf %252, %253 : vector<8x256xf32>
    %c8_i32_137 = arith.constant 8 : i32
    %255 = tpu.dynamic_rotate %221 by %c8_i32_137 dim 1 : vector<8x256xf32>, i32 -> vector<8x256xf32>
    %256 = vector.broadcast %5 : vector<1x256xf32> to vector<8x256xf32>
    %257 = arith.mulf %255, %256 : vector<8x256xf32>
    %c1_i32_138 = arith.constant 1 : i32
    %258 = tpu.dynamic_rotate %221 by %c1_i32_138 dim 1 : vector<8x256xf32>, i32 -> vector<8x256xf32>
    %259 = vector.broadcast %7 : vector<1x256xf32> to vector<8x256xf32>
    %260 = arith.mulf %258, %259 : vector<8x256xf32>
    %261 = vector.broadcast %9 : vector<1x256xf32> to vector<8x256xf32>
    %262 = arith.mulf %221, %261 : vector<8x256xf32>
    %c255_i32_139 = arith.constant 255 : i32
    %263 = tpu.dynamic_rotate %221 by %c255_i32_139 dim 1 : vector<8x256xf32>, i32 -> vector<8x256xf32>
    %264 = vector.broadcast %11 : vector<1x256xf32> to vector<8x256xf32>
    %265 = arith.mulf %263, %264 : vector<8x256xf32>
    %c248_i32_140 = arith.constant 248 : i32
    %266 = tpu.dynamic_rotate %221 by %c248_i32_140 dim 1 : vector<8x256xf32>, i32 -> vector<8x256xf32>
    %267 = vector.broadcast %13 : vector<1x256xf32> to vector<8x256xf32>
    %268 = arith.mulf %266, %267 : vector<8x256xf32>
    %c247_i32_141 = arith.constant 247 : i32
    %269 = tpu.dynamic_rotate %221 by %c247_i32_141 dim 1 : vector<8x256xf32>, i32 -> vector<8x256xf32>
    %270 = vector.broadcast %15 : vector<1x256xf32> to vector<8x256xf32>
    %271 = arith.mulf %269, %270 : vector<8x256xf32>
    %c246_i32_142 = arith.constant 246 : i32
    %272 = tpu.dynamic_rotate %221 by %c246_i32_142 dim 1 : vector<8x256xf32>, i32 -> vector<8x256xf32>
    %273 = vector.broadcast %17 : vector<1x256xf32> to vector<8x256xf32>
    %274 = arith.mulf %272, %273 : vector<8x256xf32>
    %275 = tpu.concatenate %251, %254, %257, %260, %262, %265, %268, %271, %274 in 0 : vector<8x256xf32>, vector<8x256xf32>, vector<8x256xf32>, vector<8x256xf32>, vector<8x256xf32>, vector<8x256xf32>, vector<8x256xf32>, vector<8x256xf32>, vector<8x256xf32> -> vector<72x256xf32>
    %276 = tpu.concatenate %248, %275 in 0 : vector<72x256xf32>, vector<72x256xf32> -> vector<144x256xf32>
    %c0_143 = arith.constant 0 : index
    %c0_144 = arith.constant 0 : index
    %277 = vector.load %arg16[%c0_143, %c0_144] : memref<8x144xf32, #tpu.memory_space<vmem>>, vector<8x144xf32>
    %cst_145 = arith.constant dense<0.000000e+00> : vector<8x256xf32>
    %278 = tpu.matmul %277, %276, %cst_145 {dimension_numbers = #tpu.dot_dimension_numbers<[1], [0], [0], [1], [0, 0, 1, 1], [], []>} : vector<8x144xf32>, vector<144x256xf32>, vector<8x256xf32> -> vector<8x256xf32>
    %c0_146 = arith.constant 0 : index
    %c0_147 = arith.constant 0 : index
    %279 = vector.load %arg17[%c0_146, %c0_147] : memref<8x1xf32, #tpu.memory_space<vmem>>, vector<8x1xf32>
    %280 = vector.broadcast %279 : vector<8x1xf32> to vector<8x256xf32>
    %281 = arith.addf %278, %280 : vector<8x256xf32>
    %cst_148 = arith.constant 0.000000e+00 : f32
    %282 = vector.broadcast %cst_148 : f32 to vector<8x256xf32>
    %283 = arith.maximumf %281, %282 : vector<8x256xf32>
    %c0_149 = arith.constant 0 : index
    %c0_150 = arith.constant 0 : index
    %284 = vector.load %arg18[%c0_149, %c0_150] : memref<8x72xf32, #tpu.memory_space<vmem>>, vector<8x72xf32>
    %c10_i32_151 = arith.constant 10 : i32
    %285 = tpu.dynamic_rotate %283 by %c10_i32_151 dim 1 : vector<8x256xf32>, i32 -> vector<8x256xf32>
    %286 = vector.broadcast %1 : vector<1x256xf32> to vector<8x256xf32>
    %287 = arith.mulf %285, %286 : vector<8x256xf32>
    %c9_i32_152 = arith.constant 9 : i32
    %288 = tpu.dynamic_rotate %283 by %c9_i32_152 dim 1 : vector<8x256xf32>, i32 -> vector<8x256xf32>
    %289 = vector.broadcast %3 : vector<1x256xf32> to vector<8x256xf32>
    %290 = arith.mulf %288, %289 : vector<8x256xf32>
    %c8_i32_153 = arith.constant 8 : i32
    %291 = tpu.dynamic_rotate %283 by %c8_i32_153 dim 1 : vector<8x256xf32>, i32 -> vector<8x256xf32>
    %292 = vector.broadcast %5 : vector<1x256xf32> to vector<8x256xf32>
    %293 = arith.mulf %291, %292 : vector<8x256xf32>
    %c1_i32_154 = arith.constant 1 : i32
    %294 = tpu.dynamic_rotate %283 by %c1_i32_154 dim 1 : vector<8x256xf32>, i32 -> vector<8x256xf32>
    %295 = vector.broadcast %7 : vector<1x256xf32> to vector<8x256xf32>
    %296 = arith.mulf %294, %295 : vector<8x256xf32>
    %297 = vector.broadcast %9 : vector<1x256xf32> to vector<8x256xf32>
    %298 = arith.mulf %283, %297 : vector<8x256xf32>
    %c255_i32_155 = arith.constant 255 : i32
    %299 = tpu.dynamic_rotate %283 by %c255_i32_155 dim 1 : vector<8x256xf32>, i32 -> vector<8x256xf32>
    %300 = vector.broadcast %11 : vector<1x256xf32> to vector<8x256xf32>
    %301 = arith.mulf %299, %300 : vector<8x256xf32>
    %c248_i32_156 = arith.constant 248 : i32
    %302 = tpu.dynamic_rotate %283 by %c248_i32_156 dim 1 : vector<8x256xf32>, i32 -> vector<8x256xf32>
    %303 = vector.broadcast %13 : vector<1x256xf32> to vector<8x256xf32>
    %304 = arith.mulf %302, %303 : vector<8x256xf32>
    %c247_i32_157 = arith.constant 247 : i32
    %305 = tpu.dynamic_rotate %283 by %c247_i32_157 dim 1 : vector<8x256xf32>, i32 -> vector<8x256xf32>
    %306 = vector.broadcast %15 : vector<1x256xf32> to vector<8x256xf32>
    %307 = arith.mulf %305, %306 : vector<8x256xf32>
    %c246_i32_158 = arith.constant 246 : i32
    %308 = tpu.dynamic_rotate %283 by %c246_i32_158 dim 1 : vector<8x256xf32>, i32 -> vector<8x256xf32>
    %309 = vector.broadcast %17 : vector<1x256xf32> to vector<8x256xf32>
    %310 = arith.mulf %308, %309 : vector<8x256xf32>
    %311 = tpu.concatenate %287, %290, %293, %296, %298, %301, %304, %307, %310 in 0 : vector<8x256xf32>, vector<8x256xf32>, vector<8x256xf32>, vector<8x256xf32>, vector<8x256xf32>, vector<8x256xf32>, vector<8x256xf32>, vector<8x256xf32>, vector<8x256xf32> -> vector<72x256xf32>
    %cst_159 = arith.constant dense<0.000000e+00> : vector<8x256xf32>
    %312 = tpu.matmul %284, %311, %cst_159 {dimension_numbers = #tpu.dot_dimension_numbers<[1], [0], [0], [1], [0, 0, 1, 1], [], []>} : vector<8x72xf32>, vector<72x256xf32>, vector<8x256xf32> -> vector<8x256xf32>
    %c0_160 = arith.constant 0 : index
    %c0_161 = arith.constant 0 : index
    %313 = vector.load %arg19[%c0_160, %c0_161] : memref<8x1xf32, #tpu.memory_space<vmem>>, vector<8x1xf32>
    %314 = vector.broadcast %313 : vector<8x1xf32> to vector<8x256xf32>
    %315 = arith.addf %312, %314 : vector<8x256xf32>
    %cst_162 = arith.constant 0.000000e+00 : f32
    %316 = vector.broadcast %cst_162 : f32 to vector<8x256xf32>
    %317 = arith.maximumf %315, %316 : vector<8x256xf32>
    %c0_163 = arith.constant 0 : index
    %c0_164 = arith.constant 0 : index
    %318 = vector.load %arg20[%c0_163, %c0_164] : memref<8x8xf32, #tpu.memory_space<vmem>>, vector<8x8xf32>
    %cst_165 = arith.constant dense<0.000000e+00> : vector<8x256xf32>
    %319 = tpu.matmul %318, %317, %cst_165 {dimension_numbers = #tpu.dot_dimension_numbers<[1], [0], [0], [1], [0, 0, 1, 1], [], []>} : vector<8x8xf32>, vector<8x256xf32>, vector<8x256xf32> -> vector<8x256xf32>
    %c0_166 = arith.constant 0 : index
    %c0_167 = arith.constant 0 : index
    %320 = vector.load %arg21[%c0_166, %c0_167] : memref<8x1xf32, #tpu.memory_space<vmem>>, vector<8x1xf32>
    %321 = vector.broadcast %320 : vector<8x1xf32> to vector<8x256xf32>
    %322 = arith.addf %319, %321 : vector<8x256xf32>
    %c0_168 = arith.constant 0 : index
    %c0_169 = arith.constant 0 : index
    %323 = vector.load %arg22[%c0_168, %c0_169] : memref<8x256xf32, #tpu.memory_space<vmem>>, vector<8x256xf32>
    tpu.vector_store %arg22[%c0_168, %c0_169], %322 {strides = array<i32>} : memref<8x256xf32, #tpu.memory_space<vmem>>, vector<8x256xf32>,
    return
  }
}

</mosaic_0001>

<llo_original>
// kernel: unet_forward.1
$region0: #{unet_forward.1}
  #allocation0 [shape = 'u32[]', space=smem, size = 0x4, offset = 0x4, fixed_abs, tag = 'smem constant byte address 0x4 - core index']
  #allocation1 [shape = 'u32[144,128]{1,0:T(1,128)}', space=vmem, size = 0x12000, scoped, tag = 'internal scratch']
  %s0 = inlined_call_operand.vmem [shape: f32[16,256], index: 0, kind: input, shape index: {}]
  %s1 = inlined_call_operand.vmem [shape: f32[8,16], index: 1, kind: input, shape index: {}]
  %s2 = inlined_call_operand.vmem [shape: f32[9,1,256], index: 2, kind: input, shape index: {}]
  %s3 = inlined_call_operand.vmem [shape: f32[9,1,128], index: 3, kind: input, shape index: {}]
  %s4 = inlined_call_operand.vmem [shape: bf16[4,256,128], index: 4, kind: input, shape index: {}]
  %s5 = inlined_call_operand.vmem [shape: bf16[4,128,256], index: 5, kind: input, shape index: {}]
  %s6 = inlined_call_operand.vmem [shape: f32[8,72], index: 6, kind: input, shape index: {}]
  %s7 = inlined_call_operand.vmem [shape: f32[8,1], index: 7, kind: input, shape index: {}]
  %s8 = inlined_call_operand.vmem [shape: f32[8,72], index: 8, kind: input, shape index: {}]
  %s9 = inlined_call_operand.vmem [shape: f32[8,1], index: 9, kind: input, shape index: {}]
  %s10 = inlined_call_operand.vmem [shape: f32[8,72], index: 10, kind: input, shape index: {}]
  %s11 = inlined_call_operand.vmem [shape: f32[8,1], index: 11, kind: input, shape index: {}]
  %s12 = inlined_call_operand.vmem [shape: f32[8,72], index: 12, kind: input, shape index: {}]
  %s13 = inlined_call_operand.vmem [shape: f32[8,1], index: 13, kind: input, shape index: {}]
  %s14 = inlined_call_operand.vmem [shape: f32[32,8], index: 14, kind: input, shape index: {}]
  %s15 = inlined_call_operand.vmem [shape: f32[8,1], index: 15, kind: input, shape index: {}]
  %s16 = inlined_call_operand.vmem [shape: f32[8,144], index: 16, kind: input, shape index: {}]
  %s17 = inlined_call_operand.vmem [shape: f32[8,1], index: 17, kind: input, shape index: {}]
  %s18 = inlined_call_operand.vmem [shape: f32[8,72], index: 18, kind: input, shape index: {}]
  %s19 = inlined_call_operand.vmem [shape: f32[8,1], index: 19, kind: input, shape index: {}]
  %s20 = inlined_call_operand.vmem [shape: f32[8,8], index: 20, kind: input, shape index: {}]
  %s21 = inlined_call_operand.vmem [shape: f32[8,1], index: 21, kind: input, shape index: {}]
  %s22 = inlined_call_operand.vmem [shape: f32[8,256], index: 22, kind: output, shape index: {}]
  %s23 = sld [smem:[#allocation0]]
  $region98: #{unet_forward.1} parent=0
    _
  %s25 = ssub.s32 1, %s23
  %s26 = scalar_select 0, %s25, %s23
  // Predicated region
  $region2: #{unet_forward.1} parent=0 // pred_check
    _
  $region3: #{unet_forward.1} parent=0 // pred_check_branch
    %28 = sbr.rel (0) target = $region5
  $region4: #{unet_forward.1} parent=0 // pred_region
    _
  $region5: #{unet_forward.1} parent=0 // pred_fallthru
    _
  // Predicated region
  $region6: #{unet_forward.1} parent=0 // pred_check
    _
  $region7: #{unet_forward.1} parent=0 // pred_check_branch
    %30 = sbr.rel (0) target = $region9
  $region8: #{unet_forward.1} parent=0 // pred_region
    _
  $region9: #{unet_forward.1} parent=0 // pred_fallthru
    _
  // Predicated region
  $region10: #{unet_forward.1} parent=0 // pred_check
    _
  $region11: #{unet_forward.1} parent=0 // pred_check_branch
    %32 = sbr.rel (0) target = $region13
  $region12: #{unet_forward.1} parent=0 // pred_region
    _
  $region13: #{unet_forward.1} parent=0 // pred_fallthru
    _
  // Predicated region
  $region14: #{unet_forward.1} parent=0 // pred_check
    _
  $region15: #{unet_forward.1} parent=0 // pred_check_branch
    %34 = sbr.rel (0) target = $region17
  $region16: #{unet_forward.1} parent=0 // pred_region
    _
  $region17: #{unet_forward.1} parent=0 // pred_fallthru
    _
  // Predicated region
  $region18: #{unet_forward.1} parent=0 // pred_check
    _
  $region19: #{unet_forward.1} parent=0 // pred_check_branch
    %36 = sbr.rel (0) target = $region21
  $region20: #{unet_forward.1} parent=0 // pred_region
    _
  $region21: #{unet_forward.1} parent=0 // pred_fallthru
    _
  // Predicated region
  $region22: #{unet_forward.1} parent=0 // pred_check
    _
  $region23: #{unet_forward.1} parent=0 // pred_check_branch
    %38 = sbr.rel (0) target = $region25
  $region24: #{unet_forward.1} parent=0 // pred_region
    _
  $region25: #{unet_forward.1} parent=0 // pred_fallthru
    _
  // Predicated region
  $region26: #{unet_forward.1} parent=0 // pred_check
    _
  $region27: #{unet_forward.1} parent=0 // pred_check_branch
    %40 = sbr.rel (0) target = $region29
  $region28: #{unet_forward.1} parent=0 // pred_region
    _
  $region29: #{unet_forward.1} parent=0 // pred_fallthru
    _
  // Predicated region
  $region30: #{unet_forward.1} parent=0 // pred_check
    _
  $region31: #{unet_forward.1} parent=0 // pred_check_branch
    %42 = sbr.rel (0) target = $region33
  $region32: #{unet_forward.1} parent=0 // pred_region
    _
  $region33: #{unet_forward.1} parent=0 // pred_fallthru
    _
  // Predicated region
  $region34: #{unet_forward.1} parent=0 // pred_check
    _
  $region35: #{unet_forward.1} parent=0 // pred_check_branch
    %44 = sbr.rel (0) target = $region37
  $region36: #{unet_forward.1} parent=0 // pred_region
    _
  $region37: #{unet_forward.1} parent=0 // pred_fallthru
    _
  // Predicated region
  $region38: #{unet_forward.1} parent=0 // pred_check
    _
  $region39: #{unet_forward.1} parent=0 // pred_check_branch
    %46 = sbr.rel (0) target = $region41
  $region40: #{unet_forward.1} parent=0 // pred_region
    _
  $region41: #{unet_forward.1} parent=0 // pred_fallthru
    _
  // Predicated region
  $region42: #{unet_forward.1} parent=0 // pred_check
    _
  $region43: #{unet_forward.1} parent=0 // pred_check_branch
    %48 = sbr.rel (0) target = $region45
  $region44: #{unet_forward.1} parent=0 // pred_region
    _
  $region45: #{unet_forward.1} parent=0 // pred_fallthru
    _
  // Predicated region
  $region46: #{unet_forward.1} parent=0 // pred_check
    _
  $region47: #{unet_forward.1} parent=0 // pred_check_branch
    %50 = sbr.rel (0) target = $region49
  $region48: #{unet_forward.1} parent=0 // pred_region
    _
  $region49: #{unet_forward.1} parent=0 // pred_fallthru
    _
  // Predicated region
  $region50: #{unet_forward.1} parent=0 // pred_check
    _
  $region51: #{unet_forward.1} parent=0 // pred_check_branch
    %52 = sbr.rel (0) target = $region53
  $region52: #{unet_forward.1} parent=0 // pred_region
    _
  $region53: #{unet_forward.1} parent=0 // pred_fallthru
    _
  // Predicated region
  $region54: #{unet_forward.1} parent=0 // pred_check
    _
  $region55: #{unet_forward.1} parent=0 // pred_check_branch
    %54 = sbr.rel (0) target = $region57
  $region56: #{unet_forward.1} parent=0 // pred_region
    _
  $region57: #{unet_forward.1} parent=0 // pred_fallthru
    _
  // Predicated region
  $region58: #{unet_forward.1} parent=0 // pred_check
    _
  $region59: #{unet_forward.1} parent=0 // pred_check_branch
    %56 = sbr.rel (0) target = $region61
  $region60: #{unet_forward.1} parent=0 // pred_region
    _
  $region61: #{unet_forward.1} parent=0 // pred_fallthru
    _
  // Predicated region
  $region62: #{unet_forward.1} parent=0 // pred_check
    _
  $region63: #{unet_forward.1} parent=0 // pred_check_branch
    %58 = sbr.rel (0) target = $region65
  $region64: #{unet_forward.1} parent=0 // pred_region
    _
  $region65: #{unet_forward.1} parent=0 // pred_fallthru
    _
  // Predicated region
  $region66: #{unet_forward.1} parent=0 // pred_check
    _
  $region67: #{unet_forward.1} parent=0 // pred_check_branch
    %60 = sbr.rel (0) target = $region69
  $region68: #{unet_forward.1} parent=0 // pred_region
    _
  $region69: #{unet_forward.1} parent=0 // pred_fallthru
    _
  // Predicated region
  $region70: #{unet_forward.1} parent=0 // pred_check
    _
  $region71: #{unet_forward.1} parent=0 // pred_check_branch
    %62 = sbr.rel (0) target = $region73
  $region72: #{unet_forward.1} parent=0 // pred_region
    _
  $region73: #{unet_forward.1} parent=0 // pred_fallthru
    _
  // Predicated region
  $region74: #{unet_forward.1} parent=0 // pred_check
    _
  $region75: #{unet_forward.1} parent=0 // pred_check_branch
    %64 = sbr.rel (0) target = $region77
  $region76: #{unet_forward.1} parent=0 // pred_region
    _
  $region77: #{unet_forward.1} parent=0 // pred_fallthru
    _
  // Predicated region
  $region78: #{unet_forward.1} parent=0 // pred_check
    _
  $region79: #{unet_forward.1} parent=0 // pred_check_branch
    %66 = sbr.rel (0) target = $region81
  $region80: #{unet_forward.1} parent=0 // pred_region
    _
  $region81: #{unet_forward.1} parent=0 // pred_fallthru
    _
  // Predicated region
  $region82: #{unet_forward.1} parent=0 // pred_check
    _
  $region83: #{unet_forward.1} parent=0 // pred_check_branch
    %68 = sbr.rel (0) target = $region85
  $region84: #{unet_forward.1} parent=0 // pred_region
    _
  $region85: #{unet_forward.1} parent=0 // pred_fallthru
    _
  // Predicated region
  $region86: #{unet_forward.1} parent=0 // pred_check
    _
  $region87: #{unet_forward.1} parent=0 // pred_check_branch
    %70 = sbr.rel (0) target = $region89
  $region88: #{unet_forward.1} parent=0 // pred_region
    _
  $region89: #{unet_forward.1} parent=0 // pred_fallthru
    _
  %v71 = vld [vmem:[%s2] sm:$0x3]
  %s72 = scalar_lea.vmem %s2, 2
  %v73 = vld [vmem:[%s72] sm:$0x3]
  %s74 = scalar_lea.vmem %s2, 4
  %v75 = vld [vmem:[%s74] sm:$0x3]
  %s76 = scalar_lea.vmem %s2, 6
  %v77 = vld [vmem:[%s76] sm:$0x3]
  %s78 = scalar_lea.vmem %s2, 8
  %v79 = vld [vmem:[%s78] sm:$0x3]
  %s80 = scalar_lea.vmem %s2, 10
  %v81 = vld [vmem:[%s80] sm:$0x3]
  %s82 = scalar_lea.vmem %s2, 12
  %v83 = vld [vmem:[%s82] sm:$0x3]
  %s84 = scalar_lea.vmem %s2, 14
  %v85 = vld [vmem:[%s84] sm:$0x3]
  %s86 = scalar_lea.vmem %s2, 16
  %v87 = vld [vmem:[%s86] sm:$0x3]
  %v88 = vld [vmem:[%s3] sm:$0x1]
  %s89 = scalar_lea.vmem %s3, 1
  %v90 = vld [vmem:[%s89] sm:$0x1]
  %s91 = scalar_lea.vmem %s3, 2
  %v92 = vld [vmem:[%s91] sm:$0x1]
  %s93 = scalar_lea.vmem %s3, 3
  %v94 = vld [vmem:[%s93] sm:$0x1]
  %s95 = scalar_lea.vmem %s3, 4
  %v96 = vld [vmem:[%s95] sm:$0x1]
  %s97 = scalar_lea.vmem %s3, 5
  %v98 = vld [vmem:[%s97] sm:$0x1]
  %s99 = scalar_lea.vmem %s3, 6
  %v100 = vld [vmem:[%s99] sm:$0x1]
  %s101 = scalar_lea.vmem %s3, 7
  %v102 = vld [vmem:[%s101] sm:$0x1]
  %s103 = scalar_lea.vmem %s3, 8
  %v104 = vld [vmem:[%s103] sm:$0x1]
  %v105 = vld [vmem:[%s1] sm:$0xff]
  %v106 = vld [vmem:[%s0] sm:$0xff]
  %v107 = vld [vmem:[%s0 + $0x8] sm:$0xff]
  %v108 = vld [vmem:[%s0 + $0x10] sm:$0xff]
  %v109 = vld [vmem:[%s0 + $0x18] sm:$0xff]
  %vm110 = vcmask 130048
  %v112 = vsel %vm110, %v105, 0
  %114 = vmatprep.subr.mxu0 0.0
  %115 = vmatpush1.msra.mxu0 0.0
  %116 = vmatprep.subr.mxu0 0.0
  %117 = vmatpush1.msra.mxu0 0.0
  %118 = vmatprep.subr.mxu0 0.0
  %119 = vmatpush1.msra.mxu0 0.0
  %120 = vmatprep.subr.mxu0 0.0
  %121 = vmatpush1.msra.mxu0 0.0
  %122 = vmatprep.subr.mxu0 0.0
  %123 = vmatpush1.msra.mxu0 0.0
  %124 = vmatprep.subr.mxu0 0.0
  %125 = vmatpush1.msra.mxu0 0.0
  %126 = vmatprep.subr.mxu0 0.0
  %127 = vmatpush1.msra.mxu0 0.0
  %128 = vmatprep.subr.mxu0 0.0
  %129 = vmatpush1.msra.mxu0 0.0
  %130 = vmatprep.subr.mxu0 0.0
  %131 = vmatpush1.msra.mxu0 0.0
  %132 = vmatprep.subr.mxu0 0.0
  %133 = vmatpush1.msra.mxu0 0.0
  %134 = vmatprep.subr.mxu0 0.0
  %135 = vmatpush1.msra.mxu0 0.0
  %136 = vmatprep.subr.mxu0 0.0
  %137 = vmatpush1.msra.mxu0 0.0
  %138 = vmatprep.subr.mxu0 0.0
  %139 = vmatpush1.msra.mxu0 0.0
  %140 = vmatprep.subr.mxu0 0.0
  %141 = vmatpush1.msra.mxu0 0.0
  %142 = vmatprep.subr.mxu0 %v109
  %143 = vmatpush1.msra.mxu0 %v108
  %144 = vmatprep.subr.mxu0 %v107
  %145 = vmatpush1.msra.mxu0 %v106
  %146 = vmatprep.subr.mxu0 0.0
  %147 = vmatpush2.msra.mxu0 0.0
  %148 = vmatprep.subr.mxu0 0.0
  %149 = vmatpush2.msra.mxu0 0.0
  %150 = vmatprep.subr.mxu0 0.0
  %151 = vmatpush2.msra.mxu0 0.0
  %152 = vmatprep.subr.mxu0 0.0
  %153 = vmatpush2.msra.mxu0 0.0
  %154 = vmatprep.subr.mxu0 0.0
  %155 = vmatpush2.msra.mxu0 0.0
  %156 = vmatprep.subr.mxu0 0.0
  %157 = vmatpush2.msra.mxu0 0.0
  %158 = vmatprep.subr.mxu0 0.0
  %159 = vmatpush2.msra.mxu0 0.0
  %160 = vmatprep.subr.mxu0 0.0
  %161 = vmatpush2.msra.mxu0 0.0
  %162 = vmatprep.subr.mxu0 0.0
  %163 = vmatpush2.msra.mxu0 0.0
  %164 = vmatprep.subr.mxu0 0.0
  %165 = vmatpush2.msra.mxu0 0.0
  %166 = vmatprep.subr.mxu0 0.0
  %167 = vmatpush2.msra.mxu0 0.0
  %168 = vmatprep.subr.mxu0 0.0
  %169 = vmatpush2.msra.mxu0 0.0
  %170 = vmatprep.subr.mxu0 0.0
  %171 = vmatpush2.msra.mxu0 0.0
  %172 = vmatprep.subr.mxu0 0.0
  %173 = vmatpush2.msra.mxu0 0.0
  %174 = vmatprep.subr.mxu0 0.0
  %175 = vmatpush2.msra.mxu0 0.0
  %176 = vmatprep.subr.mxu0 0.0
  %177 = vmatpush2.msra.mxu0 0.0
  %178 = vmatprep.mubr.f32.mxu0 0.0
  %179 = vmatmul.mubr.f32.gmra.mxu0 %v112
  %v180 = vpop.f32.mrf.mxu0
  %v181 = vadd.f32 0.0, %v180
  %v182 = vpop.f32.mrf.mxu0
  %v183 = vadd.f32 0.0, %v182
  %184 = vdwg.mxu0
  %v185 = vld [vmem:[%s6] sm:$0xff]
  %186 = vrot.lane.b32.xlu0 %v181, 10
  %v187 = vpop.permute.xlu0 %186
  %188 = vrot.lane.b32.xlu0 %v183, 10
  %v189 = vpop.permute.xlu0 %188
  %v190 = vlaneseq
  %v191 = vand.u32 %v190, 127
  %vm192 = vcmp.lt.s32.totalorder %v191, 10
  %v193 = vsel %vm192, %v187, %v189
  %v194 = vsel %vm192, %v189, %v187
  %v196 = vlaneseq
  %v197 = vshrl.u32 %v196, 7
  %v198 = vsub.s32 0, %v197
  %v199 = vrot.slane %v71, %v198
  %v200 = vlaneseq
  %v201 = vshrl.u32 %v200, 7
  %v202 = vsub.s32 1, %v201
  %v203 = vrot.slane %v71, %v202
  %v206 = vmul.f32 %v194, %v199
  %v207 = vmul.f32 %v193, %v203
  %208 = vrot.lane.b32.xlu0 %v181, 9
  %v209 = vpop.permute.xlu0 %208
  %210 = vrot.lane.b32.xlu0 %v183, 9
  %v211 = vpop.permute.xlu0 %210
  %vm212 = vcmp.lt.s32.totalorder %v191, 9
  %v213 = vsel %vm212, %v209, %v211
  %v214 = vsel %vm212, %v211, %v209
  %v216 = vlaneseq
  %v217 = vshrl.u32 %v216, 7
  %v218 = vsub.s32 0, %v217
  %v219 = vrot.slane %v73, %v218
  %v220 = vlaneseq
  %v221 = vshrl.u32 %v220, 7
  %v222 = vsub.s32 1, %v221
  %v223 = vrot.slane %v73, %v222
  %v226 = vmul.f32 %v214, %v219
  %v227 = vmul.f32 %v213, %v223
  %228 = vrot.lane.b32.xlu0 %v181, 8
  %v229 = vpop.permute.xlu0 %228
  %230 = vrot.lane.b32.xlu0 %v183, 8
  %v231 = vpop.permute.xlu0 %230
  %vm232 = vcmp.lt.s32.totalorder %v191, 8
  %v233 = vsel %vm232, %v229, %v231
  %v234 = vsel %vm232, %v231, %v229
  %v236 = vlaneseq
  %v237 = vshrl.u32 %v236, 7
  %v238 = vsub.s32 0, %v237
  %v239 = vrot.slane %v75, %v238
  %v240 = vlaneseq
  %v241 = vshrl.u32 %v240, 7
  %v242 = vsub.s32 1, %v241
  %v243 = vrot.slane %v75, %v242
  %v246 = vmul.f32 %v234, %v239
  %v247 = vmul.f32 %v233, %v243
  %248 = vrot.lane.b32.xlu0 %v181, 1
  %v249 = vpop.permute.xlu0 %248
  %250 = vrot.lane.b32.xlu0 %v183, 1
  %v251 = vpop.permute.xlu0 %250
  %vm252 = vcmp.lt.s32.totalorder %v191, 1
  %v253 = vsel %vm252, %v249, %v251
  %v254 = vsel %vm252, %v251, %v249
  %v256 = vlaneseq
  %v257 = vshrl.u32 %v256, 7
  %v258 = vsub.s32 0, %v257
  %v259 = vrot.slane %v77, %v258
  %v260 = vlaneseq
  %v261 = vshrl.u32 %v260, 7
  %v262 = vsub.s32 1, %v261
  %v263 = vrot.slane %v77, %v262
  %v266 = vmul.f32 %v254, %v259
  %v267 = vmul.f32 %v253, %v263
  %v269 = vlaneseq
  %v270 = vshrl.u32 %v269, 7
  %v271 = vsub.s32 0, %v270
  %v272 = vrot.slane %v79, %v271
  %v273 = vlaneseq
  %v274 = vshrl.u32 %v273, 7
  %v275 = vsub.s32 1, %v274
  %v276 = vrot.slane %v79, %v275
  %v279 = vmul.f32 %v181, %v272
  %v280 = vmul.f32 %v183, %v276
  %281 = vrot.lane.b32.xlu0 %v181, 127
  %v282 = vpop.permute.xlu0 %281
  %283 = vrot.lane.b32.xlu0 %v183, 127
  %v284 = vpop.permute.xlu0 %283
  %vm285 = vcmp.lt.s32.totalorder %v191, 127
  %v286 = vsel %vm285, %v282, %v284
  %v287 = vsel %vm285, %v284, %v282
  %v289 = vlaneseq
  %v290 = vshrl.u32 %v289, 7
  %v291 = vsub.s32 0, %v290
  %v292 = vrot.slane %v81, %v291
  %v293 = vlaneseq
  %v294 = vshrl.u32 %v293, 7
  %v295 = vsub.s32 1, %v294
  %v296 = vrot.slane %v81, %v295
  %v299 = vmul.f32 %v286, %v292
  %v300 = vmul.f32 %v287, %v296
  %301 = vrot.lane.b32.xlu0 %v181, 120
  %v302 = vpop.permute.xlu0 %301
  %303 = vrot.lane.b32.xlu0 %v183, 120
  %v304 = vpop.permute.xlu0 %303
  %vm305 = vcmp.lt.s32.totalorder %v191, 120
  %v306 = vsel %vm305, %v302, %v304
  %v307 = vsel %vm305, %v304, %v302
  %v309 = vlaneseq
  %v310 = vshrl.u32 %v309, 7
  %v311 = vsub.s32 0, %v310
  %v312 = vrot.slane %v83, %v311
  %v313 = vlaneseq
  %v314 = vshrl.u32 %v313, 7
  %v315 = vsub.s32 1, %v314
  %v316 = vrot.slane %v83, %v315
  %v319 = vmul.f32 %v306, %v312
  %v320 = vmul.f32 %v307, %v316
  %321 = vrot.lane.b32.xlu0 %v181, 119
  %v322 = vpop.permute.xlu0 %321
  %323 = vrot.lane.b32.xlu0 %v183, 119
  %v324 = vpop.permute.xlu0 %323
  %vm325 = vcmp.lt.s32.totalorder %v191, 119
  %v326 = vsel %vm325, %v322, %v324
  %v327 = vsel %vm325, %v324, %v322
  %v329 = vlaneseq
  %v330 = vshrl.u32 %v329, 7
  %v331 = vsub.s32 0, %v330
  %v332 = vrot.slane %v85, %v331
  %v333 = vlaneseq
  %v334 = vshrl.u32 %v333, 7
  %v335 = vsub.s32 1, %v334
  %v336 = vrot.slane %v85, %v335
  %v339 = vmul.f32 %v326, %v332
  %v340 = vmul.f32 %v327, %v336
  %341 = vrot.lane.b32.xlu0 %v181, 118
  %v342 = vpop.permute.xlu0 %341
  %343 = vrot.lane.b32.xlu0 %v183, 118
  %v344 = vpop.permute.xlu0 %343
  %vm345 = vcmp.lt.s32.totalorder %v191, 118
  %v346 = vsel %vm345, %v342, %v344
  %v347 = vsel %vm345, %v344, %v342
  %v349 = vlaneseq
  %v350 = vshrl.u32 %v349, 7
  %v351 = vsub.s32 0, %v350
  %v352 = vrot.slane %v87, %v351
  %v353 = vlaneseq
  %v354 = vshrl.u32 %v353, 7
  %v355 = vsub.s32 1, %v354
  %v356 = vrot.slane %v87, %v355
  %v359 = vmul.f32 %v346, %v352
  %v360 = vmul.f32 %v347, %v356
  %v361 = vld [vmem:[%s7] sm:$0xff]
  %363 = vset.pattern.permute.xlu0 0
  %364 = vperm.xlu0 %363, %v361
  %v365 = vpop.permute.xlu0 %364
  %vm367 = vcmask 588800
  %v369 = vsel %vm367, %v185, 0
  %371 = vmatprep.subr.mxu0 0.0
  %372 = vmatpush1.msra.mxu0 0.0
  %373 = vmatprep.subr.mxu0 0.0
  %374 = vmatpush1.msra.mxu0 0.0
  %375 = vmatprep.subr.mxu0 0.0
  %376 = vmatpush1.msra.mxu0 0.0
  %377 = vmatprep.subr.mxu0 0.0
  %378 = vmatpush1.msra.mxu0 0.0
  %379 = vmatprep.subr.mxu0 0.0
  %380 = vmatpush1.msra.mxu0 0.0
  %381 = vmatprep.subr.mxu0 0.0
  %382 = vmatpush1.msra.mxu0 0.0
  %383 = vmatprep.subr.mxu0 0.0
  %384 = vmatpush1.msra.mxu0 0.0
  %385 = vmatprep.subr.mxu0 %v360
  %386 = vmatpush1.msra.mxu0 %v359
  %387 = vmatprep.subr.mxu0 %v340
  %388 = vmatpush1.msra.mxu0 %v339
  %389 = vmatprep.subr.mxu0 %v320
  %390 = vmatpush1.msra.mxu0 %v319
  %391 = vmatprep.subr.mxu0 %v300
  %392 = vmatpush1.msra.mxu0 %v299
  %393 = vmatprep.subr.mxu0 %v280
  %394 = vmatpush1.msra.mxu0 %v279
  %395 = vmatprep.subr.mxu0 %v267
  %396 = vmatpush1.msra.mxu0 %v266
  %397 = vmatprep.subr.mxu0 %v247
  %398 = vmatpush1.msra.mxu0 %v246
  %399 = vmatprep.subr.mxu0 %v227
  %400 = vmatpush1.msra.mxu0 %v226
  %401 = vmatprep.subr.mxu0 %v207
  %402 = vmatpush1.msra.mxu0 %v206
  %403 = vmatprep.subr.mxu0 0.0
  %404 = vmatpush2.msra.mxu0 0.0
  %405 = vmatprep.subr.mxu0 0.0
  %406 = vmatpush2.msra.mxu0 0.0
  %407 = vmatprep.subr.mxu0 0.0
  %408 = vmatpush2.msra.mxu0 0.0
  %409 = vmatprep.subr.mxu0 0.0
  %410 = vmatpush2.msra.mxu0 0.0
  %411 = vmatprep.subr.mxu0 0.0
  %412 = vmatpush2.msra.mxu0 0.0
  %413 = vmatprep.subr.mxu0 0.0
  %414 = vmatpush2.msra.mxu0 0.0
  %415 = vmatprep.subr.mxu0 0.0
  %416 = vmatpush2.msra.mxu0 0.0
  %417 = vmatprep.subr.mxu0 0.0
  %418 = vmatpush2.msra.mxu0 0.0
  %419 = vmatprep.subr.mxu0 0.0
  %420 = vmatpush2.msra.mxu0 0.0
  %421 = vmatprep.subr.mxu0 0.0
  %422 = vmatpush2.msra.mxu0 0.0
  %423 = vmatprep.subr.mxu0 0.0
  %424 = vmatpush2.msra.mxu0 0.0
  %425 = vmatprep.subr.mxu0 0.0
  %426 = vmatpush2.msra.mxu0 0.0
  %427 = vmatprep.subr.mxu0 0.0
  %428 = vmatpush2.msra.mxu0 0.0
  %429 = vmatprep.subr.mxu0 0.0
  %430 = vmatpush2.msra.mxu0 0.0
  %431 = vmatprep.subr.mxu0 0.0
  %432 = vmatpush2.msra.mxu0 0.0
  %433 = vmatprep.subr.mxu0 0.0
  %434 = vmatpush2.msra.mxu0 0.0
  %435 = vmatprep.mubr.f32.mxu0 0.0
  %436 = vmatmul.mubr.f32.gmra.mxu0 %v369
  %v437 = vpop.f32.mrf.mxu0
  %v438 = vadd.f32 %v365, %v437
  %v439 = vpop.f32.mrf.mxu0
  %v440 = vadd.f32 %v365, %v439
  %441 = vdwg.mxu0
  %v442 = vmax.f32 %v438, 0.0
  %v443 = vmax.f32 %v440, 0.0
  %v444 = vld [vmem:[%s8] sm:$0xff]
  %445 = vrot.lane.b32.xlu0 %v442, 10
  %v446 = vpop.permute.xlu0 %445
  %447 = vrot.lane.b32.xlu0 %v443, 10
  %v448 = vpop.permute.xlu0 %447
  %v449 = vsel %vm192, %v446, %v448
  %v450 = vsel %vm192, %v448, %v446
  %v451 = vmul.f32 %v450, %v199
  %v452 = vmul.f32 %v449, %v203
  %453 = vrot.lane.b32.xlu0 %v442, 9
  %v454 = vpop.permute.xlu0 %453
  %455 = vrot.lane.b32.xlu0 %v443, 9
  %v456 = vpop.permute.xlu0 %455
  %v457 = vsel %vm212, %v454, %v456
  %v458 = vsel %vm212, %v456, %v454
  %v459 = vmul.f32 %v458, %v219
  %v460 = vmul.f32 %v457, %v223
  %461 = vrot.lane.b32.xlu0 %v442, 8
  %v462 = vpop.permute.xlu0 %461
  %463 = vrot.lane.b32.xlu0 %v443, 8
  %v464 = vpop.permute.xlu0 %463
  %v465 = vsel %vm232, %v462, %v464
  %v466 = vsel %vm232, %v464, %v462
  %v467 = vmul.f32 %v466, %v239
  %v468 = vmul.f32 %v465, %v243
  %469 = vrot.lane.b32.xlu0 %v442, 1
  %v470 = vpop.permute.xlu0 %469
  %471 = vrot.lane.b32.xlu0 %v443, 1
  %v472 = vpop.permute.xlu0 %471
  %v473 = vsel %vm252, %v470, %v472
  %v474 = vsel %vm252, %v472, %v470
  %v475 = vmul.f32 %v474, %v259
  %v476 = vmul.f32 %v473, %v263
  %v477 = vmul.f32 %v442, %v272
  %v478 = vmul.f32 %v443, %v276
  %479 = vrot.lane.b32.xlu0 %v442, 127
  %v480 = vpop.permute.xlu0 %479
  %481 = vrot.lane.b32.xlu0 %v443, 127
  %v482 = vpop.permute.xlu0 %481
  %v483 = vsel %vm285, %v480, %v482
  %v484 = vsel %vm285, %v482, %v480
  %v485 = vmul.f32 %v483, %v292
  %v486 = vmul.f32 %v484, %v296
  %487 = vrot.lane.b32.xlu0 %v442, 120
  %v488 = vpop.permute.xlu0 %487
  %489 = vrot.lane.b32.xlu0 %v443, 120
  %v490 = vpop.permute.xlu0 %489
  %v491 = vsel %vm305, %v488, %v490
  %v492 = vsel %vm305, %v490, %v488
  %v493 = vmul.f32 %v491, %v312
  %v494 = vmul.f32 %v492, %v316
  %495 = vrot.lane.b32.xlu0 %v442, 119
  %v496 = vpop.permute.xlu0 %495
  %497 = vrot.lane.b32.xlu0 %v443, 119
  %v498 = vpop.permute.xlu0 %497
  %v499 = vsel %vm325, %v496, %v498
  %v500 = vsel %vm325, %v498, %v496
  %v501 = vmul.f32 %v499, %v332
  %v502 = vmul.f32 %v500, %v336
  %503 = vrot.lane.b32.xlu0 %v442, 118
  %v504 = vpop.permute.xlu0 %503
  %505 = vrot.lane.b32.xlu0 %v443, 118
  %v506 = vpop.permute.xlu0 %505
  %v507 = vsel %vm345, %v504, %v506
  %v508 = vsel %vm345, %v506, %v504
  %v509 = vmul.f32 %v507, %v352
  %v510 = vmul.f32 %v508, %v356
  %v511 = vld [vmem:[%s9] sm:$0xff]
  %513 = vset.pattern.permute.xlu0 0
  %514 = vperm.xlu0 %513, %v511
  %v515 = vpop.permute.xlu0 %514
  %v518 = vsel %vm367, %v444, 0
  %520 = vmatprep.subr.mxu0 0.0
  %521 = vmatpush1.msra.mxu0 0.0
  %522 = vmatprep.subr.mxu0 0.0
  %523 = vmatpush1.msra.mxu0 0.0
  %524 = vmatprep.subr.mxu0 0.0
  %525 = vmatpush1.msra.mxu0 0.0
  %526 = vmatprep.subr.mxu0 0.0
  %527 = vmatpush1.msra.mxu0 0.0
  %528 = vmatprep.subr.mxu0 0.0
  %529 = vmatpush1.msra.mxu0 0.0
  %530 = vmatprep.subr.mxu0 0.0
  %531 = vmatpush1.msra.mxu0 0.0
  %532 = vmatprep.subr.mxu0 0.0
  %533 = vmatpush1.msra.mxu0 0.0
  %534 = vmatprep.subr.mxu0 %v510
  %535 = vmatpush1.msra.mxu0 %v509
  %536 = vmatprep.subr.mxu0 %v502
  %537 = vmatpush1.msra.mxu0 %v501
  %538 = vmatprep.subr.mxu0 %v494
  %539 = vmatpush1.msra.mxu0 %v493
  %540 = vmatprep.subr.mxu0 %v486
  %541 = vmatpush1.msra.mxu0 %v485
  %542 = vmatprep.subr.mxu0 %v478
  %543 = vmatpush1.msra.mxu0 %v477
  %544 = vmatprep.subr.mxu0 %v476
  %545 = vmatpush1.msra.mxu0 %v475
  %546 = vmatprep.subr.mxu0 %v468
  %547 = vmatpush1.msra.mxu0 %v467
  %548 = vmatprep.subr.mxu0 %v460
  %549 = vmatpush1.msra.mxu0 %v459
  %550 = vmatprep.subr.mxu0 %v452
  %551 = vmatpush1.msra.mxu0 %v451
  %552 = vmatprep.subr.mxu0 0.0
  %553 = vmatpush2.msra.mxu0 0.0
  %554 = vmatprep.subr.mxu0 0.0
  %555 = vmatpush2.msra.mxu0 0.0
  %556 = vmatprep.subr.mxu0 0.0
  %557 = vmatpush2.msra.mxu0 0.0
  %558 = vmatprep.subr.mxu0 0.0
  %559 = vmatpush2.msra.mxu0 0.0
  %560 = vmatprep.subr.mxu0 0.0
  %561 = vmatpush2.msra.mxu0 0.0
  %562 = vmatprep.subr.mxu0 0.0
  %563 = vmatpush2.msra.mxu0 0.0
  %564 = vmatprep.subr.mxu0 0.0
  %565 = vmatpush2.msra.mxu0 0.0
  %566 = vmatprep.subr.mxu0 0.0
  %567 = vmatpush2.msra.mxu0 0.0
  %568 = vmatprep.subr.mxu0 0.0
  %569 = vmatpush2.msra.mxu0 0.0
  %570 = vmatprep.subr.mxu0 0.0
  %571 = vmatpush2.msra.mxu0 0.0
  %572 = vmatprep.subr.mxu0 0.0
  %573 = vmatpush2.msra.mxu0 0.0
  %574 = vmatprep.subr.mxu0 0.0
  %575 = vmatpush2.msra.mxu0 0.0
  %576 = vmatprep.subr.mxu0 0.0
  %577 = vmatpush2.msra.mxu0 0.0
  %578 = vmatprep.subr.mxu0 0.0
  %579 = vmatpush2.msra.mxu0 0.0
  %580 = vmatprep.subr.mxu0 0.0
  %581 = vmatpush2.msra.mxu0 0.0
  %582 = vmatprep.subr.mxu0 0.0
  %583 = vmatpush2.msra.mxu0 0.0
  %584 = vmatprep.mubr.f32.mxu0 0.0
  %585 = vmatmul.mubr.f32.gmra.mxu0 %v518
  %v586 = vpop.f32.mrf.mxu0
  %v587 = vadd.f32 %v515, %v586
  %v588 = vpop.f32.mrf.mxu0
  %v589 = vadd.f32 %v515, %v588
  %590 = vdwg.mxu0
  %v591 = vmax.f32 %v587, 0.0
  %v592 = vmax.f32 %v589, 0.0
  %v593 = vld [vmem:[%s4] sm:$0xf]
  %v594 = vld [vmem:[%s4 + $0x4] sm:$0xf]
  %v595 = vld [vmem:[%s4 + $0x8] sm:$0xf]
  %v596 = vld [vmem:[%s4 + $0xc] sm:$0xf]
  %v597 = vld [vmem:[%s4 + $0x10] sm:$0xf]
  %v598 = vld [vmem:[%s4 + $0x14] sm:$0xf]
  %v599 = vld [vmem:[%s4 + $0x18] sm:$0xf]
  %v600 = vld [vmem:[%s4 + $0x1c] sm:$0xf]
  %v601 = vld [vmem:[%s4 + $0x20] sm:$0xf]
  %v602 = vld [vmem:[%s4 + $0x24] sm:$0xf]
  %v603 = vld [vmem:[%s4 + $0x28] sm:$0xf]
  %v604 = vld [vmem:[%s4 + $0x2c] sm:$0xf]
  %v605 = vld [vmem:[%s4 + $0x30] sm:$0xf]
  %v606 = vld [vmem:[%s4 + $0x34] sm:$0xf]
  %v607 = vld [vmem:[%s4 + $0x38] sm:$0xf]
  %v608 = vld [vmem:[%s4 + $0x3c] sm:$0xf]
  %v609 = vld [vmem:[%s4 + $0x40] sm:$0xf]
  %v610 = vld [vmem:[%s4 + $0x44] sm:$0xf]
  %v611 = vld [vmem:[%s4 + $0x48] sm:$0xf]
  %v612 = vld [vmem:[%s4 + $0x4c] sm:$0xf]
  %v613 = vld [vmem:[%s4 + $0x50] sm:$0xf]
  %v614 = vld [vmem:[%s4 + $0x54] sm:$0xf]
  %v615 = vld [vmem:[%s4 + $0x58] sm:$0xf]
  %v616 = vld [vmem:[%s4 + $0x5c] sm:$0xf]
  %v617 = vld [vmem:[%s4 + $0x60] sm:$0xf]
  %v618 = vld [vmem:[%s4 + $0x64] sm:$0xf]
  %v619 = vld [vmem:[%s4 + $0x68] sm:$0xf]
  %v620 = vld [vmem:[%s4 + $0x6c] sm:$0xf]
  %v621 = vld [vmem:[%s4 + $0x70] sm:$0xf]
  %v622 = vld [vmem:[%s4 + $0x74] sm:$0xf]
  %v623 = vld [vmem:[%s4 + $0x78] sm:$0xf]
  %v624 = vld [vmem:[%s4 + $0x7c] sm:$0xf]
  %v625 = vunpack.c.l.bf16 %v593
  %v626 = vunpack.c.l.bf16 %v594
  %v627 = vunpack.c.l.bf16 %v595
  %v628 = vunpack.c.l.bf16 %v596
  %v629 = vunpack.c.l.bf16 %v597
  %v630 = vunpack.c.l.bf16 %v598
  %v631 = vunpack.c.l.bf16 %v599
  %v632 = vunpack.c.l.bf16 %v600
  %v633 = vunpack.c.l.bf16 %v601
  %v634 = vunpack.c.l.bf16 %v602
  %v635 = vunpack.c.l.bf16 %v603
  %v636 = vunpack.c.l.bf16 %v604
  %v637 = vunpack.c.l.bf16 %v605
  %v638 = vunpack.c.l.bf16 %v606
  %v639 = vunpack.c.l.bf16 %v607
  %v640 = vunpack.c.l.bf16 %v608
  %v641 = vunpack.c.l.bf16 %v609
  %v642 = vunpack.c.l.bf16 %v610
  %v643 = vunpack.c.l.bf16 %v611
  %v644 = vunpack.c.l.bf16 %v612
  %v645 = vunpack.c.l.bf16 %v613
  %v646 = vunpack.c.l.bf16 %v614
  %v647 = vunpack.c.l.bf16 %v615
  %v648 = vunpack.c.l.bf16 %v616
  %v649 = vunpack.c.l.bf16 %v617
  %v650 = vunpack.c.l.bf16 %v618
  %v651 = vunpack.c.l.bf16 %v619
  %v652 = vunpack.c.l.bf16 %v620
  %v653 = vunpack.c.l.bf16 %v621
  %v654 = vunpack.c.l.bf16 %v622
  %v655 = vunpack.c.l.bf16 %v623
  %v656 = vunpack.c.l.bf16 %v624
  %657 = vmatprep.subr.mxu0 0.0
  %658 = vmatpush1.msra.mxu0 %v640
  %659 = vmatprep.subr.mxu0 0.0
  %660 = vmatpush1.msra.mxu0 %v639
  %661 = vmatprep.subr.mxu0 0.0
  %662 = vmatpush1.msra.mxu0 %v638
  %663 = vmatprep.subr.mxu0 0.0
  %664 = vmatpush1.msra.mxu0 %v637
  %665 = vmatprep.subr.mxu0 0.0
  %666 = vmatpush1.msra.mxu0 %v636
  %667 = vmatprep.subr.mxu0 0.0
  %668 = vmatpush1.msra.mxu0 %v635
  %669 = vmatprep.subr.mxu0 0.0
  %670 = vmatpush1.msra.mxu0 %v634
  %671 = vmatprep.subr.mxu0 0.0
  %672 = vmatpush1.msra.mxu0 %v633
  %673 = vmatprep.subr.mxu0 0.0
  %674 = vmatpush1.msra.mxu0 %v632
  %675 = vmatprep.subr.mxu0 0.0
  %676 = vmatpush1.msra.mxu0 %v631
  %677 = vmatprep.subr.mxu0 0.0
  %678 = vmatpush1.msra.mxu0 %v630
  %679 = vmatprep.subr.mxu0 0.0
  %680 = vmatpush1.msra.mxu0 %v629
  %681 = vmatprep.subr.mxu0 0.0
  %682 = vmatpush1.msra.mxu0 %v628
  %683 = vmatprep.subr.mxu0 0.0
  %684 = vmatpush1.msra.mxu0 %v627
  %685 = vmatprep.subr.mxu0 0.0
  %686 = vmatpush1.msra.mxu0 %v626
  %687 = vmatprep.subr.mxu0 0.0
  %688 = vmatpush1.msra.mxu0 %v625
  %689 = vmatprep.subr.mxu0 0.0
  %690 = vmatpush2.msra.mxu0 %v656
  %691 = vmatprep.subr.mxu0 0.0
  %692 = vmatpush2.msra.mxu0 %v655
  %693 = vmatprep.subr.mxu0 0.0
  %694 = vmatpush2.msra.mxu0 %v654
  %695 = vmatprep.subr.mxu0 0.0
  %696 = vmatpush2.msra.mxu0 %v653
  %697 = vmatprep.subr.mxu0 0.0
  %698 = vmatpush2.msra.mxu0 %v652
  %699 = vmatprep.subr.mxu0 0.0
  %700 = vmatpush2.msra.mxu0 %v651
  %701 = vmatprep.subr.mxu0 0.0
  %702 = vmatpush2.msra.mxu0 %v650
  %703 = vmatprep.subr.mxu0 0.0
  %704 = vmatpush2.msra.mxu0 %v649
  %705 = vmatprep.subr.mxu0 0.0
  %706 = vmatpush2.msra.mxu0 %v648
  %707 = vmatprep.subr.mxu0 0.0
  %708 = vmatpush2.msra.mxu0 %v647
  %709 = vmatprep.subr.mxu0 0.0
  %710 = vmatpush2.msra.mxu0 %v646
  %711 = vmatprep.subr.mxu0 0.0
  %712 = vmatpush2.msra.mxu0 %v645
  %713 = vmatprep.subr.mxu0 0.0
  %714 = vmatpush2.msra.mxu0 %v644
  %715 = vmatprep.subr.mxu0 0.0
  %716 = vmatpush2.msra.mxu0 %v643
  %717 = vmatprep.subr.mxu0 0.0
  %718 = vmatpush2.msra.mxu0 %v642
  %719 = vmatprep.subr.mxu0 0.0
  %720 = vmatpush2.msra.mxu0 %v641
  %721 = vmatprep.mubr.f32.mxu0 %v592
  %722 = vmatmul.mubr.f32.gmra.mxu0 %v591
  %v723 = vpop.f32.mrf.mxu0
  %v724 = vadd.f32 0.0, %v723
  %v725 = vpop.f32.mrf.mxu0
  %726 = vdwg.mxu0
  %s727 = scalar_lea.vmem %s4, 128
  %v728 = vld [vmem:[%s727] sm:$0xf]
  %v729 = vld [vmem:[%s727 + $0x4] sm:$0xf]
  %v730 = vld [vmem:[%s727 + $0x8] sm:$0xf]
  %v731 = vld [vmem:[%s727 + $0xc] sm:$0xf]
  %v732 = vld [vmem:[%s727 + $0x10] sm:$0xf]
  %v733 = vld [vmem:[%s727 + $0x14] sm:$0xf]
  %v734 = vld [vmem:[%s727 + $0x18] sm:$0xf]
  %v735 = vld [vmem:[%s727 + $0x1c] sm:$0xf]
  %v736 = vld [vmem:[%s727 + $0x20] sm:$0xf]
  %v737 = vld [vmem:[%s727 + $0x24] sm:$0xf]
  %v738 = vld [vmem:[%s727 + $0x28] sm:$0xf]
  %v739 = vld [vmem:[%s727 + $0x2c] sm:$0xf]
  %v740 = vld [vmem:[%s727 + $0x30] sm:$0xf]
  %v741 = vld [vmem:[%s727 + $0x34] sm:$0xf]
  %v742 = vld [vmem:[%s727 + $0x38] sm:$0xf]
  %v743 = vld [vmem:[%s727 + $0x3c] sm:$0xf]
  %v744 = vld [vmem:[%s727 + $0x40] sm:$0xf]
  %v745 = vld [vmem:[%s727 + $0x44] sm:$0xf]
  %v746 = vld [vmem:[%s727 + $0x48] sm:$0xf]
  %v747 = vld [vmem:[%s727 + $0x4c] sm:$0xf]
  %v748 = vld [vmem:[%s727 + $0x50] sm:$0xf]
  %v749 = vld [vmem:[%s727 + $0x54] sm:$0xf]
  %v750 = vld [vmem:[%s727 + $0x58] sm:$0xf]
  %v751 = vld [vmem:[%s727 + $0x5c] sm:$0xf]
  %v752 = vld [vmem:[%s727 + $0x60] sm:$0xf]
  %v753 = vld [vmem:[%s727 + $0x64] sm:$0xf]
  %v754 = vld [vmem:[%s727 + $0x68] sm:$0xf]
  %v755 = vld [vmem:[%s727 + $0x6c] sm:$0xf]
  %v756 = vld [vmem:[%s727 + $0x70] sm:$0xf]
  %v757 = vld [vmem:[%s727 + $0x74] sm:$0xf]
  %v758 = vld [vmem:[%s727 + $0x78] sm:$0xf]
  %v759 = vld [vmem:[%s727 + $0x7c] sm:$0xf]
  %v760 = vunpack.c.l.bf16 %v728
  %v761 = vunpack.c.l.bf16 %v729
  %v762 = vunpack.c.l.bf16 %v730
  %v763 = vunpack.c.l.bf16 %v731
  %v764 = vunpack.c.l.bf16 %v732
  %v765 = vunpack.c.l.bf16 %v733
  %v766 = vunpack.c.l.bf16 %v734
  %v767 = vunpack.c.l.bf16 %v735
  %v768 = vunpack.c.l.bf16 %v736
  %v769 = vunpack.c.l.bf16 %v737
  %v770 = vunpack.c.l.bf16 %v738
  %v771 = vunpack.c.l.bf16 %v739
  %v772 = vunpack.c.l.bf16 %v740
  %v773 = vunpack.c.l.bf16 %v741
  %v774 = vunpack.c.l.bf16 %v742
  %v775 = vunpack.c.l.bf16 %v743
  %v776 = vunpack.c.l.bf16 %v744
  %v777 = vunpack.c.l.bf16 %v745
  %v778 = vunpack.c.l.bf16 %v746
  %v779 = vunpack.c.l.bf16 %v747
  %v780 = vunpack.c.l.bf16 %v748
  %v781 = vunpack.c.l.bf16 %v749
  %v782 = vunpack.c.l.bf16 %v750
  %v783 = vunpack.c.l.bf16 %v751
  %v784 = vunpack.c.l.bf16 %v752
  %v785 = vunpack.c.l.bf16 %v753
  %v786 = vunpack.c.l.bf16 %v754
  %v787 = vunpack.c.l.bf16 %v755
  %v788 = vunpack.c.l.bf16 %v756
  %v789 = vunpack.c.l.bf16 %v757
  %v790 = vunpack.c.l.bf16 %v758
  %v791 = vunpack.c.l.bf16 %v759
  %792 = vmatprep.subr.mxu0 0.0
  %793 = vmatpush1.msra.mxu0 %v775
  %794 = vmatprep.subr.mxu0 0.0
  %795 = vmatpush1.msra.mxu0 %v774
  %796 = vmatprep.subr.mxu0 0.0
  %797 = vmatpush1.msra.mxu0 %v773
  %798 = vmatprep.subr.mxu0 0.0
  %799 = vmatpush1.msra.mxu0 %v772
  %800 = vmatprep.subr.mxu0 0.0
  %801 = vmatpush1.msra.mxu0 %v771
  %802 = vmatprep.subr.mxu0 0.0
  %803 = vmatpush1.msra.mxu0 %v770
  %804 = vmatprep.subr.mxu0 0.0
  %805 = vmatpush1.msra.mxu0 %v769
  %806 = vmatprep.subr.mxu0 0.0
  %807 = vmatpush1.msra.mxu0 %v768
  %808 = vmatprep.subr.mxu0 0.0
  %809 = vmatpush1.msra.mxu0 %v767
  %810 = vmatprep.subr.mxu0 0.0
  %811 = vmatpush1.msra.mxu0 %v766
  %812 = vmatprep.subr.mxu0 0.0
  %813 = vmatpush1.msra.mxu0 %v765
  %814 = vmatprep.subr.mxu0 0.0
  %815 = vmatpush1.msra.mxu0 %v764
  %816 = vmatprep.subr.mxu0 0.0
  %817 = vmatpush1.msra.mxu0 %v763
  %818 = vmatprep.subr.mxu0 0.0
  %819 = vmatpush1.msra.mxu0 %v762
  %820 = vmatprep.subr.mxu0 0.0
  %821 = vmatpush1.msra.mxu0 %v761
  %822 = vmatprep.subr.mxu0 0.0
  %823 = vmatpush1.msra.mxu0 %v760
  %824 = vmatprep.subr.mxu0 0.0
  %825 = vmatpush2.msra.mxu0 %v791
  %826 = vmatprep.subr.mxu0 0.0
  %827 = vmatpush2.msra.mxu0 %v790
  %828 = vmatprep.subr.mxu0 0.0
  %829 = vmatpush2.msra.mxu0 %v789
  %830 = vmatprep.subr.mxu0 0.0
  %831 = vmatpush2.msra.mxu0 %v788
  %832 = vmatprep.subr.mxu0 0.0
  %833 = vmatpush2.msra.mxu0 %v787
  %834 = vmatprep.subr.mxu0 0.0
  %835 = vmatpush2.msra.mxu0 %v786
  %836 = vmatprep.subr.mxu0 0.0
  %837 = vmatpush2.msra.mxu0 %v785
  %838 = vmatprep.subr.mxu0 0.0
  %839 = vmatpush2.msra.mxu0 %v784
  %840 = vmatprep.subr.mxu0 0.0
  %841 = vmatpush2.msra.mxu0 %v783
  %842 = vmatprep.subr.mxu0 0.0
  %843 = vmatpush2.msra.mxu0 %v782
  %844 = vmatprep.subr.mxu0 0.0
  %845 = vmatpush2.msra.mxu0 %v781
  %846 = vmatprep.subr.mxu0 0.0
  %847 = vmatpush2.msra.mxu0 %v780
  %848 = vmatprep.subr.mxu0 0.0
  %849 = vmatpush2.msra.mxu0 %v779
  %850 = vmatprep.subr.mxu0 0.0
  %851 = vmatpush2.msra.mxu0 %v778
  %852 = vmatprep.subr.mxu0 0.0
  %853 = vmatpush2.msra.mxu0 %v777
  %854 = vmatprep.subr.mxu0 0.0
  %855 = vmatpush2.msra.mxu0 %v776
  %856 = vmatprep.mubr.f32.mxu0 %v592
  %857 = vmatmul.mubr.f32.gmra.mxu0 %v591
  %v858 = vpop.f32.mrf.mxu0
  %v859 = vadd.f32 0.0, %v858
  %v860 = vpop.f32.mrf.mxu0
  %861 = vdwg.mxu0
  %v862 = vmax.f32 %v724, %v859
  %s863 = scalar_lea.vmem %s4, 256
  %v864 = vld [vmem:[%s863] sm:$0xf]
  %v865 = vld [vmem:[%s863 + $0x4] sm:$0xf]
  %v866 = vld [vmem:[%s863 + $0x8] sm:$0xf]
  %v867 = vld [vmem:[%s863 + $0xc] sm:$0xf]
  %v868 = vld [vmem:[%s863 + $0x10] sm:$0xf]
  %v869 = vld [vmem:[%s863 + $0x14] sm:$0xf]
  %v870 = vld [vmem:[%s863 + $0x18] sm:$0xf]
  %v871 = vld [vmem:[%s863 + $0x1c] sm:$0xf]
  %v872 = vld [vmem:[%s863 + $0x20] sm:$0xf]
  %v873 = vld [vmem:[%s863 + $0x24] sm:$0xf]
  %v874 = vld [vmem:[%s863 + $0x28] sm:$0xf]
  %v875 = vld [vmem:[%s863 + $0x2c] sm:$0xf]
  %v876 = vld [vmem:[%s863 + $0x30] sm:$0xf]
  %v877 = vld [vmem:[%s863 + $0x34] sm:$0xf]
  %v878 = vld [vmem:[%s863 + $0x38] sm:$0xf]
  %v879 = vld [vmem:[%s863 + $0x3c] sm:$0xf]
  %v880 = vld [vmem:[%s863 + $0x40] sm:$0xf]
  %v881 = vld [vmem:[%s863 + $0x44] sm:$0xf]
  %v882 = vld [vmem:[%s863 + $0x48] sm:$0xf]
  %v883 = vld [vmem:[%s863 + $0x4c] sm:$0xf]
  %v884 = vld [vmem:[%s863 + $0x50] sm:$0xf]
  %v885 = vld [vmem:[%s863 + $0x54] sm:$0xf]
  %v886 = vld [vmem:[%s863 + $0x58] sm:$0xf]
  %v887 = vld [vmem:[%s863 + $0x5c] sm:$0xf]
  %v888 = vld [vmem:[%s863 + $0x60] sm:$0xf]
  %v889 = vld [vmem:[%s863 + $0x64] sm:$0xf]
  %v890 = vld [vmem:[%s863 + $0x68] sm:$0xf]
  %v891 = vld [vmem:[%s863 + $0x6c] sm:$0xf]
  %v892 = vld [vmem:[%s863 + $0x70] sm:$0xf]
  %v893 = vld [vmem:[%s863 + $0x74] sm:$0xf]
  %v894 = vld [vmem:[%s863 + $0x78] sm:$0xf]
  %v895 = vld [vmem:[%s863 + $0x7c] sm:$0xf]
  %v896 = vunpack.c.l.bf16 %v864
  %v897 = vunpack.c.l.bf16 %v865
  %v898 = vunpack.c.l.bf16 %v866
  %v899 = vunpack.c.l.bf16 %v867
  %v900 = vunpack.c.l.bf16 %v868
  %v901 = vunpack.c.l.bf16 %v869
  %v902 = vunpack.c.l.bf16 %v870
  %v903 = vunpack.c.l.bf16 %v871
  %v904 = vunpack.c.l.bf16 %v872
  %v905 = vunpack.c.l.bf16 %v873
  %v906 = vunpack.c.l.bf16 %v874
  %v907 = vunpack.c.l.bf16 %v875
  %v908 = vunpack.c.l.bf16 %v876
  %v909 = vunpack.c.l.bf16 %v877
  %v910 = vunpack.c.l.bf16 %v878
  %v911 = vunpack.c.l.bf16 %v879
  %v912 = vunpack.c.l.bf16 %v880
  %v913 = vunpack.c.l.bf16 %v881
  %v914 = vunpack.c.l.bf16 %v882
  %v915 = vunpack.c.l.bf16 %v883
  %v916 = vunpack.c.l.bf16 %v884
  %v917 = vunpack.c.l.bf16 %v885
  %v918 = vunpack.c.l.bf16 %v886
  %v919 = vunpack.c.l.bf16 %v887
  %v920 = vunpack.c.l.bf16 %v888
  %v921 = vunpack.c.l.bf16 %v889
  %v922 = vunpack.c.l.bf16 %v890
  %v923 = vunpack.c.l.bf16 %v891
  %v924 = vunpack.c.l.bf16 %v892
  %v925 = vunpack.c.l.bf16 %v893
  %v926 = vunpack.c.l.bf16 %v894
  %v927 = vunpack.c.l.bf16 %v895
  %928 = vmatprep.subr.mxu0 0.0
  %929 = vmatpush1.msra.mxu0 %v911
  %930 = vmatprep.subr.mxu0 0.0
  %931 = vmatpush1.msra.mxu0 %v910
  %932 = vmatprep.subr.mxu0 0.0
  %933 = vmatpush1.msra.mxu0 %v909
  %934 = vmatprep.subr.mxu0 0.0
  %935 = vmatpush1.msra.mxu0 %v908
  %936 = vmatprep.subr.mxu0 0.0
  %937 = vmatpush1.msra.mxu0 %v907
  %938 = vmatprep.subr.mxu0 0.0
  %939 = vmatpush1.msra.mxu0 %v906
  %940 = vmatprep.subr.mxu0 0.0
  %941 = vmatpush1.msra.mxu0 %v905
  %942 = vmatprep.subr.mxu0 0.0
  %943 = vmatpush1.msra.mxu0 %v904
  %944 = vmatprep.subr.mxu0 0.0
  %945 = vmatpush1.msra.mxu0 %v903
  %946 = vmatprep.subr.mxu0 0.0
  %947 = vmatpush1.msra.mxu0 %v902
  %948 = vmatprep.subr.mxu0 0.0
  %949 = vmatpush1.msra.mxu0 %v901
  %950 = vmatprep.subr.mxu0 0.0
  %951 = vmatpush1.msra.mxu0 %v900
  %952 = vmatprep.subr.mxu0 0.0
  %953 = vmatpush1.msra.mxu0 %v899
  %954 = vmatprep.subr.mxu0 0.0
  %955 = vmatpush1.msra.mxu0 %v898
  %956 = vmatprep.subr.mxu0 0.0
  %957 = vmatpush1.msra.mxu0 %v897
  %958 = vmatprep.subr.mxu0 0.0
  %959 = vmatpush1.msra.mxu0 %v896
  %960 = vmatprep.subr.mxu0 0.0
  %961 = vmatpush2.msra.mxu0 %v927
  %962 = vmatprep.subr.mxu0 0.0
  %963 = vmatpush2.msra.mxu0 %v926
  %964 = vmatprep.subr.mxu0 0.0
  %965 = vmatpush2.msra.mxu0 %v925
  %966 = vmatprep.subr.mxu0 0.0
  %967 = vmatpush2.msra.mxu0 %v924
  %968 = vmatprep.subr.mxu0 0.0
  %969 = vmatpush2.msra.mxu0 %v923
  %970 = vmatprep.subr.mxu0 0.0
  %971 = vmatpush2.msra.mxu0 %v922
  %972 = vmatprep.subr.mxu0 0.0
  %973 = vmatpush2.msra.mxu0 %v921
  %974 = vmatprep.subr.mxu0 0.0
  %975 = vmatpush2.msra.mxu0 %v920
  %976 = vmatprep.subr.mxu0 0.0
  %977 = vmatpush2.msra.mxu0 %v919
  %978 = vmatprep.subr.mxu0 0.0
  %979 = vmatpush2.msra.mxu0 %v918
  %980 = vmatprep.subr.mxu0 0.0
  %981 = vmatpush2.msra.mxu0 %v917
  %982 = vmatprep.subr.mxu0 0.0
  %983 = vmatpush2.msra.mxu0 %v916
  %984 = vmatprep.subr.mxu0 0.0
  %985 = vmatpush2.msra.mxu0 %v915
  %986 = vmatprep.subr.mxu0 0.0
  %987 = vmatpush2.msra.mxu0 %v914
  %988 = vmatprep.subr.mxu0 0.0
  %989 = vmatpush2.msra.mxu0 %v913
  %990 = vmatprep.subr.mxu0 0.0
  %991 = vmatpush2.msra.mxu0 %v912
  %992 = vmatprep.mubr.f32.mxu0 %v592
  %993 = vmatmul.mubr.f32.gmra.mxu0 %v591
  %v994 = vpop.f32.mrf.mxu0
  %v995 = vadd.f32 0.0, %v994
  %v996 = vpop.f32.mrf.mxu0
  %997 = vdwg.mxu0
  %v998 = vmax.f32 %v862, %v995
  %s999 = scalar_lea.vmem %s4, 384
  %v1000 = vld [vmem:[%s999] sm:$0xf]
  %v1001 = vld [vmem:[%s999 + $0x4] sm:$0xf]
  %v1002 = vld [vmem:[%s999 + $0x8] sm:$0xf]
  %v1003 = vld [vmem:[%s999 + $0xc] sm:$0xf]
  %v1004 = vld [vmem:[%s999 + $0x10] sm:$0xf]
  %v1005 = vld [vmem:[%s999 + $0x14] sm:$0xf]
  %v1006 = vld [vmem:[%s999 + $0x18] sm:$0xf]
  %v1007 = vld [vmem:[%s999 + $0x1c] sm:$0xf]
  %v1008 = vld [vmem:[%s999 + $0x20] sm:$0xf]
  %v1009 = vld [vmem:[%s999 + $0x24] sm:$0xf]
  %v1010 = vld [vmem:[%s999 + $0x28] sm:$0xf]
  %v1011 = vld [vmem:[%s999 + $0x2c] sm:$0xf]
  %v1012 = vld [vmem:[%s999 + $0x30] sm:$0xf]
  %v1013 = vld [vmem:[%s999 + $0x34] sm:$0xf]
  %v1014 = vld [vmem:[%s999 + $0x38] sm:$0xf]
  %v1015 = vld [vmem:[%s999 + $0x3c] sm:$0xf]
  %v1016 = vld [vmem:[%s999 + $0x40] sm:$0xf]
  %v1017 = vld [vmem:[%s999 + $0x44] sm:$0xf]
  %v1018 = vld [vmem:[%s999 + $0x48] sm:$0xf]
  %v1019 = vld [vmem:[%s999 + $0x4c] sm:$0xf]
  %v1020 = vld [vmem:[%s999 + $0x50] sm:$0xf]
  %v1021 = vld [vmem:[%s999 + $0x54] sm:$0xf]
  %v1022 = vld [vmem:[%s999 + $0x58] sm:$0xf]
  %v1023 = vld [vmem:[%s999 + $0x5c] sm:$0xf]
  %v1024 = vld [vmem:[%s999 + $0x60] sm:$0xf]
  %v1025 = vld [vmem:[%s999 + $0x64] sm:$0xf]
  %v1026 = vld [vmem:[%s999 + $0x68] sm:$0xf]
  %v1027 = vld [vmem:[%s999 + $0x6c] sm:$0xf]
  %v1028 = vld [vmem:[%s999 + $0x70] sm:$0xf]
  %v1029 = vld [vmem:[%s999 + $0x74] sm:$0xf]
  %v1030 = vld [vmem:[%s999 + $0x78] sm:$0xf]
  %v1031 = vld [vmem:[%s999 + $0x7c] sm:$0xf]
  %v1032 = vunpack.c.l.bf16 %v1000
  %v1033 = vunpack.c.l.bf16 %v1001
  %v1034 = vunpack.c.l.bf16 %v1002
  %v1035 = vunpack.c.l.bf16 %v1003
  %v1036 = vunpack.c.l.bf16 %v1004
  %v1037 = vunpack.c.l.bf16 %v1005
  %v1038 = vunpack.c.l.bf16 %v1006
  %v1039 = vunpack.c.l.bf16 %v1007
  %v1040 = vunpack.c.l.bf16 %v1008
  %v1041 = vunpack.c.l.bf16 %v1009
  %v1042 = vunpack.c.l.bf16 %v1010
  %v1043 = vunpack.c.l.bf16 %v1011
  %v1044 = vunpack.c.l.bf16 %v1012
  %v1045 = vunpack.c.l.bf16 %v1013
  %v1046 = vunpack.c.l.bf16 %v1014
  %v1047 = vunpack.c.l.bf16 %v1015
  %v1048 = vunpack.c.l.bf16 %v1016
  %v1049 = vunpack.c.l.bf16 %v1017
  %v1050 = vunpack.c.l.bf16 %v1018
  %v1051 = vunpack.c.l.bf16 %v1019
  %v1052 = vunpack.c.l.bf16 %v1020
  %v1053 = vunpack.c.l.bf16 %v1021
  %v1054 = vunpack.c.l.bf16 %v1022
  %v1055 = vunpack.c.l.bf16 %v1023
  %v1056 = vunpack.c.l.bf16 %v1024
  %v1057 = vunpack.c.l.bf16 %v1025
  %v1058 = vunpack.c.l.bf16 %v1026
  %v1059 = vunpack.c.l.bf16 %v1027
  %v1060 = vunpack.c.l.bf16 %v1028
  %v1061 = vunpack.c.l.bf16 %v1029
  %v1062 = vunpack.c.l.bf16 %v1030
  %v1063 = vunpack.c.l.bf16 %v1031
  %1064 = vmatprep.subr.mxu0 0.0
  %1065 = vmatpush1.msra.mxu0 %v1047
  %1066 = vmatprep.subr.mxu0 0.0
  %1067 = vmatpush1.msra.mxu0 %v1046
  %1068 = vmatprep.subr.mxu0 0.0
  %1069 = vmatpush1.msra.mxu0 %v1045
  %1070 = vmatprep.subr.mxu0 0.0
  %1071 = vmatpush1.msra.mxu0 %v1044
  %1072 = vmatprep.subr.mxu0 0.0
  %1073 = vmatpush1.msra.mxu0 %v1043
  %1074 = vmatprep.subr.mxu0 0.0
  %1075 = vmatpush1.msra.mxu0 %v1042
  %1076 = vmatprep.subr.mxu0 0.0
  %1077 = vmatpush1.msra.mxu0 %v1041
  %1078 = vmatprep.subr.mxu0 0.0
  %1079 = vmatpush1.msra.mxu0 %v1040
  %1080 = vmatprep.subr.mxu0 0.0
  %1081 = vmatpush1.msra.mxu0 %v1039
  %1082 = vmatprep.subr.mxu0 0.0
  %1083 = vmatpush1.msra.mxu0 %v1038
  %1084 = vmatprep.subr.mxu0 0.0
  %1085 = vmatpush1.msra.mxu0 %v1037
  %1086 = vmatprep.subr.mxu0 0.0
  %1087 = vmatpush1.msra.mxu0 %v1036
  %1088 = vmatprep.subr.mxu0 0.0
  %1089 = vmatpush1.msra.mxu0 %v1035
  %1090 = vmatprep.subr.mxu0 0.0
  %1091 = vmatpush1.msra.mxu0 %v1034
  %1092 = vmatprep.subr.mxu0 0.0
  %1093 = vmatpush1.msra.mxu0 %v1033
  %1094 = vmatprep.subr.mxu0 0.0
  %1095 = vmatpush1.msra.mxu0 %v1032
  %1096 = vmatprep.subr.mxu0 0.0
  %1097 = vmatpush2.msra.mxu0 %v1063
  %1098 = vmatprep.subr.mxu0 0.0
  %1099 = vmatpush2.msra.mxu0 %v1062
  %1100 = vmatprep.subr.mxu0 0.0
  %1101 = vmatpush2.msra.mxu0 %v1061
  %1102 = vmatprep.subr.mxu0 0.0
  %1103 = vmatpush2.msra.mxu0 %v1060
  %1104 = vmatprep.subr.mxu0 0.0
  %1105 = vmatpush2.msra.mxu0 %v1059
  %1106 = vmatprep.subr.mxu0 0.0
  %1107 = vmatpush2.msra.mxu0 %v1058
  %1108 = vmatprep.subr.mxu0 0.0
  %1109 = vmatpush2.msra.mxu0 %v1057
  %1110 = vmatprep.subr.mxu0 0.0
  %1111 = vmatpush2.msra.mxu0 %v1056
  %1112 = vmatprep.subr.mxu0 0.0
  %1113 = vmatpush2.msra.mxu0 %v1055
  %1114 = vmatprep.subr.mxu0 0.0
  %1115 = vmatpush2.msra.mxu0 %v1054
  %1116 = vmatprep.subr.mxu0 0.0
  %1117 = vmatpush2.msra.mxu0 %v1053
  %1118 = vmatprep.subr.mxu0 0.0
  %1119 = vmatpush2.msra.mxu0 %v1052
  %1120 = vmatprep.subr.mxu0 0.0
  %1121 = vmatpush2.msra.mxu0 %v1051
  %1122 = vmatprep.subr.mxu0 0.0
  %1123 = vmatpush2.msra.mxu0 %v1050
  %1124 = vmatprep.subr.mxu0 0.0
  %1125 = vmatpush2.msra.mxu0 %v1049
  %1126 = vmatprep.subr.mxu0 0.0
  %1127 = vmatpush2.msra.mxu0 %v1048
  %1128 = vmatprep.mubr.f32.mxu0 %v592
  %1129 = vmatmul.mubr.f32.gmra.mxu0 %v591
  %v1130 = vpop.f32.mrf.mxu0
  %v1131 = vadd.f32 0.0, %v1130
  %v1132 = vpop.f32.mrf.mxu0
  %1133 = vdwg.mxu0
  %v1134 = vmax.f32 %v998, %v1131
  %v1135 = vld [vmem:[%s10] sm:$0xff]
  %1136 = vrot.lane.b32.xlu0 %v1134, 6
  %v1137 = vpop.permute.xlu0 %1136
  %v1139 = vlaneseq
  %v1140 = vshrl.u32 %v1139, 7
  %v1141 = vsub.s32 0, %v1140
  %v1142 = vrot.slane %v88, %v1141
  %v1144 = vmul.f32 %v1137, %v1142
  %1145 = vrot.lane.b32.xlu0 %v1134, 5
  %v1146 = vpop.permute.xlu0 %1145
  %v1148 = vlaneseq
  %v1149 = vshrl.u32 %v1148, 7
  %v1150 = vsub.s32 0, %v1149
  %v1151 = vrot.slane %v90, %v1150
  %v1153 = vmul.f32 %v1146, %v1151
  %1154 = vrot.lane.b32.xlu0 %v1134, 4
  %v1155 = vpop.permute.xlu0 %1154
  %v1157 = vlaneseq
  %v1158 = vshrl.u32 %v1157, 7
  %v1159 = vsub.s32 0, %v1158
  %v1160 = vrot.slane %v92, %v1159
  %v1162 = vmul.f32 %v1155, %v1160
  %1163 = vrot.lane.b32.xlu0 %v1134, 1
  %v1164 = vpop.permute.xlu0 %1163
  %v1166 = vlaneseq
  %v1167 = vshrl.u32 %v1166, 7
  %v1168 = vsub.s32 0, %v1167
  %v1169 = vrot.slane %v94, %v1168
  %v1171 = vmul.f32 %v1164, %v1169
  %v1173 = vlaneseq
  %v1174 = vshrl.u32 %v1173, 7
  %v1175 = vsub.s32 0, %v1174
  %v1176 = vrot.slane %v96, %v1175
  %v1178 = vmul.f32 %v1134, %v1176
  %1179 = vrot.lane.b32.xlu0 %v1134, 127
  %v1180 = vpop.permute.xlu0 %1179
  %v1182 = vlaneseq
  %v1183 = vshrl.u32 %v1182, 7
  %v1184 = vsub.s32 0, %v1183
  %v1185 = vrot.slane %v98, %v1184
  %v1187 = vmul.f32 %v1180, %v1185
  %1188 = vrot.lane.b32.xlu0 %v1134, 124
  %v1189 = vpop.permute.xlu0 %1188
  %v1191 = vlaneseq
  %v1192 = vshrl.u32 %v1191, 7
  %v1193 = vsub.s32 0, %v1192
  %v1194 = vrot.slane %v100, %v1193
  %v1196 = vmul.f32 %v1189, %v1194
  %1197 = vrot.lane.b32.xlu0 %v1134, 123
  %v1198 = vpop.permute.xlu0 %1197
  %v1200 = vlaneseq
  %v1201 = vshrl.u32 %v1200, 7
  %v1202 = vsub.s32 0, %v1201
  %v1203 = vrot.slane %v102, %v1202
  %v1205 = vmul.f32 %v1198, %v1203
  %1206 = vrot.lane.b32.xlu0 %v1134, 122
  %v1207 = vpop.permute.xlu0 %1206
  %v1209 = vlaneseq
  %v1210 = vshrl.u32 %v1209, 7
  %v1211 = vsub.s32 0, %v1210
  %v1212 = vrot.slane %v104, %v1211
  %v1214 = vmul.f32 %v1207, %v1212
  %v1215 = vld [vmem:[%s11] sm:$0xff]
  %1217 = vset.pattern.permute.xlu0 0
  %1218 = vperm.xlu0 %1217, %v1215
  %v1219 = vpop.permute.xlu0 %1218
  %v1222 = vsel %vm367, %v1135, 0
  %1224 = vmatprep.subr.mxu0 0.0
  %1225 = vmatpush1.msra.mxu0 0.0
  %1226 = vmatprep.subr.mxu0 0.0
  %1227 = vmatpush1.msra.mxu0 0.0
  %1228 = vmatprep.subr.mxu0 0.0
  %1229 = vmatpush1.msra.mxu0 0.0
  %1230 = vmatprep.subr.mxu0 0.0
  %1231 = vmatpush1.msra.mxu0 0.0
  %1232 = vmatprep.subr.mxu0 0.0
  %1233 = vmatpush1.msra.mxu0 0.0
  %1234 = vmatprep.subr.mxu0 0.0
  %1235 = vmatpush1.msra.mxu0 0.0
  %1236 = vmatprep.subr.mxu0 0.0
  %1237 = vmatpush1.msra.mxu0 0.0
  %1238 = vmatprep.subr.mxu0 0.0
  %1239 = vmatpush1.msra.mxu0 %v1214
  %1240 = vmatprep.subr.mxu0 0.0
  %1241 = vmatpush1.msra.mxu0 %v1205
  %1242 = vmatprep.subr.mxu0 0.0
  %1243 = vmatpush1.msra.mxu0 %v1196
  %1244 = vmatprep.subr.mxu0 0.0
  %1245 = vmatpush1.msra.mxu0 %v1187
  %1246 = vmatprep.subr.mxu0 0.0
  %1247 = vmatpush1.msra.mxu0 %v1178
  %1248 = vmatprep.subr.mxu0 0.0
  %1249 = vmatpush1.msra.mxu0 %v1171
  %1250 = vmatprep.subr.mxu0 0.0
  %1251 = vmatpush1.msra.mxu0 %v1162
  %1252 = vmatprep.subr.mxu0 0.0
  %1253 = vmatpush1.msra.mxu0 %v1153
  %1254 = vmatprep.subr.mxu0 0.0
  %1255 = vmatpush1.msra.mxu0 %v1144
  %1256 = vmatprep.subr.mxu0 0.0
  %1257 = vmatpush2.msra.mxu0 0.0
  %1258 = vmatprep.subr.mxu0 0.0
  %1259 = vmatpush2.msra.mxu0 0.0
  %1260 = vmatprep.subr.mxu0 0.0
  %1261 = vmatpush2.msra.mxu0 0.0
  %1262 = vmatprep.subr.mxu0 0.0
  %1263 = vmatpush2.msra.mxu0 0.0
  %1264 = vmatprep.subr.mxu0 0.0
  %1265 = vmatpush2.msra.mxu0 0.0
  %1266 = vmatprep.subr.mxu0 0.0
  %1267 = vmatpush2.msra.mxu0 0.0
  %1268 = vmatprep.subr.mxu0 0.0
  %1269 = vmatpush2.msra.mxu0 0.0
  %1270 = vmatprep.subr.mxu0 0.0
  %1271 = vmatpush2.msra.mxu0 0.0
  %1272 = vmatprep.subr.mxu0 0.0
  %1273 = vmatpush2.msra.mxu0 0.0
  %1274 = vmatprep.subr.mxu0 0.0
  %1275 = vmatpush2.msra.mxu0 0.0
  %1276 = vmatprep.subr.mxu0 0.0
  %1277 = vmatpush2.msra.mxu0 0.0
  %1278 = vmatprep.subr.mxu0 0.0
  %1279 = vmatpush2.msra.mxu0 0.0
  %1280 = vmatprep.subr.mxu0 0.0
  %1281 = vmatpush2.msra.mxu0 0.0
  %1282 = vmatprep.subr.mxu0 0.0
  %1283 = vmatpush2.msra.mxu0 0.0
  %1284 = vmatprep.subr.mxu0 0.0
  %1285 = vmatpush2.msra.mxu0 0.0
  %1286 = vmatprep.subr.mxu0 0.0
  %1287 = vmatpush2.msra.mxu0 0.0
  %1288 = vmatprep.mubr.f32.mxu0 0.0
  %1289 = vmatmul.mubr.f32.gmra.mxu0 %v1222
  %v1290 = vpop.f32.mrf.mxu0
  %v1291 = vadd.f32 %v1219, %v1290
  %v1292 = vpop.f32.mrf.mxu0
  %1293 = vdwg.mxu0
  %v1294 = vmax.f32 %v1291, 0.0
  %v1295 = vld [vmem:[%s12] sm:$0xff]
  %1296 = vrot.lane.b32.xlu0 %v1294, 6
  %v1297 = vpop.permute.xlu0 %1296
  %v1298 = vmul.f32 %v1297, %v1142
  %1299 = vrot.lane.b32.xlu0 %v1294, 5
  %v1300 = vpop.permute.xlu0 %1299
  %v1301 = vmul.f32 %v1300, %v1151
  %1302 = vrot.lane.b32.xlu0 %v1294, 4
  %v1303 = vpop.permute.xlu0 %1302
  %v1304 = vmul.f32 %v1303, %v1160
  %1305 = vrot.lane.b32.xlu0 %v1294, 1
  %v1306 = vpop.permute.xlu0 %1305
  %v1307 = vmul.f32 %v1306, %v1169
  %v1308 = vmul.f32 %v1294, %v1176
  %1309 = vrot.lane.b32.xlu0 %v1294, 127
  %v1310 = vpop.permute.xlu0 %1309
  %v1311 = vmul.f32 %v1310, %v1185
  %1312 = vrot.lane.b32.xlu0 %v1294, 124
  %v1313 = vpop.permute.xlu0 %1312
  %v1314 = vmul.f32 %v1313, %v1194
  %1315 = vrot.lane.b32.xlu0 %v1294, 123
  %v1316 = vpop.permute.xlu0 %1315
  %v1317 = vmul.f32 %v1316, %v1203
  %1318 = vrot.lane.b32.xlu0 %v1294, 122
  %v1319 = vpop.permute.xlu0 %1318
  %v1320 = vmul.f32 %v1319, %v1212
  %v1321 = vld [vmem:[%s13] sm:$0xff]
  %1323 = vset.pattern.permute.xlu0 0
  %1324 = vperm.xlu0 %1323, %v1321
  %v1325 = vpop.permute.xlu0 %1324
  %v1328 = vsel %vm367, %v1295, 0
  %1330 = vmatprep.subr.mxu0 0.0
  %1331 = vmatpush1.msra.mxu0 0.0
  %1332 = vmatprep.subr.mxu0 0.0
  %1333 = vmatpush1.msra.mxu0 0.0
  %1334 = vmatprep.subr.mxu0 0.0
  %1335 = vmatpush1.msra.mxu0 0.0
  %1336 = vmatprep.subr.mxu0 0.0
  %1337 = vmatpush1.msra.mxu0 0.0
  %1338 = vmatprep.subr.mxu0 0.0
  %1339 = vmatpush1.msra.mxu0 0.0
  %1340 = vmatprep.subr.mxu0 0.0
  %1341 = vmatpush1.msra.mxu0 0.0
  %1342 = vmatprep.subr.mxu0 0.0
  %1343 = vmatpush1.msra.mxu0 0.0
  %1344 = vmatprep.subr.mxu0 0.0
  %1345 = vmatpush1.msra.mxu0 %v1320
  %1346 = vmatprep.subr.mxu0 0.0
  %1347 = vmatpush1.msra.mxu0 %v1317
  %1348 = vmatprep.subr.mxu0 0.0
  %1349 = vmatpush1.msra.mxu0 %v1314
  %1350 = vmatprep.subr.mxu0 0.0
  %1351 = vmatpush1.msra.mxu0 %v1311
  %1352 = vmatprep.subr.mxu0 0.0
  %1353 = vmatpush1.msra.mxu0 %v1308
  %1354 = vmatprep.subr.mxu0 0.0
  %1355 = vmatpush1.msra.mxu0 %v1307
  %1356 = vmatprep.subr.mxu0 0.0
  %1357 = vmatpush1.msra.mxu0 %v1304
  %1358 = vmatprep.subr.mxu0 0.0
  %1359 = vmatpush1.msra.mxu0 %v1301
  %1360 = vmatprep.subr.mxu0 0.0
  %1361 = vmatpush1.msra.mxu0 %v1298
  %1362 = vmatprep.subr.mxu0 0.0
  %1363 = vmatpush2.msra.mxu0 0.0
  %1364 = vmatprep.subr.mxu0 0.0
  %1365 = vmatpush2.msra.mxu0 0.0
  %1366 = vmatprep.subr.mxu0 0.0
  %1367 = vmatpush2.msra.mxu0 0.0
  %1368 = vmatprep.subr.mxu0 0.0
  %1369 = vmatpush2.msra.mxu0 0.0
  %1370 = vmatprep.subr.mxu0 0.0
  %1371 = vmatpush2.msra.mxu0 0.0
  %1372 = vmatprep.subr.mxu0 0.0
  %1373 = vmatpush2.msra.mxu0 0.0
  %1374 = vmatprep.subr.mxu0 0.0
  %1375 = vmatpush2.msra.mxu0 0.0
  %1376 = vmatprep.subr.mxu0 0.0
  %1377 = vmatpush2.msra.mxu0 0.0
  %1378 = vmatprep.subr.mxu0 0.0
  %1379 = vmatpush2.msra.mxu0 0.0
  %1380 = vmatprep.subr.mxu0 0.0
  %1381 = vmatpush2.msra.mxu0 0.0
  %1382 = vmatprep.subr.mxu0 0.0
  %1383 = vmatpush2.msra.mxu0 0.0
  %1384 = vmatprep.subr.mxu0 0.0
  %1385 = vmatpush2.msra.mxu0 0.0
  %1386 = vmatprep.subr.mxu0 0.0
  %1387 = vmatpush2.msra.mxu0 0.0
  %1388 = vmatprep.subr.mxu0 0.0
  %1389 = vmatpush2.msra.mxu0 0.0
  %1390 = vmatprep.subr.mxu0 0.0
  %1391 = vmatpush2.msra.mxu0 0.0
  %1392 = vmatprep.subr.mxu0 0.0
  %1393 = vmatpush2.msra.mxu0 0.0
  %1394 = vmatprep.mubr.f32.mxu0 0.0
  %1395 = vmatmul.mubr.f32.gmra.mxu0 %v1328
  %v1396 = vpop.f32.mrf.mxu0
  %v1397 = vadd.f32 %v1325, %v1396
  %v1398 = vpop.f32.mrf.mxu0
  %1399 = vdwg.mxu0
  %v1400 = vmax.f32 %v1397, 0.0
  %v1401 = vld [vmem:[%s14] sm:$0xff]
  %v1402 = vld [vmem:[%s14 + $0x8] sm:$0xff]
  %v1403 = vld [vmem:[%s14 + $0x10] sm:$0xff]
  %v1404 = vld [vmem:[%s14 + $0x18] sm:$0xff]
  %vm1405 = vcmask 64512
  %v1407 = vsel %vm1405, %v1401, 0
  %v1410 = vsel %vm1405, %v1402, 0
  %v1413 = vsel %vm1405, %v1403, 0
  %v1416 = vsel %vm1405, %v1404, 0
  %1418 = vmatprep.subr.mxu0 0.0
  %1419 = vmatpush1.msra.mxu0 0.0
  %1420 = vmatprep.subr.mxu0 0.0
  %1421 = vmatpush1.msra.mxu0 0.0
  %1422 = vmatprep.subr.mxu0 0.0
  %1423 = vmatpush1.msra.mxu0 0.0
  %1424 = vmatprep.subr.mxu0 0.0
  %1425 = vmatpush1.msra.mxu0 0.0
  %1426 = vmatprep.subr.mxu0 0.0
  %1427 = vmatpush1.msra.mxu0 0.0
  %1428 = vmatprep.subr.mxu0 0.0
  %1429 = vmatpush1.msra.mxu0 0.0
  %1430 = vmatprep.subr.mxu0 0.0
  %1431 = vmatpush1.msra.mxu0 0.0
  %1432 = vmatprep.subr.mxu0 0.0
  %1433 = vmatpush1.msra.mxu0 0.0
  %1434 = vmatprep.subr.mxu0 0.0
  %1435 = vmatpush1.msra.mxu0 0.0
  %1436 = vmatprep.subr.mxu0 0.0
  %1437 = vmatpush1.msra.mxu0 0.0
  %1438 = vmatprep.subr.mxu0 0.0
  %1439 = vmatpush1.msra.mxu0 0.0
  %1440 = vmatprep.subr.mxu0 0.0
  %1441 = vmatpush1.msra.mxu0 0.0
  %1442 = vmatprep.subr.mxu0 0.0
  %1443 = vmatpush1.msra.mxu0 0.0
  %1444 = vmatprep.subr.mxu0 0.0
  %1445 = vmatpush1.msra.mxu0 0.0
  %1446 = vmatprep.subr.mxu0 0.0
  %1447 = vmatpush1.msra.mxu0 0.0
  %1448 = vmatprep.subr.mxu0 0.0
  %1449 = vmatpush1.msra.mxu0 %v1400
  %1450 = vmatprep.subr.mxu0 0.0
  %1451 = vmatpush2.msra.mxu0 0.0
  %1452 = vmatprep.subr.mxu0 0.0
  %1453 = vmatpush2.msra.mxu0 0.0
  %1454 = vmatprep.subr.mxu0 0.0
  %1455 = vmatpush2.msra.mxu0 0.0
  %1456 = vmatprep.subr.mxu0 0.0
  %1457 = vmatpush2.msra.mxu0 0.0
  %1458 = vmatprep.subr.mxu0 0.0
  %1459 = vmatpush2.msra.mxu0 0.0
  %1460 = vmatprep.subr.mxu0 0.0
  %1461 = vmatpush2.msra.mxu0 0.0
  %1462 = vmatprep.subr.mxu0 0.0
  %1463 = vmatpush2.msra.mxu0 0.0
  %1464 = vmatprep.subr.mxu0 0.0
  %1465 = vmatpush2.msra.mxu0 0.0
  %1466 = vmatprep.subr.mxu0 0.0
  %1467 = vmatpush2.msra.mxu0 0.0
  %1468 = vmatprep.subr.mxu0 0.0
  %1469 = vmatpush2.msra.mxu0 0.0
  %1470 = vmatprep.subr.mxu0 0.0
  %1471 = vmatpush2.msra.mxu0 0.0
  %1472 = vmatprep.subr.mxu0 0.0
  %1473 = vmatpush2.msra.mxu0 0.0
  %1474 = vmatprep.subr.mxu0 0.0
  %1475 = vmatpush2.msra.mxu0 0.0
  %1476 = vmatprep.subr.mxu0 0.0
  %1477 = vmatpush2.msra.mxu0 0.0
  %1478 = vmatprep.subr.mxu0 0.0
  %1479 = vmatpush2.msra.mxu0 0.0
  %1480 = vmatprep.subr.mxu0 0.0
  %1481 = vmatpush2.msra.mxu0 0.0
  %1482 = vmatprep.mubr.f32.mxu0 0.0
  %1483 = vmatmul.mubr.f32.gmra.mxu0 %v1407
  %v1484 = vpop.f32.mrf.mxu0
  %v1485 = vadd.f32 0.0, %v1484
  %v1486 = vpop.f32.mrf.mxu0
  %1487 = vmatprep.mubr.f32.mxu0 0.0
  %1488 = vmatmul.mubr.f32.gmra.mxu0 %v1410
  %v1489 = vpop.f32.mrf.mxu0
  %v1490 = vadd.f32 0.0, %v1489
  %v1491 = vpop.f32.mrf.mxu0
  %1492 = vmatprep.mubr.f32.mxu0 0.0
  %1493 = vmatmul.mubr.f32.gmra.mxu0 %v1413
  %v1494 = vpop.f32.mrf.mxu0
  %v1495 = vadd.f32 0.0, %v1494
  %v1496 = vpop.f32.mrf.mxu0
  %1497 = vmatprep.mubr.f32.mxu0 0.0
  %1498 = vmatmul.mubr.f32.gmra.mxu0 %v1416
  %v1499 = vpop.f32.mrf.mxu0
  %v1500 = vadd.f32 0.0, %v1499
  %v1501 = vpop.f32.mrf.mxu0
  %1502 = vdwg.mxu0
  %v1503 = vld [vmem:[%s5] sm:$0xff]
  %v1504 = vld [vmem:[%s5 + $0x8] sm:$0xff]
  %v1505 = vld [vmem:[%s5 + $0x10] sm:$0xff]
  %v1506 = vld [vmem:[%s5 + $0x18] sm:$0xff]
  %v1507 = vld [vmem:[%s5 + $0x20] sm:$0xff]
  %v1508 = vld [vmem:[%s5 + $0x28] sm:$0xff]
  %v1509 = vld [vmem:[%s5 + $0x30] sm:$0xff]
  %v1510 = vld [vmem:[%s5 + $0x38] sm:$0xff]
  %v1511 = vld [vmem:[%s5 + $0x40] sm:$0xff]
  %v1512 = vld [vmem:[%s5 + $0x48] sm:$0xff]
  %v1513 = vld [vmem:[%s5 + $0x50] sm:$0xff]
  %v1514 = vld [vmem:[%s5 + $0x58] sm:$0xff]
  %v1515 = vld [vmem:[%s5 + $0x60] sm:$0xff]
  %v1516 = vld [vmem:[%s5 + $0x68] sm:$0xff]
  %v1517 = vld [vmem:[%s5 + $0x70] sm:$0xff]
  %v1518 = vld [vmem:[%s5 + $0x78] sm:$0xff]
  %v1519 = vunpack.c.l.bf16 %v1503
  %v1520 = vunpack.c.h.bf16 %v1503
  %v1521 = vunpack.c.l.bf16 %v1504
  %v1522 = vunpack.c.h.bf16 %v1504
  %v1523 = vunpack.c.l.bf16 %v1505
  %v1524 = vunpack.c.h.bf16 %v1505
  %v1525 = vunpack.c.l.bf16 %v1506
  %v1526 = vunpack.c.h.bf16 %v1506
  %v1527 = vunpack.c.l.bf16 %v1507
  %v1528 = vunpack.c.h.bf16 %v1507
  %v1529 = vunpack.c.l.bf16 %v1508
  %v1530 = vunpack.c.h.bf16 %v1508
  %v1531 = vunpack.c.l.bf16 %v1509
  %v1532 = vunpack.c.h.bf16 %v1509
  %v1533 = vunpack.c.l.bf16 %v1510
  %v1534 = vunpack.c.h.bf16 %v1510
  %v1535 = vunpack.c.l.bf16 %v1511
  %v1536 = vunpack.c.h.bf16 %v1511
  %v1537 = vunpack.c.l.bf16 %v1512
  %v1538 = vunpack.c.h.bf16 %v1512
  %v1539 = vunpack.c.l.bf16 %v1513
  %v1540 = vunpack.c.h.bf16 %v1513
  %v1541 = vunpack.c.l.bf16 %v1514
  %v1542 = vunpack.c.h.bf16 %v1514
  %v1543 = vunpack.c.l.bf16 %v1515
  %v1544 = vunpack.c.h.bf16 %v1515
  %v1545 = vunpack.c.l.bf16 %v1516
  %v1546 = vunpack.c.h.bf16 %v1516
  %v1547 = vunpack.c.l.bf16 %v1517
  %v1548 = vunpack.c.h.bf16 %v1517
  %v1549 = vunpack.c.l.bf16 %v1518
  %v1550 = vunpack.c.h.bf16 %v1518
  %s1551 = scalar_lea.vmem %s5, 128
  %v1552 = vld [vmem:[%s1551] sm:$0xff]
  %v1553 = vld [vmem:[%s1551 + $0x8] sm:$0xff]
  %v1554 = vld [vmem:[%s1551 + $0x10] sm:$0xff]
  %v1555 = vld [vmem:[%s1551 + $0x18] sm:$0xff]
  %v1556 = vld [vmem:[%s1551 + $0x20] sm:$0xff]
  %v1557 = vld [vmem:[%s1551 + $0x28] sm:$0xff]
  %v1558 = vld [vmem:[%s1551 + $0x30] sm:$0xff]
  %v1559 = vld [vmem:[%s1551 + $0x38] sm:$0xff]
  %v1560 = vld [vmem:[%s1551 + $0x40] sm:$0xff]
  %v1561 = vld [vmem:[%s1551 + $0x48] sm:$0xff]
  %v1562 = vld [vmem:[%s1551 + $0x50] sm:$0xff]
  %v1563 = vld [vmem:[%s1551 + $0x58] sm:$0xff]
  %v1564 = vld [vmem:[%s1551 + $0x60] sm:$0xff]
  %v1565 = vld [vmem:[%s1551 + $0x68] sm:$0xff]
  %v1566 = vld [vmem:[%s1551 + $0x70] sm:$0xff]
  %v1567 = vld [vmem:[%s1551 + $0x78] sm:$0xff]
  %v1568 = vunpack.c.l.bf16 %v1552
  %v1569 = vunpack.c.h.bf16 %v1552
  %v1570 = vunpack.c.l.bf16 %v1553
  %v1571 = vunpack.c.h.bf16 %v1553
  %v1572 = vunpack.c.l.bf16 %v1554
  %v1573 = vunpack.c.h.bf16 %v1554
  %v1574 = vunpack.c.l.bf16 %v1555
  %v1575 = vunpack.c.h.bf16 %v1555
  %v1576 = vunpack.c.l.bf16 %v1556
  %v1577 = vunpack.c.h.bf16 %v1556
  %v1578 = vunpack.c.l.bf16 %v1557
  %v1579 = vunpack.c.h.bf16 %v1557
  %v1580 = vunpack.c.l.bf16 %v1558
  %v1581 = vunpack.c.h.bf16 %v1558
  %v1582 = vunpack.c.l.bf16 %v1559
  %v1583 = vunpack.c.h.bf16 %v1559
  %v1584 = vunpack.c.l.bf16 %v1560
  %v1585 = vunpack.c.h.bf16 %v1560
  %v1586 = vunpack.c.l.bf16 %v1561
  %v1587 = vunpack.c.h.bf16 %v1561
  %v1588 = vunpack.c.l.bf16 %v1562
  %v1589 = vunpack.c.h.bf16 %v1562
  %v1590 = vunpack.c.l.bf16 %v1563
  %v1591 = vunpack.c.h.bf16 %v1563
  %v1592 = vunpack.c.l.bf16 %v1564
  %v1593 = vunpack.c.h.bf16 %v1564
  %v1594 = vunpack.c.l.bf16 %v1565
  %v1595 = vunpack.c.h.bf16 %v1565
  %v1596 = vunpack.c.l.bf16 %v1566
  %v1597 = vunpack.c.h.bf16 %v1566
  %v1598 = vunpack.c.l.bf16 %v1567
  %v1599 = vunpack.c.h.bf16 %v1567
  %1600 = vmatprep.subr.mxu0 %v1599
  %1601 = vmatpush1.msra.mxu0 %v1598
  %1602 = vmatprep.subr.mxu0 %v1597
  %1603 = vmatpush1.msra.mxu0 %v1596
  %1604 = vmatprep.subr.mxu0 %v1595
  %1605 = vmatpush1.msra.mxu0 %v1594
  %1606 = vmatprep.subr.mxu0 %v1593
  %1607 = vmatpush1.msra.mxu0 %v1592
  %1608 = vmatprep.subr.mxu0 %v1591
  %1609 = vmatpush1.msra.mxu0 %v1590
  %1610 = vmatprep.subr.mxu0 %v1589
  %1611 = vmatpush1.msra.mxu0 %v1588
  %1612 = vmatprep.subr.mxu0 %v1587
  %1613 = vmatpush1.msra.mxu0 %v1586
  %1614 = vmatprep.subr.mxu0 %v1585
  %1615 = vmatpush1.msra.mxu0 %v1584
  %1616 = vmatprep.subr.mxu0 %v1583
  %1617 = vmatpush1.msra.mxu0 %v1582
  %1618 = vmatprep.subr.mxu0 %v1581
  %1619 = vmatpush1.msra.mxu0 %v1580
  %1620 = vmatprep.subr.mxu0 %v1579
  %1621 = vmatpush1.msra.mxu0 %v1578
  %1622 = vmatprep.subr.mxu0 %v1577
  %1623 = vmatpush1.msra.mxu0 %v1576
  %1624 = vmatprep.subr.mxu0 %v1575
  %1625 = vmatpush1.msra.mxu0 %v1574
  %1626 = vmatprep.subr.mxu0 %v1573
  %1627 = vmatpush1.msra.mxu0 %v1572
  %1628 = vmatprep.subr.mxu0 %v1571
  %1629 = vmatpush1.msra.mxu0 %v1570
  %1630 = vmatprep.subr.mxu0 %v1569
  %1631 = vmatpush1.msra.mxu0 %v1568
  %1632 = vmatprep.subr.mxu0 0.0
  %1633 = vmatpush2.msra.mxu0 0.0
  %1634 = vmatprep.subr.mxu0 0.0
  %1635 = vmatpush2.msra.mxu0 0.0
  %1636 = vmatprep.subr.mxu0 0.0
  %1637 = vmatpush2.msra.mxu0 0.0
  %1638 = vmatprep.subr.mxu0 0.0
  %1639 = vmatpush2.msra.mxu0 0.0
  %1640 = vmatprep.subr.mxu0 0.0
  %1641 = vmatpush2.msra.mxu0 0.0
  %1642 = vmatprep.subr.mxu0 0.0
  %1643 = vmatpush2.msra.mxu0 0.0
  %1644 = vmatprep.subr.mxu0 0.0
  %1645 = vmatpush2.msra.mxu0 0.0
  %1646 = vmatprep.subr.mxu0 0.0
  %1647 = vmatpush2.msra.mxu0 0.0
  %1648 = vmatprep.subr.mxu0 0.0
  %1649 = vmatpush2.msra.mxu0 0.0
  %1650 = vmatprep.subr.mxu0 0.0
  %1651 = vmatpush2.msra.mxu0 0.0
  %1652 = vmatprep.subr.mxu0 0.0
  %1653 = vmatpush2.msra.mxu0 0.0
  %1654 = vmatprep.subr.mxu0 0.0
  %1655 = vmatpush2.msra.mxu0 0.0
  %1656 = vmatprep.subr.mxu0 0.0
  %1657 = vmatpush2.msra.mxu0 0.0
  %1658 = vmatprep.subr.mxu0 0.0
  %1659 = vmatpush2.msra.mxu0 0.0
  %1660 = vmatprep.subr.mxu0 0.0
  %1661 = vmatpush2.msra.mxu0 0.0
  %1662 = vmatprep.subr.mxu0 0.0
  %1663 = vmatpush2.msra.mxu0 0.0
  %1664 = vmatprep.mubr.f32.mxu0 0.0
  %1665 = vmatmul.mubr.f32.gmra.mxu0 %v1490
  %v1666 = vpop.f32.mrf.mxu0
  %v1667 = vadd.f32 0.0, %v1666
  %v1668 = vpop.f32.mrf.mxu0
  %v1669 = vadd.f32 0.0, %v1668
  %1670 = vdwg.mxu0
  %1671 = vmatprep.subr.mxu0 %v1550
  %1672 = vmatpush1.msra.mxu0 %v1549
  %1673 = vmatprep.subr.mxu0 %v1548
  %1674 = vmatpush1.msra.mxu0 %v1547
  %1675 = vmatprep.subr.mxu0 %v1546
  %1676 = vmatpush1.msra.mxu0 %v1545
  %1677 = vmatprep.subr.mxu0 %v1544
  %1678 = vmatpush1.msra.mxu0 %v1543
  %1679 = vmatprep.subr.mxu0 %v1542
  %1680 = vmatpush1.msra.mxu0 %v1541
  %1681 = vmatprep.subr.mxu0 %v1540
  %1682 = vmatpush1.msra.mxu0 %v1539
  %1683 = vmatprep.subr.mxu0 %v1538
  %1684 = vmatpush1.msra.mxu0 %v1537
  %1685 = vmatprep.subr.mxu0 %v1536
  %1686 = vmatpush1.msra.mxu0 %v1535
  %1687 = vmatprep.subr.mxu0 %v1534
  %1688 = vmatpush1.msra.mxu0 %v1533
  %1689 = vmatprep.subr.mxu0 %v1532
  %1690 = vmatpush1.msra.mxu0 %v1531
  %1691 = vmatprep.subr.mxu0 %v1530
  %1692 = vmatpush1.msra.mxu0 %v1529
  %1693 = vmatprep.subr.mxu0 %v1528
  %1694 = vmatpush1.msra.mxu0 %v1527
  %1695 = vmatprep.subr.mxu0 %v1526
  %1696 = vmatpush1.msra.mxu0 %v1525
  %1697 = vmatprep.subr.mxu0 %v1524
  %1698 = vmatpush1.msra.mxu0 %v1523
  %1699 = vmatprep.subr.mxu0 %v1522
  %1700 = vmatpush1.msra.mxu0 %v1521
  %1701 = vmatprep.subr.mxu0 %v1520
  %1702 = vmatpush1.msra.mxu0 %v1519
  %1703 = vmatprep.subr.mxu0 0.0
  %1704 = vmatpush2.msra.mxu0 0.0
  %1705 = vmatprep.subr.mxu0 0.0
  %1706 = vmatpush2.msra.mxu0 0.0
  %1707 = vmatprep.subr.mxu0 0.0
  %1708 = vmatpush2.msra.mxu0 0.0
  %1709 = vmatprep.subr.mxu0 0.0
  %1710 = vmatpush2.msra.mxu0 0.0
  %1711 = vmatprep.subr.mxu0 0.0
  %1712 = vmatpush2.msra.mxu0 0.0
  %1713 = vmatprep.subr.mxu0 0.0
  %1714 = vmatpush2.msra.mxu0 0.0
  %1715 = vmatprep.subr.mxu0 0.0
  %1716 = vmatpush2.msra.mxu0 0.0
  %1717 = vmatprep.subr.mxu0 0.0
  %1718 = vmatpush2.msra.mxu0 0.0
  %1719 = vmatprep.subr.mxu0 0.0
  %1720 = vmatpush2.msra.mxu0 0.0
  %1721 = vmatprep.subr.mxu0 0.0
  %1722 = vmatpush2.msra.mxu0 0.0
  %1723 = vmatprep.subr.mxu0 0.0
  %1724 = vmatpush2.msra.mxu0 0.0
  %1725 = vmatprep.subr.mxu0 0.0
  %1726 = vmatpush2.msra.mxu0 0.0
  %1727 = vmatprep.subr.mxu0 0.0
  %1728 = vmatpush2.msra.mxu0 0.0
  %1729 = vmatprep.subr.mxu0 0.0
  %1730 = vmatpush2.msra.mxu0 0.0
  %1731 = vmatprep.subr.mxu0 0.0
  %1732 = vmatpush2.msra.mxu0 0.0
  %1733 = vmatprep.subr.mxu0 0.0
  %1734 = vmatpush2.msra.mxu0 0.0
  %1735 = vmatprep.mubr.f32.mxu0 0.0
  %1736 = vmatmul.mubr.f32.gmra.mxu0 %v1485
  %v1737 = vpop.f32.mrf.mxu0
  %v1738 = vadd.f32 %v1667, %v1737
  %v1739 = vpop.f32.mrf.mxu0
  %v1740 = vadd.f32 %v1669, %v1739
  %1741 = vdwg.mxu0
  %s1742 = scalar_lea.vmem %s5, 256
  %v1743 = vld [vmem:[%s1742] sm:$0xff]
  %v1744 = vld [vmem:[%s1742 + $0x8] sm:$0xff]
  %v1745 = vld [vmem:[%s1742 + $0x10] sm:$0xff]
  %v1746 = vld [vmem:[%s1742 + $0x18] sm:$0xff]
  %v1747 = vld [vmem:[%s1742 + $0x20] sm:$0xff]
  %v1748 = vld [vmem:[%s1742 + $0x28] sm:$0xff]
  %v1749 = vld [vmem:[%s1742 + $0x30] sm:$0xff]
  %v1750 = vld [vmem:[%s1742 + $0x38] sm:$0xff]
  %v1751 = vld [vmem:[%s1742 + $0x40] sm:$0xff]
  %v1752 = vld [vmem:[%s1742 + $0x48] sm:$0xff]
  %v1753 = vld [vmem:[%s1742 + $0x50] sm:$0xff]
  %v1754 = vld [vmem:[%s1742 + $0x58] sm:$0xff]
  %v1755 = vld [vmem:[%s1742 + $0x60] sm:$0xff]
  %v1756 = vld [vmem:[%s1742 + $0x68] sm:$0xff]
  %v1757 = vld [vmem:[%s1742 + $0x70] sm:$0xff]
  %v1758 = vld [vmem:[%s1742 + $0x78] sm:$0xff]
  %v1759 = vunpack.c.l.bf16 %v1743
  %v1760 = vunpack.c.h.bf16 %v1743
  %v1761 = vunpack.c.l.bf16 %v1744
  %v1762 = vunpack.c.h.bf16 %v1744
  %v1763 = vunpack.c.l.bf16 %v1745
  %v1764 = vunpack.c.h.bf16 %v1745
  %v1765 = vunpack.c.l.bf16 %v1746
  %v1766 = vunpack.c.h.bf16 %v1746
  %v1767 = vunpack.c.l.bf16 %v1747
  %v1768 = vunpack.c.h.bf16 %v1747
  %v1769 = vunpack.c.l.bf16 %v1748
  %v1770 = vunpack.c.h.bf16 %v1748
  %v1771 = vunpack.c.l.bf16 %v1749
  %v1772 = vunpack.c.h.bf16 %v1749
  %v1773 = vunpack.c.l.bf16 %v1750
  %v1774 = vunpack.c.h.bf16 %v1750
  %v1775 = vunpack.c.l.bf16 %v1751
  %v1776 = vunpack.c.h.bf16 %v1751
  %v1777 = vunpack.c.l.bf16 %v1752
  %v1778 = vunpack.c.h.bf16 %v1752
  %v1779 = vunpack.c.l.bf16 %v1753
  %v1780 = vunpack.c.h.bf16 %v1753
  %v1781 = vunpack.c.l.bf16 %v1754
  %v1782 = vunpack.c.h.bf16 %v1754
  %v1783 = vunpack.c.l.bf16 %v1755
  %v1784 = vunpack.c.h.bf16 %v1755
  %v1785 = vunpack.c.l.bf16 %v1756
  %v1786 = vunpack.c.h.bf16 %v1756
  %v1787 = vunpack.c.l.bf16 %v1757
  %v1788 = vunpack.c.h.bf16 %v1757
  %v1789 = vunpack.c.l.bf16 %v1758
  %v1790 = vunpack.c.h.bf16 %v1758
  %1791 = vmatprep.subr.mxu0 %v1790
  %1792 = vmatpush1.msra.mxu0 %v1789
  %1793 = vmatprep.subr.mxu0 %v1788
  %1794 = vmatpush1.msra.mxu0 %v1787
  %1795 = vmatprep.subr.mxu0 %v1786
  %1796 = vmatpush1.msra.mxu0 %v1785
  %1797 = vmatprep.subr.mxu0 %v1784
  %1798 = vmatpush1.msra.mxu0 %v1783
  %1799 = vmatprep.subr.mxu0 %v1782
  %1800 = vmatpush1.msra.mxu0 %v1781
  %1801 = vmatprep.subr.mxu0 %v1780
  %1802 = vmatpush1.msra.mxu0 %v1779
  %1803 = vmatprep.subr.mxu0 %v1778
  %1804 = vmatpush1.msra.mxu0 %v1777
  %1805 = vmatprep.subr.mxu0 %v1776
  %1806 = vmatpush1.msra.mxu0 %v1775
  %1807 = vmatprep.subr.mxu0 %v1774
  %1808 = vmatpush1.msra.mxu0 %v1773
  %1809 = vmatprep.subr.mxu0 %v1772
  %1810 = vmatpush1.msra.mxu0 %v1771
  %1811 = vmatprep.subr.mxu0 %v1770
  %1812 = vmatpush1.msra.mxu0 %v1769
  %1813 = vmatprep.subr.mxu0 %v1768
  %1814 = vmatpush1.msra.mxu0 %v1767
  %1815 = vmatprep.subr.mxu0 %v1766
  %1816 = vmatpush1.msra.mxu0 %v1765
  %1817 = vmatprep.subr.mxu0 %v1764
  %1818 = vmatpush1.msra.mxu0 %v1763
  %1819 = vmatprep.subr.mxu0 %v1762
  %1820 = vmatpush1.msra.mxu0 %v1761
  %1821 = vmatprep.subr.mxu0 %v1760
  %1822 = vmatpush1.msra.mxu0 %v1759
  %1823 = vmatprep.subr.mxu0 0.0
  %1824 = vmatpush2.msra.mxu0 0.0
  %1825 = vmatprep.subr.mxu0 0.0
  %1826 = vmatpush2.msra.mxu0 0.0
  %1827 = vmatprep.subr.mxu0 0.0
  %1828 = vmatpush2.msra.mxu0 0.0
  %1829 = vmatprep.subr.mxu0 0.0
  %1830 = vmatpush2.msra.mxu0 0.0
  %1831 = vmatprep.subr.mxu0 0.0
  %1832 = vmatpush2.msra.mxu0 0.0
  %1833 = vmatprep.subr.mxu0 0.0
  %1834 = vmatpush2.msra.mxu0 0.0
  %1835 = vmatprep.subr.mxu0 0.0
  %1836 = vmatpush2.msra.mxu0 0.0
  %1837 = vmatprep.subr.mxu0 0.0
  %1838 = vmatpush2.msra.mxu0 0.0
  %1839 = vmatprep.subr.mxu0 0.0
  %1840 = vmatpush2.msra.mxu0 0.0
  %1841 = vmatprep.subr.mxu0 0.0
  %1842 = vmatpush2.msra.mxu0 0.0
  %1843 = vmatprep.subr.mxu0 0.0
  %1844 = vmatpush2.msra.mxu0 0.0
  %1845 = vmatprep.subr.mxu0 0.0
  %1846 = vmatpush2.msra.mxu0 0.0
  %1847 = vmatprep.subr.mxu0 0.0
  %1848 = vmatpush2.msra.mxu0 0.0
  %1849 = vmatprep.subr.mxu0 0.0
  %1850 = vmatpush2.msra.mxu0 0.0
  %1851 = vmatprep.subr.mxu0 0.0
  %1852 = vmatpush2.msra.mxu0 0.0
  %1853 = vmatprep.subr.mxu0 0.0
  %1854 = vmatpush2.msra.mxu0 0.0
  %1855 = vmatprep.mubr.f32.mxu0 0.0
  %1856 = vmatmul.mubr.f32.gmra.mxu0 %v1495
  %v1857 = vpop.f32.mrf.mxu0
  %v1858 = vadd.f32 0.0, %v1857
  %v1859 = vpop.f32.mrf.mxu0
  %v1860 = vadd.f32 0.0, %v1859
  %1861 = vdwg.mxu0
  %v1862 = vadd.f32 %v1738, %v1858
  %v1863 = vadd.f32 %v1740, %v1860
  %s1864 = scalar_lea.vmem %s5, 384
  %v1865 = vld [vmem:[%s1864] sm:$0xff]
  %v1866 = vld [vmem:[%s1864 + $0x8] sm:$0xff]
  %v1867 = vld [vmem:[%s1864 + $0x10] sm:$0xff]
  %v1868 = vld [vmem:[%s1864 + $0x18] sm:$0xff]
  %v1869 = vld [vmem:[%s1864 + $0x20] sm:$0xff]
  %v1870 = vld [vmem:[%s1864 + $0x28] sm:$0xff]
  %v1871 = vld [vmem:[%s1864 + $0x30] sm:$0xff]
  %v1872 = vld [vmem:[%s1864 + $0x38] sm:$0xff]
  %v1873 = vld [vmem:[%s1864 + $0x40] sm:$0xff]
  %v1874 = vld [vmem:[%s1864 + $0x48] sm:$0xff]
  %v1875 = vld [vmem:[%s1864 + $0x50] sm:$0xff]
  %v1876 = vld [vmem:[%s1864 + $0x58] sm:$0xff]
  %v1877 = vld [vmem:[%s1864 + $0x60] sm:$0xff]
  %v1878 = vld [vmem:[%s1864 + $0x68] sm:$0xff]
  %v1879 = vld [vmem:[%s1864 + $0x70] sm:$0xff]
  %v1880 = vld [vmem:[%s1864 + $0x78] sm:$0xff]
  %v1881 = vunpack.c.l.bf16 %v1865
  %v1882 = vunpack.c.h.bf16 %v1865
  %v1883 = vunpack.c.l.bf16 %v1866
  %v1884 = vunpack.c.h.bf16 %v1866
  %v1885 = vunpack.c.l.bf16 %v1867
  %v1886 = vunpack.c.h.bf16 %v1867
  %v1887 = vunpack.c.l.bf16 %v1868
  %v1888 = vunpack.c.h.bf16 %v1868
  %v1889 = vunpack.c.l.bf16 %v1869
  %v1890 = vunpack.c.h.bf16 %v1869
  %v1891 = vunpack.c.l.bf16 %v1870
  %v1892 = vunpack.c.h.bf16 %v1870
  %v1893 = vunpack.c.l.bf16 %v1871
  %v1894 = vunpack.c.h.bf16 %v1871
  %v1895 = vunpack.c.l.bf16 %v1872
  %v1896 = vunpack.c.h.bf16 %v1872
  %v1897 = vunpack.c.l.bf16 %v1873
  %v1898 = vunpack.c.h.bf16 %v1873
  %v1899 = vunpack.c.l.bf16 %v1874
  %v1900 = vunpack.c.h.bf16 %v1874
  %v1901 = vunpack.c.l.bf16 %v1875
  %v1902 = vunpack.c.h.bf16 %v1875
  %v1903 = vunpack.c.l.bf16 %v1876
  %v1904 = vunpack.c.h.bf16 %v1876
  %v1905 = vunpack.c.l.bf16 %v1877
  %v1906 = vunpack.c.h.bf16 %v1877
  %v1907 = vunpack.c.l.bf16 %v1878
  %v1908 = vunpack.c.h.bf16 %v1878
  %v1909 = vunpack.c.l.bf16 %v1879
  %v1910 = vunpack.c.h.bf16 %v1879
  %v1911 = vunpack.c.l.bf16 %v1880
  %v1912 = vunpack.c.h.bf16 %v1880
  %1913 = vmatprep.subr.mxu0 %v1912
  %1914 = vmatpush1.msra.mxu0 %v1911
  %1915 = vmatprep.subr.mxu0 %v1910
  %1916 = vmatpush1.msra.mxu0 %v1909
  %1917 = vmatprep.subr.mxu0 %v1908
  %1918 = vmatpush1.msra.mxu0 %v1907
  %1919 = vmatprep.subr.mxu0 %v1906
  %1920 = vmatpush1.msra.mxu0 %v1905
  %1921 = vmatprep.subr.mxu0 %v1904
  %1922 = vmatpush1.msra.mxu0 %v1903
  %1923 = vmatprep.subr.mxu0 %v1902
  %1924 = vmatpush1.msra.mxu0 %v1901
  %1925 = vmatprep.subr.mxu0 %v1900
  %1926 = vmatpush1.msra.mxu0 %v1899
  %1927 = vmatprep.subr.mxu0 %v1898
  %1928 = vmatpush1.msra.mxu0 %v1897
  %1929 = vmatprep.subr.mxu0 %v1896
  %1930 = vmatpush1.msra.mxu0 %v1895
  %1931 = vmatprep.subr.mxu0 %v1894
  %1932 = vmatpush1.msra.mxu0 %v1893
  %1933 = vmatprep.subr.mxu0 %v1892
  %1934 = vmatpush1.msra.mxu0 %v1891
  %1935 = vmatprep.subr.mxu0 %v1890
  %1936 = vmatpush1.msra.mxu0 %v1889
  %1937 = vmatprep.subr.mxu0 %v1888
  %1938 = vmatpush1.msra.mxu0 %v1887
  %1939 = vmatprep.subr.mxu0 %v1886
  %1940 = vmatpush1.msra.mxu0 %v1885
  %1941 = vmatprep.subr.mxu0 %v1884
  %1942 = vmatpush1.msra.mxu0 %v1883
  %1943 = vmatprep.subr.mxu0 %v1882
  %1944 = vmatpush1.msra.mxu0 %v1881
  %1945 = vmatprep.subr.mxu0 0.0
  %1946 = vmatpush2.msra.mxu0 0.0
  %1947 = vmatprep.subr.mxu0 0.0
  %1948 = vmatpush2.msra.mxu0 0.0
  %1949 = vmatprep.subr.mxu0 0.0
  %1950 = vmatpush2.msra.mxu0 0.0
  %1951 = vmatprep.subr.mxu0 0.0
  %1952 = vmatpush2.msra.mxu0 0.0
  %1953 = vmatprep.subr.mxu0 0.0
  %1954 = vmatpush2.msra.mxu0 0.0
  %1955 = vmatprep.subr.mxu0 0.0
  %1956 = vmatpush2.msra.mxu0 0.0
  %1957 = vmatprep.subr.mxu0 0.0
  %1958 = vmatpush2.msra.mxu0 0.0
  %1959 = vmatprep.subr.mxu0 0.0
  %1960 = vmatpush2.msra.mxu0 0.0
  %1961 = vmatprep.subr.mxu0 0.0
  %1962 = vmatpush2.msra.mxu0 0.0
  %1963 = vmatprep.subr.mxu0 0.0
  %1964 = vmatpush2.msra.mxu0 0.0
  %1965 = vmatprep.subr.mxu0 0.0
  %1966 = vmatpush2.msra.mxu0 0.0
  %1967 = vmatprep.subr.mxu0 0.0
  %1968 = vmatpush2.msra.mxu0 0.0
  %1969 = vmatprep.subr.mxu0 0.0
  %1970 = vmatpush2.msra.mxu0 0.0
  %1971 = vmatprep.subr.mxu0 0.0
  %1972 = vmatpush2.msra.mxu0 0.0
  %1973 = vmatprep.subr.mxu0 0.0
  %1974 = vmatpush2.msra.mxu0 0.0
  %1975 = vmatprep.subr.mxu0 0.0
  %1976 = vmatpush2.msra.mxu0 0.0
  %1977 = vmatprep.mubr.f32.mxu0 0.0
  %1978 = vmatmul.mubr.f32.gmra.mxu0 %v1500
  %v1979 = vpop.f32.mrf.mxu0
  %v1980 = vadd.f32 0.0, %v1979
  %v1981 = vpop.f32.mrf.mxu0
  %v1982 = vadd.f32 0.0, %v1981
  %1983 = vdwg.mxu0
  %v1984 = vadd.f32 %v1862, %v1980
  %v1985 = vadd.f32 %v1863, %v1982
  %v1986 = vld [vmem:[%s15] sm:$0xff]
  %1988 = vset.pattern.permute.xlu0 0
  %1989 = vperm.xlu0 %1988, %v1986
  %v1990 = vpop.permute.xlu0 %1989
  %v1992 = vadd.f32 %v1984, %v1990
  %v1993 = vadd.f32 %v1985, %v1990
  %1994 = vrot.lane.b32.xlu0 %v591, 10
  %v1995 = vpop.permute.xlu0 %1994
  %1996 = vrot.lane.b32.xlu0 %v592, 10
  %v1997 = vpop.permute.xlu0 %1996
  %v1998 = vsel %vm192, %v1995, %v1997
  %v1999 = vsel %vm192, %v1997, %v1995
  %v2000 = vmul.f32 %v1999, %v199
  %v2001 = vmul.f32 %v1998, %v203
  %2002 = vrot.lane.b32.xlu0 %v591, 9
  %v2003 = vpop.permute.xlu0 %2002
  %2004 = vrot.lane.b32.xlu0 %v592, 9
  %v2005 = vpop.permute.xlu0 %2004
  %v2006 = vsel %vm212, %v2003, %v2005
  %v2007 = vsel %vm212, %v2005, %v2003
  %v2008 = vmul.f32 %v2007, %v219
  %v2009 = vmul.f32 %v2006, %v223
  %2010 = vrot.lane.b32.xlu0 %v591, 8
  %v2011 = vpop.permute.xlu0 %2010
  %2012 = vrot.lane.b32.xlu0 %v592, 8
  %v2013 = vpop.permute.xlu0 %2012
  %v2014 = vsel %vm232, %v2011, %v2013
  %v2015 = vsel %vm232, %v2013, %v2011
  %v2016 = vmul.f32 %v2015, %v239
  %v2017 = vmul.f32 %v2014, %v243
  %2018 = vrot.lane.b32.xlu0 %v591, 1
  %v2019 = vpop.permute.xlu0 %2018
  %2020 = vrot.lane.b32.xlu0 %v592, 1
  %v2021 = vpop.permute.xlu0 %2020
  %v2022 = vsel %vm252, %v2019, %v2021
  %v2023 = vsel %vm252, %v2021, %v2019
  %v2024 = vmul.f32 %v2023, %v259
  %v2025 = vmul.f32 %v2022, %v263
  %v2026 = vmul.f32 %v591, %v272
  %v2027 = vmul.f32 %v592, %v276
  %2028 = vrot.lane.b32.xlu0 %v591, 127
  %v2029 = vpop.permute.xlu0 %2028
  %2030 = vrot.lane.b32.xlu0 %v592, 127
  %v2031 = vpop.permute.xlu0 %2030
  %v2032 = vsel %vm285, %v2029, %v2031
  %v2033 = vsel %vm285, %v2031, %v2029
  %v2034 = vmul.f32 %v2032, %v292
  %v2035 = vmul.f32 %v2033, %v296
  %2036 = vrot.lane.b32.xlu0 %v591, 120
  %v2037 = vpop.permute.xlu0 %2036
  %2038 = vrot.lane.b32.xlu0 %v592, 120
  %v2039 = vpop.permute.xlu0 %2038
  %v2040 = vsel %vm305, %v2037, %v2039
  %v2041 = vsel %vm305, %v2039, %v2037
  %v2042 = vmul.f32 %v2040, %v312
  %v2043 = vmul.f32 %v2041, %v316
  %2044 = vrot.lane.b32.xlu0 %v591, 119
  %v2045 = vpop.permute.xlu0 %2044
  %2046 = vrot.lane.b32.xlu0 %v592, 119
  %v2047 = vpop.permute.xlu0 %2046
  %v2048 = vsel %vm325, %v2045, %v2047
  %v2049 = vsel %vm325, %v2047, %v2045
  %v2050 = vmul.f32 %v2048, %v332
  %v2051 = vmul.f32 %v2049, %v336
  %2052 = vrot.lane.b32.xlu0 %v591, 118
  %v2053 = vpop.permute.xlu0 %2052
  %2054 = vrot.lane.b32.xlu0 %v592, 118
  %v2055 = vpop.permute.xlu0 %2054
  %v2056 = vsel %vm345, %v2053, %v2055
  %v2057 = vsel %vm345, %v2055, %v2053
  %v2058 = vmul.f32 %v2056, %v352
  %v2059 = vmul.f32 %v2057, %v356
  %2060 = vrot.lane.b32.xlu0 %v1992, 10
  %v2061 = vpop.permute.xlu0 %2060
  %2062 = vrot.lane.b32.xlu0 %v1993, 10
  %v2063 = vpop.permute.xlu0 %2062
  %v2064 = vsel %vm192, %v2061, %v2063
  %v2065 = vsel %vm192, %v2063, %v2061
  %v2066 = vmul.f32 %v2065, %v199
  %v2067 = vmul.f32 %v2064, %v203
  %2068 = vrot.lane.b32.xlu0 %v1992, 9
  %v2069 = vpop.permute.xlu0 %2068
  %2070 = vrot.lane.b32.xlu0 %v1993, 9
  %v2071 = vpop.permute.xlu0 %2070
  %v2072 = vsel %vm212, %v2069, %v2071
  %v2073 = vsel %vm212, %v2071, %v2069
  %v2074 = vmul.f32 %v2073, %v219
  %v2075 = vmul.f32 %v2072, %v223
  %2076 = vrot.lane.b32.xlu0 %v1992, 8
  %v2077 = vpop.permute.xlu0 %2076
  %2078 = vrot.lane.b32.xlu0 %v1993, 8
  %v2079 = vpop.permute.xlu0 %2078
  %v2080 = vsel %vm232, %v2077, %v2079
  %v2081 = vsel %vm232, %v2079, %v2077
  %v2082 = vmul.f32 %v2081, %v239
  %v2083 = vmul.f32 %v2080, %v243
  %2084 = vrot.lane.b32.xlu0 %v1992, 1
  %v2085 = vpop.permute.xlu0 %2084
  %2086 = vrot.lane.b32.xlu0 %v1993, 1
  %v2087 = vpop.permute.xlu0 %2086
  %v2088 = vsel %vm252, %v2085, %v2087
  %v2089 = vsel %vm252, %v2087, %v2085
  %v2090 = vmul.f32 %v2089, %v259
  %v2091 = vmul.f32 %v2088, %v263
  %v2092 = vmul.f32 %v1992, %v272
  %v2093 = vmul.f32 %v1993, %v276
  %2094 = vrot.lane.b32.xlu0 %v1992, 127
  %v2095 = vpop.permute.xlu0 %2094
  %2096 = vrot.lane.b32.xlu0 %v1993, 127
  %v2097 = vpop.permute.xlu0 %2096
  %v2098 = vsel %vm285, %v2095, %v2097
  %v2099 = vsel %vm285, %v2097, %v2095
  %v2100 = vmul.f32 %v2098, %v292
  %v2101 = vmul.f32 %v2099, %v296
  %2102 = vrot.lane.b32.xlu0 %v1992, 120
  %v2103 = vpop.permute.xlu0 %2102
  %2104 = vrot.lane.b32.xlu0 %v1993, 120
  %v2105 = vpop.permute.xlu0 %2104
  %v2106 = vsel %vm305, %v2103, %v2105
  %v2107 = vsel %vm305, %v2105, %v2103
  %v2108 = vmul.f32 %v2106, %v312
  %v2109 = vmul.f32 %v2107, %v316
  %2110 = vrot.lane.b32.xlu0 %v1992, 119
  %v2111 = vpop.permute.xlu0 %2110
  %2112 = vrot.lane.b32.xlu0 %v1993, 119
  %v2113 = vpop.permute.xlu0 %2112
  %v2114 = vsel %vm325, %v2111, %v2113
  %v2115 = vsel %vm325, %v2113, %v2111
  %v2116 = vmul.f32 %v2114, %v332
  %v2117 = vmul.f32 %v2115, %v336
  %2118 = vrot.lane.b32.xlu0 %v1992, 118
  %v2119 = vpop.permute.xlu0 %2118
  %2120 = vrot.lane.b32.xlu0 %v1993, 118
  %v2121 = vpop.permute.xlu0 %2120
  %v2122 = vsel %vm345, %v2119, %v2121
  %v2123 = vsel %vm345, %v2121, %v2119
  %v2124 = vmul.f32 %v2122, %v352
  %v2125 = vmul.f32 %v2123, %v356
  %v2126 = vld [vmem:[%s16] sm:$0xff]
  %v2127 = vld [vmem:[%s16 + $0x8] sm:$0xff]
  %v2128 = vld [vmem:[%s17] sm:$0xff]
  %2130 = vset.pattern.permute.xlu0 0
  %2131 = vperm.xlu0 %2130, %v2128
  %v2132 = vpop.permute.xlu0 %2131
  %v2135 = vsel %vm110, %v2127, 0
  %2137 = vmatprep.subr.mxu0 %v2109
  %2138 = vmatpush1.msra.mxu0 %v2108
  %2139 = vmatprep.subr.mxu0 %v2101
  %2140 = vmatpush1.msra.mxu0 %v2100
  %2141 = vmatprep.subr.mxu0 %v2093
  %2142 = vmatpush1.msra.mxu0 %v2092
  %2143 = vmatprep.subr.mxu0 %v2091
  %2144 = vmatpush1.msra.mxu0 %v2090
  %2145 = vmatprep.subr.mxu0 %v2083
  %2146 = vmatpush1.msra.mxu0 %v2082
  %2147 = vmatprep.subr.mxu0 %v2075
  %2148 = vmatpush1.msra.mxu0 %v2074
  %2149 = vmatprep.subr.mxu0 %v2067
  %2150 = vmatpush1.msra.mxu0 %v2066
  %2151 = vmatprep.subr.mxu0 %v2059
  %2152 = vmatpush1.msra.mxu0 %v2058
  %2153 = vmatprep.subr.mxu0 %v2051
  %2154 = vmatpush1.msra.mxu0 %v2050
  %2155 = vmatprep.subr.mxu0 %v2043
  %2156 = vmatpush1.msra.mxu0 %v2042
  %2157 = vmatprep.subr.mxu0 %v2035
  %2158 = vmatpush1.msra.mxu0 %v2034
  %2159 = vmatprep.subr.mxu0 %v2027
  %2160 = vmatpush1.msra.mxu0 %v2026
  %2161 = vmatprep.subr.mxu0 %v2025
  %2162 = vmatpush1.msra.mxu0 %v2024
  %2163 = vmatprep.subr.mxu0 %v2017
  %2164 = vmatpush1.msra.mxu0 %v2016
  %2165 = vmatprep.subr.mxu0 %v2009
  %2166 = vmatpush1.msra.mxu0 %v2008
  %2167 = vmatprep.subr.mxu0 %v2001
  %2168 = vmatpush1.msra.mxu0 %v2000
  %2169 = vmatprep.subr.mxu0 0.0
  %2170 = vmatpush2.msra.mxu0 0.0
  %2171 = vmatprep.subr.mxu0 0.0
  %2172 = vmatpush2.msra.mxu0 0.0
  %2173 = vmatprep.subr.mxu0 0.0
  %2174 = vmatpush2.msra.mxu0 0.0
  %2175 = vmatprep.subr.mxu0 0.0
  %2176 = vmatpush2.msra.mxu0 0.0
  %2177 = vmatprep.subr.mxu0 0.0
  %2178 = vmatpush2.msra.mxu0 0.0
  %2179 = vmatprep.subr.mxu0 0.0
  %2180 = vmatpush2.msra.mxu0 0.0
  %2181 = vmatprep.subr.mxu0 0.0
  %2182 = vmatpush2.msra.mxu0 0.0
  %2183 = vmatprep.subr.mxu0 0.0
  %2184 = vmatpush2.msra.mxu0 0.0
  %2185 = vmatprep.subr.mxu0 0.0
  %2186 = vmatpush2.msra.mxu0 0.0
  %2187 = vmatprep.subr.mxu0 0.0
  %2188 = vmatpush2.msra.mxu0 0.0
  %2189 = vmatprep.subr.mxu0 0.0
  %2190 = vmatpush2.msra.mxu0 0.0
  %2191 = vmatprep.subr.mxu0 0.0
  %2192 = vmatpush2.msra.mxu0 0.0
  %2193 = vmatprep.subr.mxu0 0.0
  %2194 = vmatpush2.msra.mxu0 0.0
  %2195 = vmatprep.subr.mxu0 0.0
  %2196 = vmatpush2.msra.mxu0 0.0
  %2197 = vmatprep.subr.mxu0 %v2125
  %2198 = vmatpush2.msra.mxu0 %v2124
  %2199 = vmatprep.subr.mxu0 %v2117
  %2200 = vmatpush2.msra.mxu0 %v2116
  %2201 = vmatprep.mubr.f32.mxu0 %v2135
  %2202 = vmatmul.mubr.f32.gmra.mxu0 %v2126
  %v2203 = vpop.f32.mrf.mxu0
  %v2204 = vadd.f32 %v2132, %v2203
  %v2205 = vpop.f32.mrf.mxu0
  %v2206 = vadd.f32 %v2132, %v2205
  %2207 = vdwg.mxu0
  %v2208 = vmax.f32 %v2204, 0.0
  %v2209 = vmax.f32 %v2206, 0.0
  %v2210 = vld [vmem:[%s18] sm:$0xff]
  %2211 = vrot.lane.b32.xlu0 %v2208, 10
  %v2212 = vpop.permute.xlu0 %2211
  %2213 = vrot.lane.b32.xlu0 %v2209, 10
  %v2214 = vpop.permute.xlu0 %2213
  %v2215 = vsel %vm192, %v2212, %v2214
  %v2216 = vsel %vm192, %v2214, %v2212
  %v2217 = vmul.f32 %v2216, %v199
  %v2218 = vmul.f32 %v2215, %v203
  %2219 = vrot.lane.b32.xlu0 %v2208, 9
  %v2220 = vpop.permute.xlu0 %2219
  %2221 = vrot.lane.b32.xlu0 %v2209, 9
  %v2222 = vpop.permute.xlu0 %2221
  %v2223 = vsel %vm212, %v2220, %v2222
  %v2224 = vsel %vm212, %v2222, %v2220
  %v2225 = vmul.f32 %v2224, %v219
  %v2226 = vmul.f32 %v2223, %v223
  %2227 = vrot.lane.b32.xlu0 %v2208, 8
  %v2228 = vpop.permute.xlu0 %2227
  %2229 = vrot.lane.b32.xlu0 %v2209, 8
  %v2230 = vpop.permute.xlu0 %2229
  %v2231 = vsel %vm232, %v2228, %v2230
  %v2232 = vsel %vm232, %v2230, %v2228
  %v2233 = vmul.f32 %v2232, %v239
  %v2234 = vmul.f32 %v2231, %v243
  %2235 = vrot.lane.b32.xlu0 %v2208, 1
  %v2236 = vpop.permute.xlu0 %2235
  %2237 = vrot.lane.b32.xlu0 %v2209, 1
  %v2238 = vpop.permute.xlu0 %2237
  %v2239 = vsel %vm252, %v2236, %v2238
  %v2240 = vsel %vm252, %v2238, %v2236
  %v2241 = vmul.f32 %v2240, %v259
  %v2242 = vmul.f32 %v2239, %v263
  %v2243 = vmul.f32 %v2208, %v272
  %v2244 = vmul.f32 %v2209, %v276
  %2245 = vrot.lane.b32.xlu0 %v2208, 127
  %v2246 = vpop.permute.xlu0 %2245
  %2247 = vrot.lane.b32.xlu0 %v2209, 127
  %v2248 = vpop.permute.xlu0 %2247
  %v2249 = vsel %vm285, %v2246, %v2248
  %v2250 = vsel %vm285, %v2248, %v2246
  %v2251 = vmul.f32 %v2249, %v292
  %v2252 = vmul.f32 %v2250, %v296
  %2253 = vrot.lane.b32.xlu0 %v2208, 120
  %v2254 = vpop.permute.xlu0 %2253
  %2255 = vrot.lane.b32.xlu0 %v2209, 120
  %v2256 = vpop.permute.xlu0 %2255
  %v2257 = vsel %vm305, %v2254, %v2256
  %v2258 = vsel %vm305, %v2256, %v2254
  %v2259 = vmul.f32 %v2257, %v312
  %v2260 = vmul.f32 %v2258, %v316
  %2261 = vrot.lane.b32.xlu0 %v2208, 119
  %v2262 = vpop.permute.xlu0 %2261
  %2263 = vrot.lane.b32.xlu0 %v2209, 119
  %v2264 = vpop.permute.xlu0 %2263
  %v2265 = vsel %vm325, %v2262, %v2264
  %v2266 = vsel %vm325, %v2264, %v2262
  %v2267 = vmul.f32 %v2265, %v332
  %v2268 = vmul.f32 %v2266, %v336
  %2269 = vrot.lane.b32.xlu0 %v2208, 118
  %v2270 = vpop.permute.xlu0 %2269
  %2271 = vrot.lane.b32.xlu0 %v2209, 118
  %v2272 = vpop.permute.xlu0 %2271
  %v2273 = vsel %vm345, %v2270, %v2272
  %v2274 = vsel %vm345, %v2272, %v2270
  %v2275 = vmul.f32 %v2273, %v352
  %v2276 = vmul.f32 %v2274, %v356
  %v2277 = vld [vmem:[%s19] sm:$0xff]
  %2279 = vset.pattern.permute.xlu0 0
  %2280 = vperm.xlu0 %2279, %v2277
  %v2281 = vpop.permute.xlu0 %2280
  %v2284 = vsel %vm367, %v2210, 0
  %2286 = vmatprep.subr.mxu0 0.0
  %2287 = vmatpush1.msra.mxu0 0.0
  %2288 = vmatprep.subr.mxu0 0.0
  %2289 = vmatpush1.msra.mxu0 0.0
  %2290 = vmatprep.subr.mxu0 0.0
  %2291 = vmatpush1.msra.mxu0 0.0
  %2292 = vmatprep.subr.mxu0 0.0
  %2293 = vmatpush1.msra.mxu0 0.0
  %2294 = vmatprep.subr.mxu0 0.0
  %2295 = vmatpush1.msra.mxu0 0.0
  %2296 = vmatprep.subr.mxu0 0.0
  %2297 = vmatpush1.msra.mxu0 0.0
  %2298 = vmatprep.subr.mxu0 0.0
  %2299 = vmatpush1.msra.mxu0 0.0
  %2300 = vmatprep.subr.mxu0 %v2276
  %2301 = vmatpush1.msra.mxu0 %v2275
  %2302 = vmatprep.subr.mxu0 %v2268
  %2303 = vmatpush1.msra.mxu0 %v2267
  %2304 = vmatprep.subr.mxu0 %v2260
  %2305 = vmatpush1.msra.mxu0 %v2259
  %2306 = vmatprep.subr.mxu0 %v2252
  %2307 = vmatpush1.msra.mxu0 %v2251
  %2308 = vmatprep.subr.mxu0 %v2244
  %2309 = vmatpush1.msra.mxu0 %v2243
  %2310 = vmatprep.subr.mxu0 %v2242
  %2311 = vmatpush1.msra.mxu0 %v2241
  %2312 = vmatprep.subr.mxu0 %v2234
  %2313 = vmatpush1.msra.mxu0 %v2233
  %2314 = vmatprep.subr.mxu0 %v2226
  %2315 = vmatpush1.msra.mxu0 %v2225
  %2316 = vmatprep.subr.mxu0 %v2218
  %2317 = vmatpush1.msra.mxu0 %v2217
  %2318 = vmatprep.subr.mxu0 0.0
  %2319 = vmatpush2.msra.mxu0 0.0
  %2320 = vmatprep.subr.mxu0 0.0
  %2321 = vmatpush2.msra.mxu0 0.0
  %2322 = vmatprep.subr.mxu0 0.0
  %2323 = vmatpush2.msra.mxu0 0.0
  %2324 = vmatprep.subr.mxu0 0.0
  %2325 = vmatpush2.msra.mxu0 0.0
  %2326 = vmatprep.subr.mxu0 0.0
  %2327 = vmatpush2.msra.mxu0 0.0
  %2328 = vmatprep.subr.mxu0 0.0
  %2329 = vmatpush2.msra.mxu0 0.0
  %2330 = vmatprep.subr.mxu0 0.0
  %2331 = vmatpush2.msra.mxu0 0.0
  %2332 = vmatprep.subr.mxu0 0.0
  %2333 = vmatpush2.msra.mxu0 0.0
  %2334 = vmatprep.subr.mxu0 0.0
  %2335 = vmatpush2.msra.mxu0 0.0
  %2336 = vmatprep.subr.mxu0 0.0
  %2337 = vmatpush2.msra.mxu0 0.0
  %2338 = vmatprep.subr.mxu0 0.0
  %2339 = vmatpush2.msra.mxu0 0.0
  %2340 = vmatprep.subr.mxu0 0.0
  %2341 = vmatpush2.msra.mxu0 0.0
  %2342 = vmatprep.subr.mxu0 0.0
  %2343 = vmatpush2.msra.mxu0 0.0
  %2344 = vmatprep.subr.mxu0 0.0
  %2345 = vmatpush2.msra.mxu0 0.0
  %2346 = vmatprep.subr.mxu0 0.0
  %2347 = vmatpush2.msra.mxu0 0.0
  %2348 = vmatprep.subr.mxu0 0.0
  %2349 = vmatpush2.msra.mxu0 0.0
  %2350 = vmatprep.mubr.f32.mxu0 0.0
  %2351 = vmatmul.mubr.f32.gmra.mxu0 %v2284
  %v2352 = vpop.f32.mrf.mxu0
  %v2353 = vadd.f32 %v2281, %v2352
  %v2354 = vpop.f32.mrf.mxu0
  %v2355 = vadd.f32 %v2281, %v2354
  %2356 = vdwg.mxu0
  %v2357 = vmax.f32 %v2353, 0.0
  %v2358 = vmax.f32 %v2355, 0.0
  %v2359 = vld [vmem:[%s20] sm:$0xff]
  %v2360 = vld [vmem:[%s21] sm:$0xff]
  %2362 = vset.pattern.permute.xlu0 0
  %2363 = vperm.xlu0 %2362, %v2360
  %v2364 = vpop.permute.xlu0 %2363
  %v2367 = vsel %vm1405, %v2359, 0
  %2369 = vmatprep.subr.mxu0 0.0
  %2370 = vmatpush1.msra.mxu0 0.0
  %2371 = vmatprep.subr.mxu0 0.0
  %2372 = vmatpush1.msra.mxu0 0.0
  %2373 = vmatprep.subr.mxu0 0.0
  %2374 = vmatpush1.msra.mxu0 0.0
  %2375 = vmatprep.subr.mxu0 0.0
  %2376 = vmatpush1.msra.mxu0 0.0
  %2377 = vmatprep.subr.mxu0 0.0
  %2378 = vmatpush1.msra.mxu0 0.0
  %2379 = vmatprep.subr.mxu0 0.0
  %2380 = vmatpush1.msra.mxu0 0.0
  %2381 = vmatprep.subr.mxu0 0.0
  %2382 = vmatpush1.msra.mxu0 0.0
  %2383 = vmatprep.subr.mxu0 0.0
  %2384 = vmatpush1.msra.mxu0 0.0
  %2385 = vmatprep.subr.mxu0 0.0
  %2386 = vmatpush1.msra.mxu0 0.0
  %2387 = vmatprep.subr.mxu0 0.0
  %2388 = vmatpush1.msra.mxu0 0.0
  %2389 = vmatprep.subr.mxu0 0.0
  %2390 = vmatpush1.msra.mxu0 0.0
  %2391 = vmatprep.subr.mxu0 0.0
  %2392 = vmatpush1.msra.mxu0 0.0
  %2393 = vmatprep.subr.mxu0 0.0
  %2394 = vmatpush1.msra.mxu0 0.0
  %2395 = vmatprep.subr.mxu0 0.0
  %2396 = vmatpush1.msra.mxu0 0.0
  %2397 = vmatprep.subr.mxu0 0.0
  %2398 = vmatpush1.msra.mxu0 0.0
  %2399 = vmatprep.subr.mxu0 %v2358
  %2400 = vmatpush1.msra.mxu0 %v2357
  %2401 = vmatprep.subr.mxu0 0.0
  %2402 = vmatpush2.msra.mxu0 0.0
  %2403 = vmatprep.subr.mxu0 0.0
  %2404 = vmatpush2.msra.mxu0 0.0
  %2405 = vmatprep.subr.mxu0 0.0
  %2406 = vmatpush2.msra.mxu0 0.0
  %2407 = vmatprep.subr.mxu0 0.0
  %2408 = vmatpush2.msra.mxu0 0.0
  %2409 = vmatprep.subr.mxu0 0.0
  %2410 = vmatpush2.msra.mxu0 0.0
  %2411 = vmatprep.subr.mxu0 0.0
  %2412 = vmatpush2.msra.mxu0 0.0
  %2413 = vmatprep.subr.mxu0 0.0
  %2414 = vmatpush2.msra.mxu0 0.0
  %2415 = vmatprep.subr.mxu0 0.0
  %2416 = vmatpush2.msra.mxu0 0.0
  %2417 = vmatprep.subr.mxu0 0.0
  %2418 = vmatpush2.msra.mxu0 0.0
  %2419 = vmatprep.subr.mxu0 0.0
  %2420 = vmatpush2.msra.mxu0 0.0
  %2421 = vmatprep.subr.mxu0 0.0
  %2422 = vmatpush2.msra.mxu0 0.0
  %2423 = vmatprep.subr.mxu0 0.0
  %2424 = vmatpush2.msra.mxu0 0.0
  %2425 = vmatprep.subr.mxu0 0.0
  %2426 = vmatpush2.msra.mxu0 0.0
  %2427 = vmatprep.subr.mxu0 0.0
  %2428 = vmatpush2.msra.mxu0 0.0
  %2429 = vmatprep.subr.mxu0 0.0
  %2430 = vmatpush2.msra.mxu0 0.0
  %2431 = vmatprep.subr.mxu0 0.0
  %2432 = vmatpush2.msra.mxu0 0.0
  %2433 = vmatprep.mubr.f32.mxu0 0.0
  %2434 = vmatmul.mubr.f32.gmra.mxu0 %v2367
  %v2435 = vpop.f32.mrf.mxu0
  %v2436 = vadd.f32 %v2364, %v2435
  %v2437 = vpop.f32.mrf.mxu0
  %v2438 = vadd.f32 %v2364, %v2437
  %2439 = vdwg.mxu0
  %2440 = vst [vmem:[%s22] sm:$0xff] %v2436
  %2441 = vst [vmem:[%s22 + $0x8] sm:$0xff] %v2438
  // Predicated region
  $region90: #{unet_forward.1} parent=0 // pred_check
    _
  $region91: #{unet_forward.1} parent=0 // pred_check_branch
    %2443 = sbr.rel (0) target = $region93
  $region92: #{unet_forward.1} parent=0 // pred_region
    _
  $region93: #{unet_forward.1} parent=0 // pred_fallthru
    _
  // Predicated region
  $region94: #{unet_forward.1} parent=0 // pred_check
    _
  $region95: #{unet_forward.1} parent=0 // pred_check_branch
    %2445 = sbr.rel (0) target = $region97
  $region96: #{unet_forward.1} parent=0 // pred_region
    _
  $region97: #{unet_forward.1} parent=0 // pred_fallthru
    _

</llo_original>
